<compile_context>
chip_gen: v7x
topology: tpu7x:2x2x1
jax: 0.10.0
libtpu: 0.0.40
codegen_flags: <defaults>
</compile_context>

<pallas_src>
import jax
import jax.numpy as jnp
import numpy as np
from jax.experimental import pallas as pl
from jax.experimental.pallas import tpu as pltpu

K = 7      # conv kernel size
PAD = 3    # conv padding


def _make_kernel(Bn, C, H, W, CC):
    """Build the kernel closure for static (Bn, C, H, W, CC)."""
    HW = H * W
    WP = W + 2 * PAD

    def kernel(w_ref, b_ref, x_ref, o_ref, pad_ref, shift_ref, flat_ref):
        # w_ref    : (2*K*K,) f32 SMEM  — flattened conv weight [cin, kh, kw]
        # b_ref    : (1,)     f32 SMEM  — conv bias
        # x_ref    : (Bn, C, H*W) VMEM block (lane-dense)
        # o_ref    : (Bn, C, H*W) VMEM block (lane-dense)
        # pad_ref  : (2, H+6, W+6) f32 VMEM scratch (zero-padded avg/max planes)
        # shift_ref: (2, K, H+6, W) f32 VMEM scratch (kw-pre-shifted planes)
        # flat_ref : (4, H*W) f32 VMEM scratch (lane-dense avg/max/att rows)

        # Zero the halo strips once per grid step; the interior is fully
        # overwritten for every batch element, so the halos stay zero.
        zrow = jnp.zeros((2, PAD, WP), jnp.float32)
        pad_ref[:, :PAD, :] = zrow
        pad_ref[:, PAD + H:, :] = zrow
        zcol = jnp.zeros((2, H, PAD), jnp.float32)
        pad_ref[:, PAD:PAD + H, :PAD] = zcol
        pad_ref[:, PAD:PAD + H, PAD + W:] = zcol

        for b in range(Bn):
            # ---- lane-dense chunked channel reduction (mean & max over C) --
            slab = x_ref[b, 0:min(CC, C), :].astype(jnp.float32)
            s = jnp.sum(slab, axis=0, keepdims=True)          # (1, HW)
            m = jnp.max(slab, axis=0, keepdims=True)          # (1, HW)
            for c0 in range(CC, C, CC):
                ce = min(c0 + CC, C)
                slab = x_ref[b, c0:ce, :].astype(jnp.float32)
                s = s + jnp.sum(slab, axis=0, keepdims=True)
                m = jnp.maximum(m, jnp.max(slab, axis=0, keepdims=True))
            flat_ref[0:1, :] = s * (1.0 / C)                  # avg (lane-dense)
            flat_ref[1:2, :] = m                              # max (lane-dense)

            # ---- relayout flat rows -> padded 2-D planes (row by row) ------
            for r in range(H):
                pad_ref[0, PAD + r, PAD:PAD + W] = flat_ref[0, r * W:(r + 1) * W]
                pad_ref[1, PAD + r, PAD:PAD + W] = flat_ref[1, r * W:(r + 1) * W]

            # ---- hoist the kw (lane) shift out of the 49-tap loop ----------
            for c in range(2):
                for kw in range(K):
                    shift_ref[c, kw] = pad_ref[c, :, kw:kw + W]

            # ---- 7x7 conv on the VPU, 4 independent accumulator chains -----
            accs = [jnp.zeros((H, W), jnp.float32) for _ in range(4)]
            for c in range(2):
                base = c * K * K
                for kh in range(K):
                    a = 2 * c + (kh & 1)
                    for kw in range(K):
                        wgt = w_ref[base + kh * K + kw]        # scalar (SMEM)
                        accs[a] = accs[a] + wgt * shift_ref[c, kw, kh:kh + H, :]
            conv = (accs[0] + accs[1]) + (accs[2] + accs[3]) + b_ref[0]
            att = jax.nn.sigmoid(conv)                         # (H, W)

            # ---- relayout att -> lane-dense (1, HW) via flat scratch -------
            for r in range(H):
                flat_ref[2, r * W:(r + 1) * W] = att[r]
            att_flat = flat_ref[2:3, :]                        # (1, HW)

            # ---- lane-dense scale + full-width stores ----------------------
            for c0 in range(0, C, CC):
                ce = min(c0 + CC, C)
                o_ref[b, c0:ce, :] = (
                    x_ref[b, c0:ce, :].astype(jnp.float32) * att_flat
                ).astype(o_ref.dtype)

    return kernel


def spatial_attention(x, conv_w, conv_b):
    """x: (N, C, H, W); conv_w: (1, 2, 7, 7); conv_b: (1,)."""
    N, C, H, W = x.shape
    HW = H * W
    HP, WP = H + 2 * PAD, W + 2 * PAD

    w_flat = conv_w.reshape(-1).astype(jnp.float32)            # (2*7*7,)
    bias = conv_b.astype(jnp.float32)                          # (1,)
    x2 = x.reshape(N, C, HW)                                   # lane-dense view

    # Channel chunk size for streaming (bounds vreg pressure for large C).
    CC = C if C <= 8 else 8

    # ---- per-chip VMEM budget ------------------------------------------------
    try:
        info = pltpu.get_tpu_info()
        phys = int(getattr(info, "vmem_capacity_bytes", 64 << 20))
    except Exception:
        phys = 64 << 20                                        # v7x-safe fallback
    cap = int(phys * 0.7)

    itemsize = jnp.dtype(x.dtype).itemsize
    per_b = C * HW * itemsize                                  # one batch element
    scratch_bytes = (2 * HP * WP + 2 * K * HP * W + 4 * HW) * 4
    headroom = 2 << 20

    # Largest Bn that fits 2 input + 2 output buffers + scratch in the cap,
    # capped at 8 (trace size) and so that the grid keeps >= 2 parallel steps
    # (v7x has 2 TensorCores per chip).
    max_bn = max(1, (cap - scratch_bytes - headroom) // (4 * per_b))
    max_bn = int(min(max_bn, 8))
    if N >= 2:
        max_bn = min(max_bn, max(1, N // 2))
    bn = 1
    for d in range(1, max_bn + 1):
        if N % d == 0:
            bn = d

    need = 4 * bn * per_b + scratch_bytes + headroom
    vmem_limit = int(max(min(max(need, 32 << 20), cap), need))  # never below need

    kernel = _make_kernel(bn, C, H, W, CC)

    out2 = pl.pallas_call(
        kernel,
        out_shape=jax.ShapeDtypeStruct((N, C, HW), x.dtype),
        grid_spec=pltpu.PrefetchScalarGridSpec(
            num_scalar_prefetch=0,
            grid=(N // bn,),
            in_specs=[
                pl.BlockSpec(memory_space=pltpu.MemorySpace.SMEM),    # weights
                pl.BlockSpec(memory_space=pltpu.MemorySpace.SMEM),    # bias
                pl.BlockSpec((bn, C, HW), lambda n: (n, 0, 0)),       # x
            ],
            out_specs=pl.BlockSpec((bn, C, HW), lambda n: (n, 0, 0)),
            scratch_shapes=[
                pltpu.VMEM((2, HP, WP), jnp.float32),   # padded avg/max planes
                pltpu.VMEM((2, K, HP, W), jnp.float32),  # kw-pre-shifted planes
                pltpu.VMEM((4, HW), jnp.float32),        # lane-dense avg/max/att
            ],
        ),
        compiler_params=pltpu.CompilerParams(
            dimension_semantics=("parallel",),
            vmem_limit_bytes=vmem_limit,
        ),
    )(w_flat, bias, x2)

    return out2.reshape(N, C, H, W)


def spatial_attention_reference(x, conv_w, conv_b):
    avg = jnp.mean(x, axis=1, keepdims=True)
    mx = jnp.max(x, axis=1, keepdims=True)
    xa = jnp.concatenate([avg, mx], axis=1)
    conv = jax.lax.conv_general_dilated(
        xa.astype(jnp.float32), conv_w.astype(jnp.float32),
        window_strides=(1, 1), padding=[(PAD, PAD), (PAD, PAD)],
        dimension_numbers=("NCHW", "OIHW", "NCHW"),
    ) + conv_b.reshape(1, -1, 1, 1)
    att = jax.nn.sigmoid(conv)
    return x * att


if __name__ == "__main__":
    key = jax.random.PRNGKey(0)
    kx, kw, kb = jax.random.split(key, 3)

    # Small shapes consistent with the module: N=2, C=4, H=W=16.
    N, C, H, W = 2, 4, 16, 16
    x = jax.random.normal(kx, (N, C, H, W), dtype=jnp.float32)

    # Deterministic init mimicking nn.Conv2d default (uniform +/- 1/sqrt(fan_in)).
    fan_in = 2 * K * K
    bound = 1.0 / np.sqrt(fan_in)
    conv_w = jax.random.uniform(kw, (1, 2, K, K), jnp.float32, -bound, bound)
    conv_b = jax.random.uniform(kb, (1,), jnp.float32, -bound, bound)

    out = spatial_attention(x, conv_w, conv_b)
    out = jax.block_until_ready(out)

    ref = spatial_attention_reference(x, conv_w, conv_b)
    np.testing.assert_allclose(np.asarray(out), np.asarray(ref), atol=1e-5, rtol=1e-5)

    print("KERNEL_OK")
</pallas_src>

<mosaic_0001>
module attributes {stable_mosaic.version = 11 : i64} {
  func.func @kernel(%arg0: i32, %arg1: memref<98xf32, #tpu.memory_space<smem>>, %arg2: memref<1xf32, #tpu.memory_space<smem>>, %arg3: memref<1x4x256xf32, #tpu.memory_space<vmem>>, %arg4: memref<1x4x256xf32, #tpu.memory_space<vmem>>, %arg5: memref<2x22x22xf32, #tpu.memory_space<vmem>>, %arg6: memref<2x7x22x16xf32, #tpu.memory_space<vmem>>, %arg7: memref<4x256xf32, #tpu.memory_space<vmem>>) attributes {dimension_semantics = [#tpu.dimension_semantics<parallel>], iteration_bounds = array<i64: 2>, scalar_prefetch = 0 : i64, scratch_operands = 3 : i64, tpu.core_type = #tpu.core_type<tc>, window_params = [{transform_indices = @transform_0, window_bounds = array<i64: 98>}, {transform_indices = @transform_1, window_bounds = array<i64: 1>}, {transform_indices = @transform_2, window_bounds = array<i64: 1, 4, 256>}, {transform_indices = @transform_3, window_bounds = array<i64: 1, 4, 256>}]} {
    %cst = arith.constant 0.000000e+00 : f32
    %0 = vector.broadcast %cst : f32 to vector<2x3x22xf32>
    %c0 = arith.constant 0 : index
    %c0_0 = arith.constant 0 : index
    %c0_1 = arith.constant 0 : index
    %1 = vector.load %arg5[%c0, %c0_0, %c0_1] : memref<2x22x22xf32, #tpu.memory_space<vmem>>, vector<2x3x22xf32>
    tpu.vector_store %arg5[%c0, %c0_0, %c0_1], %0 {strides = array<i32>} : memref<2x22x22xf32, #tpu.memory_space<vmem>>, vector<2x3x22xf32>,
    %c0_2 = arith.constant 0 : index
    %c19 = arith.constant 19 : index
    %c0_3 = arith.constant 0 : index
    %2 = vector.load %arg5[%c0_2, %c19, %c0_3] : memref<2x22x22xf32, #tpu.memory_space<vmem>>, vector<2x3x22xf32>
    tpu.vector_store %arg5[%c0_2, %c19, %c0_3], %0 {strides = array<i32>} : memref<2x22x22xf32, #tpu.memory_space<vmem>>, vector<2x3x22xf32>,
    %cst_4 = arith.constant 0.000000e+00 : f32
    %3 = vector.broadcast %cst_4 : f32 to vector<2x16x3xf32>
    %c0_5 = arith.constant 0 : index
    %c3 = arith.constant 3 : index
    %c0_6 = arith.constant 0 : index
    %4 = vector.load %arg5[%c0_5, %c3, %c0_6] : memref<2x22x22xf32, #tpu.memory_space<vmem>>, vector<2x16x3xf32>
    tpu.vector_store %arg5[%c0_5, %c3, %c0_6], %3 {strides = array<i32>} : memref<2x22x22xf32, #tpu.memory_space<vmem>>, vector<2x16x3xf32>,
    %c0_7 = arith.constant 0 : index
    %c3_8 = arith.constant 3 : index
    %c19_9 = arith.constant 19 : index
    %5 = vector.load %arg5[%c0_7, %c3_8, %c19_9] : memref<2x22x22xf32, #tpu.memory_space<vmem>>, vector<2x16x3xf32>
    tpu.vector_store %arg5[%c0_7, %c3_8, %c19_9], %3 {strides = array<i32>} : memref<2x22x22xf32, #tpu.memory_space<vmem>>, vector<2x16x3xf32>,
    %c0_10 = arith.constant 0 : index
    %c0_11 = arith.constant 0 : index
    %c0_12 = arith.constant 0 : index
    %6 = vector.load %arg3[%c0_10, %c0_11, %c0_12] : memref<1x4x256xf32, #tpu.memory_space<vmem>>, vector<1x4x256xf32>
    %7 = vector.shape_cast %6 : vector<1x4x256xf32> to vector<4x256xf32>
    %cst_13 = arith.constant dense<0.000000e+00> : vector<256xf32>
    %8 = vector.multi_reduction <add>, %7, %cst_13 [0] : vector<4x256xf32> to vector<256xf32>
    %9 = vector.shape_cast %8 : vector<256xf32> to vector<1x256xf32>
    %cst_14 = arith.constant dense<0xFF800000> : vector<256xf32>
    %10 = vector.multi_reduction <maximumf>, %7, %cst_14 [0] : vector<4x256xf32> to vector<256xf32>
    %11 = vector.shape_cast %10 : vector<256xf32> to vector<1x256xf32>
    %cst_15 = arith.constant 2.500000e-01 : f32
    %12 = vector.broadcast %cst_15 : f32 to vector<1x256xf32>
    %13 = arith.mulf %9, %12 : vector<1x256xf32>
    %c0_16 = arith.constant 0 : index
    %c0_17 = arith.constant 0 : index
    %14 = vector.load %arg7[%c0_16, %c0_17] : memref<4x256xf32, #tpu.memory_space<vmem>>, vector<1x256xf32>
    tpu.vector_store %arg7[%c0_16, %c0_17], %13 {strides = array<i32>} : memref<4x256xf32, #tpu.memory_space<vmem>>, vector<1x256xf32>,
    %c1 = arith.constant 1 : index
    %c0_18 = arith.constant 0 : index
    %15 = vector.load %arg7[%c1, %c0_18] : memref<4x256xf32, #tpu.memory_space<vmem>>, vector<1x256xf32>
    tpu.vector_store %arg7[%c1, %c0_18], %11 {strides = array<i32>} : memref<4x256xf32, #tpu.memory_space<vmem>>, vector<1x256xf32>,
    %c0_19 = arith.constant 0 : index
    %c0_20 = arith.constant 0 : index
    %16 = vector.load %arg7[%c0_19, %c0_20] : memref<4x256xf32, #tpu.memory_space<vmem>>, vector<1x16xf32>
    %17 = vector.shape_cast %16 : vector<1x16xf32> to vector<16xf32>
    %c0_21 = arith.constant 0 : index
    %c3_22 = arith.constant 3 : index
    %c3_23 = arith.constant 3 : index
    %18 = vector.load %arg5[%c0_21, %c3_22, %c3_23] : memref<2x22x22xf32, #tpu.memory_space<vmem>>, vector<1x1x16xf32>
    %19 = vector.shape_cast %18 : vector<1x1x16xf32> to vector<16xf32>
    %20 = vector.shape_cast %17 : vector<16xf32> to vector<1x1x16xf32>
    tpu.vector_store %arg5[%c0_21, %c3_22, %c3_23], %20 {strides = array<i32>} : memref<2x22x22xf32, #tpu.memory_space<vmem>>, vector<1x1x16xf32>,
    %c1_24 = arith.constant 1 : index
    %c0_25 = arith.constant 0 : index
    %21 = vector.load %arg7[%c1_24, %c0_25] : memref<4x256xf32, #tpu.memory_space<vmem>>, vector<1x16xf32>
    %22 = vector.shape_cast %21 : vector<1x16xf32> to vector<16xf32>
    %c1_26 = arith.constant 1 : index
    %c3_27 = arith.constant 3 : index
    %c3_28 = arith.constant 3 : index
    %23 = vector.load %arg5[%c1_26, %c3_27, %c3_28] : memref<2x22x22xf32, #tpu.memory_space<vmem>>, vector<1x1x16xf32>
    %24 = vector.shape_cast %23 : vector<1x1x16xf32> to vector<16xf32>
    %25 = vector.shape_cast %22 : vector<16xf32> to vector<1x1x16xf32>
    tpu.vector_store %arg5[%c1_26, %c3_27, %c3_28], %25 {strides = array<i32>} : memref<2x22x22xf32, #tpu.memory_space<vmem>>, vector<1x1x16xf32>,
    %c0_29 = arith.constant 0 : index
    %c16 = arith.constant 16 : index
    %26 = vector.load %arg7[%c0_29, %c16] : memref<4x256xf32, #tpu.memory_space<vmem>>, vector<1x16xf32>
    %27 = vector.shape_cast %26 : vector<1x16xf32> to vector<16xf32>
    %c0_30 = arith.constant 0 : index
    %c4 = arith.constant 4 : index
    %c3_31 = arith.constant 3 : index
    %28 = vector.load %arg5[%c0_30, %c4, %c3_31] : memref<2x22x22xf32, #tpu.memory_space<vmem>>, vector<1x1x16xf32>
    %29 = vector.shape_cast %28 : vector<1x1x16xf32> to vector<16xf32>
    %30 = vector.shape_cast %27 : vector<16xf32> to vector<1x1x16xf32>
    tpu.vector_store %arg5[%c0_30, %c4, %c3_31], %30 {strides = array<i32>} : memref<2x22x22xf32, #tpu.memory_space<vmem>>, vector<1x1x16xf32>,
    %c1_32 = arith.constant 1 : index
    %c16_33 = arith.constant 16 : index
    %31 = vector.load %arg7[%c1_32, %c16_33] : memref<4x256xf32, #tpu.memory_space<vmem>>, vector<1x16xf32>
    %32 = vector.shape_cast %31 : vector<1x16xf32> to vector<16xf32>
    %c1_34 = arith.constant 1 : index
    %c4_35 = arith.constant 4 : index
    %c3_36 = arith.constant 3 : index
    %33 = vector.load %arg5[%c1_34, %c4_35, %c3_36] : memref<2x22x22xf32, #tpu.memory_space<vmem>>, vector<1x1x16xf32>
    %34 = vector.shape_cast %33 : vector<1x1x16xf32> to vector<16xf32>
    %35 = vector.shape_cast %32 : vector<16xf32> to vector<1x1x16xf32>
    tpu.vector_store %arg5[%c1_34, %c4_35, %c3_36], %35 {strides = array<i32>} : memref<2x22x22xf32, #tpu.memory_space<vmem>>, vector<1x1x16xf32>,
    %c0_37 = arith.constant 0 : index
    %c32 = arith.constant 32 : index
    %36 = vector.load %arg7[%c0_37, %c32] : memref<4x256xf32, #tpu.memory_space<vmem>>, vector<1x16xf32>
    %37 = vector.shape_cast %36 : vector<1x16xf32> to vector<16xf32>
    %c0_38 = arith.constant 0 : index
    %c5 = arith.constant 5 : index
    %c3_39 = arith.constant 3 : index
    %38 = vector.load %arg5[%c0_38, %c5, %c3_39] : memref<2x22x22xf32, #tpu.memory_space<vmem>>, vector<1x1x16xf32>
    %39 = vector.shape_cast %38 : vector<1x1x16xf32> to vector<16xf32>
    %40 = vector.shape_cast %37 : vector<16xf32> to vector<1x1x16xf32>
    tpu.vector_store %arg5[%c0_38, %c5, %c3_39], %40 {strides = array<i32>} : memref<2x22x22xf32, #tpu.memory_space<vmem>>, vector<1x1x16xf32>,
    %c1_40 = arith.constant 1 : index
    %c32_41 = arith.constant 32 : index
    %41 = vector.load %arg7[%c1_40, %c32_41] : memref<4x256xf32, #tpu.memory_space<vmem>>, vector<1x16xf32>
    %42 = vector.shape_cast %41 : vector<1x16xf32> to vector<16xf32>
    %c1_42 = arith.constant 1 : index
    %c5_43 = arith.constant 5 : index
    %c3_44 = arith.constant 3 : index
    %43 = vector.load %arg5[%c1_42, %c5_43, %c3_44] : memref<2x22x22xf32, #tpu.memory_space<vmem>>, vector<1x1x16xf32>
    %44 = vector.shape_cast %43 : vector<1x1x16xf32> to vector<16xf32>
    %45 = vector.shape_cast %42 : vector<16xf32> to vector<1x1x16xf32>
    tpu.vector_store %arg5[%c1_42, %c5_43, %c3_44], %45 {strides = array<i32>} : memref<2x22x22xf32, #tpu.memory_space<vmem>>, vector<1x1x16xf32>,
    %c0_45 = arith.constant 0 : index
    %c48 = arith.constant 48 : index
    %46 = vector.load %arg7[%c0_45, %c48] : memref<4x256xf32, #tpu.memory_space<vmem>>, vector<1x16xf32>
    %47 = vector.shape_cast %46 : vector<1x16xf32> to vector<16xf32>
    %c0_46 = arith.constant 0 : index
    %c6 = arith.constant 6 : index
    %c3_47 = arith.constant 3 : index
    %48 = vector.load %arg5[%c0_46, %c6, %c3_47] : memref<2x22x22xf32, #tpu.memory_space<vmem>>, vector<1x1x16xf32>
    %49 = vector.shape_cast %48 : vector<1x1x16xf32> to vector<16xf32>
    %50 = vector.shape_cast %47 : vector<16xf32> to vector<1x1x16xf32>
    tpu.vector_store %arg5[%c0_46, %c6, %c3_47], %50 {strides = array<i32>} : memref<2x22x22xf32, #tpu.memory_space<vmem>>, vector<1x1x16xf32>,
    %c1_48 = arith.constant 1 : index
    %c48_49 = arith.constant 48 : index
    %51 = vector.load %arg7[%c1_48, %c48_49] : memref<4x256xf32, #tpu.memory_space<vmem>>, vector<1x16xf32>
    %52 = vector.shape_cast %51 : vector<1x16xf32> to vector<16xf32>
    %c1_50 = arith.constant 1 : index
    %c6_51 = arith.constant 6 : index
    %c3_52 = arith.constant 3 : index
    %53 = vector.load %arg5[%c1_50, %c6_51, %c3_52] : memref<2x22x22xf32, #tpu.memory_space<vmem>>, vector<1x1x16xf32>
    %54 = vector.shape_cast %53 : vector<1x1x16xf32> to vector<16xf32>
    %55 = vector.shape_cast %52 : vector<16xf32> to vector<1x1x16xf32>
    tpu.vector_store %arg5[%c1_50, %c6_51, %c3_52], %55 {strides = array<i32>} : memref<2x22x22xf32, #tpu.memory_space<vmem>>, vector<1x1x16xf32>,
    %c0_53 = arith.constant 0 : index
    %c64 = arith.constant 64 : index
    %56 = vector.load %arg7[%c0_53, %c64] : memref<4x256xf32, #tpu.memory_space<vmem>>, vector<1x16xf32>
    %57 = vector.shape_cast %56 : vector<1x16xf32> to vector<16xf32>
    %c0_54 = arith.constant 0 : index
    %c7 = arith.constant 7 : index
    %c3_55 = arith.constant 3 : index
    %58 = vector.load %arg5[%c0_54, %c7, %c3_55] : memref<2x22x22xf32, #tpu.memory_space<vmem>>, vector<1x1x16xf32>
    %59 = vector.shape_cast %58 : vector<1x1x16xf32> to vector<16xf32>
    %60 = vector.shape_cast %57 : vector<16xf32> to vector<1x1x16xf32>
    tpu.vector_store %arg5[%c0_54, %c7, %c3_55], %60 {strides = array<i32>} : memref<2x22x22xf32, #tpu.memory_space<vmem>>, vector<1x1x16xf32>,
    %c1_56 = arith.constant 1 : index
    %c64_57 = arith.constant 64 : index
    %61 = vector.load %arg7[%c1_56, %c64_57] : memref<4x256xf32, #tpu.memory_space<vmem>>, vector<1x16xf32>
    %62 = vector.shape_cast %61 : vector<1x16xf32> to vector<16xf32>
    %c1_58 = arith.constant 1 : index
    %c7_59 = arith.constant 7 : index
    %c3_60 = arith.constant 3 : index
    %63 = vector.load %arg5[%c1_58, %c7_59, %c3_60] : memref<2x22x22xf32, #tpu.memory_space<vmem>>, vector<1x1x16xf32>
    %64 = vector.shape_cast %63 : vector<1x1x16xf32> to vector<16xf32>
    %65 = vector.shape_cast %62 : vector<16xf32> to vector<1x1x16xf32>
    tpu.vector_store %arg5[%c1_58, %c7_59, %c3_60], %65 {strides = array<i32>} : memref<2x22x22xf32, #tpu.memory_space<vmem>>, vector<1x1x16xf32>,
    %c0_61 = arith.constant 0 : index
    %c80 = arith.constant 80 : index
    %66 = vector.load %arg7[%c0_61, %c80] : memref<4x256xf32, #tpu.memory_space<vmem>>, vector<1x16xf32>
    %67 = vector.shape_cast %66 : vector<1x16xf32> to vector<16xf32>
    %c0_62 = arith.constant 0 : index
    %c8 = arith.constant 8 : index
    %c3_63 = arith.constant 3 : index
    %68 = vector.load %arg5[%c0_62, %c8, %c3_63] : memref<2x22x22xf32, #tpu.memory_space<vmem>>, vector<1x1x16xf32>
    %69 = vector.shape_cast %68 : vector<1x1x16xf32> to vector<16xf32>
    %70 = vector.shape_cast %67 : vector<16xf32> to vector<1x1x16xf32>
    tpu.vector_store %arg5[%c0_62, %c8, %c3_63], %70 {strides = array<i32>} : memref<2x22x22xf32, #tpu.memory_space<vmem>>, vector<1x1x16xf32>,
    %c1_64 = arith.constant 1 : index
    %c80_65 = arith.constant 80 : index
    %71 = vector.load %arg7[%c1_64, %c80_65] : memref<4x256xf32, #tpu.memory_space<vmem>>, vector<1x16xf32>
    %72 = vector.shape_cast %71 : vector<1x16xf32> to vector<16xf32>
    %c1_66 = arith.constant 1 : index
    %c8_67 = arith.constant 8 : index
    %c3_68 = arith.constant 3 : index
    %73 = vector.load %arg5[%c1_66, %c8_67, %c3_68] : memref<2x22x22xf32, #tpu.memory_space<vmem>>, vector<1x1x16xf32>
    %74 = vector.shape_cast %73 : vector<1x1x16xf32> to vector<16xf32>
    %75 = vector.shape_cast %72 : vector<16xf32> to vector<1x1x16xf32>
    tpu.vector_store %arg5[%c1_66, %c8_67, %c3_68], %75 {strides = array<i32>} : memref<2x22x22xf32, #tpu.memory_space<vmem>>, vector<1x1x16xf32>,
    %c0_69 = arith.constant 0 : index
    %c96 = arith.constant 96 : index
    %76 = vector.load %arg7[%c0_69, %c96] : memref<4x256xf32, #tpu.memory_space<vmem>>, vector<1x16xf32>
    %77 = vector.shape_cast %76 : vector<1x16xf32> to vector<16xf32>
    %c0_70 = arith.constant 0 : index
    %c9 = arith.constant 9 : index
    %c3_71 = arith.constant 3 : index
    %78 = vector.load %arg5[%c0_70, %c9, %c3_71] : memref<2x22x22xf32, #tpu.memory_space<vmem>>, vector<1x1x16xf32>
    %79 = vector.shape_cast %78 : vector<1x1x16xf32> to vector<16xf32>
    %80 = vector.shape_cast %77 : vector<16xf32> to vector<1x1x16xf32>
    tpu.vector_store %arg5[%c0_70, %c9, %c3_71], %80 {strides = array<i32>} : memref<2x22x22xf32, #tpu.memory_space<vmem>>, vector<1x1x16xf32>,
    %c1_72 = arith.constant 1 : index
    %c96_73 = arith.constant 96 : index
    %81 = vector.load %arg7[%c1_72, %c96_73] : memref<4x256xf32, #tpu.memory_space<vmem>>, vector<1x16xf32>
    %82 = vector.shape_cast %81 : vector<1x16xf32> to vector<16xf32>
    %c1_74 = arith.constant 1 : index
    %c9_75 = arith.constant 9 : index
    %c3_76 = arith.constant 3 : index
    %83 = vector.load %arg5[%c1_74, %c9_75, %c3_76] : memref<2x22x22xf32, #tpu.memory_space<vmem>>, vector<1x1x16xf32>
    %84 = vector.shape_cast %83 : vector<1x1x16xf32> to vector<16xf32>
    %85 = vector.shape_cast %82 : vector<16xf32> to vector<1x1x16xf32>
    tpu.vector_store %arg5[%c1_74, %c9_75, %c3_76], %85 {strides = array<i32>} : memref<2x22x22xf32, #tpu.memory_space<vmem>>, vector<1x1x16xf32>,
    %c0_77 = arith.constant 0 : index
    %c112 = arith.constant 112 : index
    %86 = vector.load %arg7[%c0_77, %c112] : memref<4x256xf32, #tpu.memory_space<vmem>>, vector<1x16xf32>
    %87 = vector.shape_cast %86 : vector<1x16xf32> to vector<16xf32>
    %c0_78 = arith.constant 0 : index
    %c10 = arith.constant 10 : index
    %c3_79 = arith.constant 3 : index
    %88 = vector.load %arg5[%c0_78, %c10, %c3_79] : memref<2x22x22xf32, #tpu.memory_space<vmem>>, vector<1x1x16xf32>
    %89 = vector.shape_cast %88 : vector<1x1x16xf32> to vector<16xf32>
    %90 = vector.shape_cast %87 : vector<16xf32> to vector<1x1x16xf32>
    tpu.vector_store %arg5[%c0_78, %c10, %c3_79], %90 {strides = array<i32>} : memref<2x22x22xf32, #tpu.memory_space<vmem>>, vector<1x1x16xf32>,
    %c1_80 = arith.constant 1 : index
    %c112_81 = arith.constant 112 : index
    %91 = vector.load %arg7[%c1_80, %c112_81] : memref<4x256xf32, #tpu.memory_space<vmem>>, vector<1x16xf32>
    %92 = vector.shape_cast %91 : vector<1x16xf32> to vector<16xf32>
    %c1_82 = arith.constant 1 : index
    %c10_83 = arith.constant 10 : index
    %c3_84 = arith.constant 3 : index
    %93 = vector.load %arg5[%c1_82, %c10_83, %c3_84] : memref<2x22x22xf32, #tpu.memory_space<vmem>>, vector<1x1x16xf32>
    %94 = vector.shape_cast %93 : vector<1x1x16xf32> to vector<16xf32>
    %95 = vector.shape_cast %92 : vector<16xf32> to vector<1x1x16xf32>
    tpu.vector_store %arg5[%c1_82, %c10_83, %c3_84], %95 {strides = array<i32>} : memref<2x22x22xf32, #tpu.memory_space<vmem>>, vector<1x1x16xf32>,
    %c0_85 = arith.constant 0 : index
    %c128 = arith.constant 128 : index
    %96 = vector.load %arg7[%c0_85, %c128] : memref<4x256xf32, #tpu.memory_space<vmem>>, vector<1x16xf32>
    %97 = vector.shape_cast %96 : vector<1x16xf32> to vector<16xf32>
    %c0_86 = arith.constant 0 : index
    %c11 = arith.constant 11 : index
    %c3_87 = arith.constant 3 : index
    %98 = vector.load %arg5[%c0_86, %c11, %c3_87] : memref<2x22x22xf32, #tpu.memory_space<vmem>>, vector<1x1x16xf32>
    %99 = vector.shape_cast %98 : vector<1x1x16xf32> to vector<16xf32>
    %100 = vector.shape_cast %97 : vector<16xf32> to vector<1x1x16xf32>
    tpu.vector_store %arg5[%c0_86, %c11, %c3_87], %100 {strides = array<i32>} : memref<2x22x22xf32, #tpu.memory_space<vmem>>, vector<1x1x16xf32>,
    %c1_88 = arith.constant 1 : index
    %c128_89 = arith.constant 128 : index
    %101 = vector.load %arg7[%c1_88, %c128_89] : memref<4x256xf32, #tpu.memory_space<vmem>>, vector<1x16xf32>
    %102 = vector.shape_cast %101 : vector<1x16xf32> to vector<16xf32>
    %c1_90 = arith.constant 1 : index
    %c11_91 = arith.constant 11 : index
    %c3_92 = arith.constant 3 : index
    %103 = vector.load %arg5[%c1_90, %c11_91, %c3_92] : memref<2x22x22xf32, #tpu.memory_space<vmem>>, vector<1x1x16xf32>
    %104 = vector.shape_cast %103 : vector<1x1x16xf32> to vector<16xf32>
    %105 = vector.shape_cast %102 : vector<16xf32> to vector<1x1x16xf32>
    tpu.vector_store %arg5[%c1_90, %c11_91, %c3_92], %105 {strides = array<i32>} : memref<2x22x22xf32, #tpu.memory_space<vmem>>, vector<1x1x16xf32>,
    %c0_93 = arith.constant 0 : index
    %c144 = arith.constant 144 : index
    %106 = vector.load %arg7[%c0_93, %c144] : memref<4x256xf32, #tpu.memory_space<vmem>>, vector<1x16xf32>
    %107 = vector.shape_cast %106 : vector<1x16xf32> to vector<16xf32>
    %c0_94 = arith.constant 0 : index
    %c12 = arith.constant 12 : index
    %c3_95 = arith.constant 3 : index
    %108 = vector.load %arg5[%c0_94, %c12, %c3_95] : memref<2x22x22xf32, #tpu.memory_space<vmem>>, vector<1x1x16xf32>
    %109 = vector.shape_cast %108 : vector<1x1x16xf32> to vector<16xf32>
    %110 = vector.shape_cast %107 : vector<16xf32> to vector<1x1x16xf32>
    tpu.vector_store %arg5[%c0_94, %c12, %c3_95], %110 {strides = array<i32>} : memref<2x22x22xf32, #tpu.memory_space<vmem>>, vector<1x1x16xf32>,
    %c1_96 = arith.constant 1 : index
    %c144_97 = arith.constant 144 : index
    %111 = vector.load %arg7[%c1_96, %c144_97] : memref<4x256xf32, #tpu.memory_space<vmem>>, vector<1x16xf32>
    %112 = vector.shape_cast %111 : vector<1x16xf32> to vector<16xf32>
    %c1_98 = arith.constant 1 : index
    %c12_99 = arith.constant 12 : index
    %c3_100 = arith.constant 3 : index
    %113 = vector.load %arg5[%c1_98, %c12_99, %c3_100] : memref<2x22x22xf32, #tpu.memory_space<vmem>>, vector<1x1x16xf32>
    %114 = vector.shape_cast %113 : vector<1x1x16xf32> to vector<16xf32>
    %115 = vector.shape_cast %112 : vector<16xf32> to vector<1x1x16xf32>
    tpu.vector_store %arg5[%c1_98, %c12_99, %c3_100], %115 {strides = array<i32>} : memref<2x22x22xf32, #tpu.memory_space<vmem>>, vector<1x1x16xf32>,
    %c0_101 = arith.constant 0 : index
    %c160 = arith.constant 160 : index
    %116 = vector.load %arg7[%c0_101, %c160] : memref<4x256xf32, #tpu.memory_space<vmem>>, vector<1x16xf32>
    %117 = vector.shape_cast %116 : vector<1x16xf32> to vector<16xf32>
    %c0_102 = arith.constant 0 : index
    %c13 = arith.constant 13 : index
    %c3_103 = arith.constant 3 : index
    %118 = vector.load %arg5[%c0_102, %c13, %c3_103] : memref<2x22x22xf32, #tpu.memory_space<vmem>>, vector<1x1x16xf32>
    %119 = vector.shape_cast %118 : vector<1x1x16xf32> to vector<16xf32>
    %120 = vector.shape_cast %117 : vector<16xf32> to vector<1x1x16xf32>
    tpu.vector_store %arg5[%c0_102, %c13, %c3_103], %120 {strides = array<i32>} : memref<2x22x22xf32, #tpu.memory_space<vmem>>, vector<1x1x16xf32>,
    %c1_104 = arith.constant 1 : index
    %c160_105 = arith.constant 160 : index
    %121 = vector.load %arg7[%c1_104, %c160_105] : memref<4x256xf32, #tpu.memory_space<vmem>>, vector<1x16xf32>
    %122 = vector.shape_cast %121 : vector<1x16xf32> to vector<16xf32>
    %c1_106 = arith.constant 1 : index
    %c13_107 = arith.constant 13 : index
    %c3_108 = arith.constant 3 : index
    %123 = vector.load %arg5[%c1_106, %c13_107, %c3_108] : memref<2x22x22xf32, #tpu.memory_space<vmem>>, vector<1x1x16xf32>
    %124 = vector.shape_cast %123 : vector<1x1x16xf32> to vector<16xf32>
    %125 = vector.shape_cast %122 : vector<16xf32> to vector<1x1x16xf32>
    tpu.vector_store %arg5[%c1_106, %c13_107, %c3_108], %125 {strides = array<i32>} : memref<2x22x22xf32, #tpu.memory_space<vmem>>, vector<1x1x16xf32>,
    %c0_109 = arith.constant 0 : index
    %c176 = arith.constant 176 : index
    %126 = vector.load %arg7[%c0_109, %c176] : memref<4x256xf32, #tpu.memory_space<vmem>>, vector<1x16xf32>
    %127 = vector.shape_cast %126 : vector<1x16xf32> to vector<16xf32>
    %c0_110 = arith.constant 0 : index
    %c14 = arith.constant 14 : index
    %c3_111 = arith.constant 3 : index
    %128 = vector.load %arg5[%c0_110, %c14, %c3_111] : memref<2x22x22xf32, #tpu.memory_space<vmem>>, vector<1x1x16xf32>
    %129 = vector.shape_cast %128 : vector<1x1x16xf32> to vector<16xf32>
    %130 = vector.shape_cast %127 : vector<16xf32> to vector<1x1x16xf32>
    tpu.vector_store %arg5[%c0_110, %c14, %c3_111], %130 {strides = array<i32>} : memref<2x22x22xf32, #tpu.memory_space<vmem>>, vector<1x1x16xf32>,
    %c1_112 = arith.constant 1 : index
    %c176_113 = arith.constant 176 : index
    %131 = vector.load %arg7[%c1_112, %c176_113] : memref<4x256xf32, #tpu.memory_space<vmem>>, vector<1x16xf32>
    %132 = vector.shape_cast %131 : vector<1x16xf32> to vector<16xf32>
    %c1_114 = arith.constant 1 : index
    %c14_115 = arith.constant 14 : index
    %c3_116 = arith.constant 3 : index
    %133 = vector.load %arg5[%c1_114, %c14_115, %c3_116] : memref<2x22x22xf32, #tpu.memory_space<vmem>>, vector<1x1x16xf32>
    %134 = vector.shape_cast %133 : vector<1x1x16xf32> to vector<16xf32>
    %135 = vector.shape_cast %132 : vector<16xf32> to vector<1x1x16xf32>
    tpu.vector_store %arg5[%c1_114, %c14_115, %c3_116], %135 {strides = array<i32>} : memref<2x22x22xf32, #tpu.memory_space<vmem>>, vector<1x1x16xf32>,
    %c0_117 = arith.constant 0 : index
    %c192 = arith.constant 192 : index
    %136 = vector.load %arg7[%c0_117, %c192] : memref<4x256xf32, #tpu.memory_space<vmem>>, vector<1x16xf32>
    %137 = vector.shape_cast %136 : vector<1x16xf32> to vector<16xf32>
    %c0_118 = arith.constant 0 : index
    %c15 = arith.constant 15 : index
    %c3_119 = arith.constant 3 : index
    %138 = vector.load %arg5[%c0_118, %c15, %c3_119] : memref<2x22x22xf32, #tpu.memory_space<vmem>>, vector<1x1x16xf32>
    %139 = vector.shape_cast %138 : vector<1x1x16xf32> to vector<16xf32>
    %140 = vector.shape_cast %137 : vector<16xf32> to vector<1x1x16xf32>
    tpu.vector_store %arg5[%c0_118, %c15, %c3_119], %140 {strides = array<i32>} : memref<2x22x22xf32, #tpu.memory_space<vmem>>, vector<1x1x16xf32>,
    %c1_120 = arith.constant 1 : index
    %c192_121 = arith.constant 192 : index
    %141 = vector.load %arg7[%c1_120, %c192_121] : memref<4x256xf32, #tpu.memory_space<vmem>>, vector<1x16xf32>
    %142 = vector.shape_cast %141 : vector<1x16xf32> to vector<16xf32>
    %c1_122 = arith.constant 1 : index
    %c15_123 = arith.constant 15 : index
    %c3_124 = arith.constant 3 : index
    %143 = vector.load %arg5[%c1_122, %c15_123, %c3_124] : memref<2x22x22xf32, #tpu.memory_space<vmem>>, vector<1x1x16xf32>
    %144 = vector.shape_cast %143 : vector<1x1x16xf32> to vector<16xf32>
    %145 = vector.shape_cast %142 : vector<16xf32> to vector<1x1x16xf32>
    tpu.vector_store %arg5[%c1_122, %c15_123, %c3_124], %145 {strides = array<i32>} : memref<2x22x22xf32, #tpu.memory_space<vmem>>, vector<1x1x16xf32>,
    %c0_125 = arith.constant 0 : index
    %c208 = arith.constant 208 : index
    %146 = vector.load %arg7[%c0_125, %c208] : memref<4x256xf32, #tpu.memory_space<vmem>>, vector<1x16xf32>
    %147 = vector.shape_cast %146 : vector<1x16xf32> to vector<16xf32>
    %c0_126 = arith.constant 0 : index
    %c16_127 = arith.constant 16 : index
    %c3_128 = arith.constant 3 : index
    %148 = vector.load %arg5[%c0_126, %c16_127, %c3_128] : memref<2x22x22xf32, #tpu.memory_space<vmem>>, vector<1x1x16xf32>
    %149 = vector.shape_cast %148 : vector<1x1x16xf32> to vector<16xf32>
    %150 = vector.shape_cast %147 : vector<16xf32> to vector<1x1x16xf32>
    tpu.vector_store %arg5[%c0_126, %c16_127, %c3_128], %150 {strides = array<i32>} : memref<2x22x22xf32, #tpu.memory_space<vmem>>, vector<1x1x16xf32>,
    %c1_129 = arith.constant 1 : index
    %c208_130 = arith.constant 208 : index
    %151 = vector.load %arg7[%c1_129, %c208_130] : memref<4x256xf32, #tpu.memory_space<vmem>>, vector<1x16xf32>
    %152 = vector.shape_cast %151 : vector<1x16xf32> to vector<16xf32>
    %c1_131 = arith.constant 1 : index
    %c16_132 = arith.constant 16 : index
    %c3_133 = arith.constant 3 : index
    %153 = vector.load %arg5[%c1_131, %c16_132, %c3_133] : memref<2x22x22xf32, #tpu.memory_space<vmem>>, vector<1x1x16xf32>
    %154 = vector.shape_cast %153 : vector<1x1x16xf32> to vector<16xf32>
    %155 = vector.shape_cast %152 : vector<16xf32> to vector<1x1x16xf32>
    tpu.vector_store %arg5[%c1_131, %c16_132, %c3_133], %155 {strides = array<i32>} : memref<2x22x22xf32, #tpu.memory_space<vmem>>, vector<1x1x16xf32>,
    %c0_134 = arith.constant 0 : index
    %c224 = arith.constant 224 : index
    %156 = vector.load %arg7[%c0_134, %c224] : memref<4x256xf32, #tpu.memory_space<vmem>>, vector<1x16xf32>
    %157 = vector.shape_cast %156 : vector<1x16xf32> to vector<16xf32>
    %c0_135 = arith.constant 0 : index
    %c17 = arith.constant 17 : index
    %c3_136 = arith.constant 3 : index
    %158 = vector.load %arg5[%c0_135, %c17, %c3_136] : memref<2x22x22xf32, #tpu.memory_space<vmem>>, vector<1x1x16xf32>
    %159 = vector.shape_cast %158 : vector<1x1x16xf32> to vector<16xf32>
    %160 = vector.shape_cast %157 : vector<16xf32> to vector<1x1x16xf32>
    tpu.vector_store %arg5[%c0_135, %c17, %c3_136], %160 {strides = array<i32>} : memref<2x22x22xf32, #tpu.memory_space<vmem>>, vector<1x1x16xf32>,
    %c1_137 = arith.constant 1 : index
    %c224_138 = arith.constant 224 : index
    %161 = vector.load %arg7[%c1_137, %c224_138] : memref<4x256xf32, #tpu.memory_space<vmem>>, vector<1x16xf32>
    %162 = vector.shape_cast %161 : vector<1x16xf32> to vector<16xf32>
    %c1_139 = arith.constant 1 : index
    %c17_140 = arith.constant 17 : index
    %c3_141 = arith.constant 3 : index
    %163 = vector.load %arg5[%c1_139, %c17_140, %c3_141] : memref<2x22x22xf32, #tpu.memory_space<vmem>>, vector<1x1x16xf32>
    %164 = vector.shape_cast %163 : vector<1x1x16xf32> to vector<16xf32>
    %165 = vector.shape_cast %162 : vector<16xf32> to vector<1x1x16xf32>
    tpu.vector_store %arg5[%c1_139, %c17_140, %c3_141], %165 {strides = array<i32>} : memref<2x22x22xf32, #tpu.memory_space<vmem>>, vector<1x1x16xf32>,
    %c0_142 = arith.constant 0 : index
    %c240 = arith.constant 240 : index
    %166 = vector.load %arg7[%c0_142, %c240] : memref<4x256xf32, #tpu.memory_space<vmem>>, vector<1x16xf32>
    %167 = vector.shape_cast %166 : vector<1x16xf32> to vector<16xf32>
    %c0_143 = arith.constant 0 : index
    %c18 = arith.constant 18 : index
    %c3_144 = arith.constant 3 : index
    %168 = vector.load %arg5[%c0_143, %c18, %c3_144] : memref<2x22x22xf32, #tpu.memory_space<vmem>>, vector<1x1x16xf32>
    %169 = vector.shape_cast %168 : vector<1x1x16xf32> to vector<16xf32>
    %170 = vector.shape_cast %167 : vector<16xf32> to vector<1x1x16xf32>
    tpu.vector_store %arg5[%c0_143, %c18, %c3_144], %170 {strides = array<i32>} : memref<2x22x22xf32, #tpu.memory_space<vmem>>, vector<1x1x16xf32>,
    %c1_145 = arith.constant 1 : index
    %c240_146 = arith.constant 240 : index
    %171 = vector.load %arg7[%c1_145, %c240_146] : memref<4x256xf32, #tpu.memory_space<vmem>>, vector<1x16xf32>
    %172 = vector.shape_cast %171 : vector<1x16xf32> to vector<16xf32>
    %c1_147 = arith.constant 1 : index
    %c18_148 = arith.constant 18 : index
    %c3_149 = arith.constant 3 : index
    %173 = vector.load %arg5[%c1_147, %c18_148, %c3_149] : memref<2x22x22xf32, #tpu.memory_space<vmem>>, vector<1x1x16xf32>
    %174 = vector.shape_cast %173 : vector<1x1x16xf32> to vector<16xf32>
    %175 = vector.shape_cast %172 : vector<16xf32> to vector<1x1x16xf32>
    tpu.vector_store %arg5[%c1_147, %c18_148, %c3_149], %175 {strides = array<i32>} : memref<2x22x22xf32, #tpu.memory_space<vmem>>, vector<1x1x16xf32>,
    %c0_150 = arith.constant 0 : index
    %c0_151 = arith.constant 0 : index
    %c0_152 = arith.constant 0 : index
    %176 = vector.load %arg5[%c0_150, %c0_151, %c0_152] : memref<2x22x22xf32, #tpu.memory_space<vmem>>, vector<1x22x16xf32>
    %177 = vector.shape_cast %176 : vector<1x22x16xf32> to vector<22x16xf32>
    %c0_153 = arith.constant 0 : index
    %c0_154 = arith.constant 0 : index
    %c0_155 = arith.constant 0 : index
    %c0_156 = arith.constant 0 : index
    %178 = vector.load %arg6[%c0_153, %c0_154, %c0_155, %c0_156] : memref<2x7x22x16xf32, #tpu.memory_space<vmem>>, vector<1x1x22x16xf32>
    %179 = vector.shape_cast %178 : vector<1x1x22x16xf32> to vector<22x16xf32>
    %180 = vector.shape_cast %177 : vector<22x16xf32> to vector<1x1x22x16xf32>
    tpu.vector_store %arg6[%c0_153, %c0_154, %c0_155, %c0_156], %180 {strides = array<i32>} : memref<2x7x22x16xf32, #tpu.memory_space<vmem>>, vector<1x1x22x16xf32>,
    %c0_157 = arith.constant 0 : index
    %c0_158 = arith.constant 0 : index
    %c1_159 = arith.constant 1 : index
    %181 = vector.load %arg5[%c0_157, %c0_158, %c1_159] : memref<2x22x22xf32, #tpu.memory_space<vmem>>, vector<1x22x16xf32>
    %182 = vector.shape_cast %181 : vector<1x22x16xf32> to vector<22x16xf32>
    %c0_160 = arith.constant 0 : index
    %c1_161 = arith.constant 1 : index
    %c0_162 = arith.constant 0 : index
    %c0_163 = arith.constant 0 : index
    %183 = vector.load %arg6[%c0_160, %c1_161, %c0_162, %c0_163] : memref<2x7x22x16xf32, #tpu.memory_space<vmem>>, vector<1x1x22x16xf32>
    %184 = vector.shape_cast %183 : vector<1x1x22x16xf32> to vector<22x16xf32>
    %185 = vector.shape_cast %182 : vector<22x16xf32> to vector<1x1x22x16xf32>
    tpu.vector_store %arg6[%c0_160, %c1_161, %c0_162, %c0_163], %185 {strides = array<i32>} : memref<2x7x22x16xf32, #tpu.memory_space<vmem>>, vector<1x1x22x16xf32>,
    %c0_164 = arith.constant 0 : index
    %c0_165 = arith.constant 0 : index
    %c2 = arith.constant 2 : index
    %186 = vector.load %arg5[%c0_164, %c0_165, %c2] : memref<2x22x22xf32, #tpu.memory_space<vmem>>, vector<1x22x16xf32>
    %187 = vector.shape_cast %186 : vector<1x22x16xf32> to vector<22x16xf32>
    %c0_166 = arith.constant 0 : index
    %c2_167 = arith.constant 2 : index
    %c0_168 = arith.constant 0 : index
    %c0_169 = arith.constant 0 : index
    %188 = vector.load %arg6[%c0_166, %c2_167, %c0_168, %c0_169] : memref<2x7x22x16xf32, #tpu.memory_space<vmem>>, vector<1x1x22x16xf32>
    %189 = vector.shape_cast %188 : vector<1x1x22x16xf32> to vector<22x16xf32>
    %190 = vector.shape_cast %187 : vector<22x16xf32> to vector<1x1x22x16xf32>
    tpu.vector_store %arg6[%c0_166, %c2_167, %c0_168, %c0_169], %190 {strides = array<i32>} : memref<2x7x22x16xf32, #tpu.memory_space<vmem>>, vector<1x1x22x16xf32>,
    %c0_170 = arith.constant 0 : index
    %c0_171 = arith.constant 0 : index
    %c3_172 = arith.constant 3 : index
    %191 = vector.load %arg5[%c0_170, %c0_171, %c3_172] : memref<2x22x22xf32, #tpu.memory_space<vmem>>, vector<1x22x16xf32>
    %192 = vector.shape_cast %191 : vector<1x22x16xf32> to vector<22x16xf32>
    %c0_173 = arith.constant 0 : index
    %c3_174 = arith.constant 3 : index
    %c0_175 = arith.constant 0 : index
    %c0_176 = arith.constant 0 : index
    %193 = vector.load %arg6[%c0_173, %c3_174, %c0_175, %c0_176] : memref<2x7x22x16xf32, #tpu.memory_space<vmem>>, vector<1x1x22x16xf32>
    %194 = vector.shape_cast %193 : vector<1x1x22x16xf32> to vector<22x16xf32>
    %195 = vector.shape_cast %192 : vector<22x16xf32> to vector<1x1x22x16xf32>
    tpu.vector_store %arg6[%c0_173, %c3_174, %c0_175, %c0_176], %195 {strides = array<i32>} : memref<2x7x22x16xf32, #tpu.memory_space<vmem>>, vector<1x1x22x16xf32>,
    %c0_177 = arith.constant 0 : index
    %c0_178 = arith.constant 0 : index
    %c4_179 = arith.constant 4 : index
    %196 = vector.load %arg5[%c0_177, %c0_178, %c4_179] : memref<2x22x22xf32, #tpu.memory_space<vmem>>, vector<1x22x16xf32>
    %197 = vector.shape_cast %196 : vector<1x22x16xf32> to vector<22x16xf32>
    %c0_180 = arith.constant 0 : index
    %c4_181 = arith.constant 4 : index
    %c0_182 = arith.constant 0 : index
    %c0_183 = arith.constant 0 : index
    %198 = vector.load %arg6[%c0_180, %c4_181, %c0_182, %c0_183] : memref<2x7x22x16xf32, #tpu.memory_space<vmem>>, vector<1x1x22x16xf32>
    %199 = vector.shape_cast %198 : vector<1x1x22x16xf32> to vector<22x16xf32>
    %200 = vector.shape_cast %197 : vector<22x16xf32> to vector<1x1x22x16xf32>
    tpu.vector_store %arg6[%c0_180, %c4_181, %c0_182, %c0_183], %200 {strides = array<i32>} : memref<2x7x22x16xf32, #tpu.memory_space<vmem>>, vector<1x1x22x16xf32>,
    %c0_184 = arith.constant 0 : index
    %c0_185 = arith.constant 0 : index
    %c5_186 = arith.constant 5 : index
    %201 = vector.load %arg5[%c0_184, %c0_185, %c5_186] : memref<2x22x22xf32, #tpu.memory_space<vmem>>, vector<1x22x16xf32>
    %202 = vector.shape_cast %201 : vector<1x22x16xf32> to vector<22x16xf32>
    %c0_187 = arith.constant 0 : index
    %c5_188 = arith.constant 5 : index
    %c0_189 = arith.constant 0 : index
    %c0_190 = arith.constant 0 : index
    %203 = vector.load %arg6[%c0_187, %c5_188, %c0_189, %c0_190] : memref<2x7x22x16xf32, #tpu.memory_space<vmem>>, vector<1x1x22x16xf32>
    %204 = vector.shape_cast %203 : vector<1x1x22x16xf32> to vector<22x16xf32>
    %205 = vector.shape_cast %202 : vector<22x16xf32> to vector<1x1x22x16xf32>
    tpu.vector_store %arg6[%c0_187, %c5_188, %c0_189, %c0_190], %205 {strides = array<i32>} : memref<2x7x22x16xf32, #tpu.memory_space<vmem>>, vector<1x1x22x16xf32>,
    %c0_191 = arith.constant 0 : index
    %c0_192 = arith.constant 0 : index
    %c6_193 = arith.constant 6 : index
    %206 = vector.load %arg5[%c0_191, %c0_192, %c6_193] : memref<2x22x22xf32, #tpu.memory_space<vmem>>, vector<1x22x16xf32>
    %207 = vector.shape_cast %206 : vector<1x22x16xf32> to vector<22x16xf32>
    %c0_194 = arith.constant 0 : index
    %c6_195 = arith.constant 6 : index
    %c0_196 = arith.constant 0 : index
    %c0_197 = arith.constant 0 : index
    %208 = vector.load %arg6[%c0_194, %c6_195, %c0_196, %c0_197] : memref<2x7x22x16xf32, #tpu.memory_space<vmem>>, vector<1x1x22x16xf32>
    %209 = vector.shape_cast %208 : vector<1x1x22x16xf32> to vector<22x16xf32>
    %210 = vector.shape_cast %207 : vector<22x16xf32> to vector<1x1x22x16xf32>
    tpu.vector_store %arg6[%c0_194, %c6_195, %c0_196, %c0_197], %210 {strides = array<i32>} : memref<2x7x22x16xf32, #tpu.memory_space<vmem>>, vector<1x1x22x16xf32>,
    %c1_198 = arith.constant 1 : index
    %c0_199 = arith.constant 0 : index
    %c0_200 = arith.constant 0 : index
    %211 = vector.load %arg5[%c1_198, %c0_199, %c0_200] : memref<2x22x22xf32, #tpu.memory_space<vmem>>, vector<1x22x16xf32>
    %212 = vector.shape_cast %211 : vector<1x22x16xf32> to vector<22x16xf32>
    %c1_201 = arith.constant 1 : index
    %c0_202 = arith.constant 0 : index
    %c0_203 = arith.constant 0 : index
    %c0_204 = arith.constant 0 : index
    %213 = vector.load %arg6[%c1_201, %c0_202, %c0_203, %c0_204] : memref<2x7x22x16xf32, #tpu.memory_space<vmem>>, vector<1x1x22x16xf32>
    %214 = vector.shape_cast %213 : vector<1x1x22x16xf32> to vector<22x16xf32>
    %215 = vector.shape_cast %212 : vector<22x16xf32> to vector<1x1x22x16xf32>
    tpu.vector_store %arg6[%c1_201, %c0_202, %c0_203, %c0_204], %215 {strides = array<i32>} : memref<2x7x22x16xf32, #tpu.memory_space<vmem>>, vector<1x1x22x16xf32>,
    %c1_205 = arith.constant 1 : index
    %c0_206 = arith.constant 0 : index
    %c1_207 = arith.constant 1 : index
    %216 = vector.load %arg5[%c1_205, %c0_206, %c1_207] : memref<2x22x22xf32, #tpu.memory_space<vmem>>, vector<1x22x16xf32>
    %217 = vector.shape_cast %216 : vector<1x22x16xf32> to vector<22x16xf32>
    %c1_208 = arith.constant 1 : index
    %c1_209 = arith.constant 1 : index
    %c0_210 = arith.constant 0 : index
    %c0_211 = arith.constant 0 : index
    %218 = vector.load %arg6[%c1_208, %c1_209, %c0_210, %c0_211] : memref<2x7x22x16xf32, #tpu.memory_space<vmem>>, vector<1x1x22x16xf32>
    %219 = vector.shape_cast %218 : vector<1x1x22x16xf32> to vector<22x16xf32>
    %220 = vector.shape_cast %217 : vector<22x16xf32> to vector<1x1x22x16xf32>
    tpu.vector_store %arg6[%c1_208, %c1_209, %c0_210, %c0_211], %220 {strides = array<i32>} : memref<2x7x22x16xf32, #tpu.memory_space<vmem>>, vector<1x1x22x16xf32>,
    %c1_212 = arith.constant 1 : index
    %c0_213 = arith.constant 0 : index
    %c2_214 = arith.constant 2 : index
    %221 = vector.load %arg5[%c1_212, %c0_213, %c2_214] : memref<2x22x22xf32, #tpu.memory_space<vmem>>, vector<1x22x16xf32>
    %222 = vector.shape_cast %221 : vector<1x22x16xf32> to vector<22x16xf32>
    %c1_215 = arith.constant 1 : index
    %c2_216 = arith.constant 2 : index
    %c0_217 = arith.constant 0 : index
    %c0_218 = arith.constant 0 : index
    %223 = vector.load %arg6[%c1_215, %c2_216, %c0_217, %c0_218] : memref<2x7x22x16xf32, #tpu.memory_space<vmem>>, vector<1x1x22x16xf32>
    %224 = vector.shape_cast %223 : vector<1x1x22x16xf32> to vector<22x16xf32>
    %225 = vector.shape_cast %222 : vector<22x16xf32> to vector<1x1x22x16xf32>
    tpu.vector_store %arg6[%c1_215, %c2_216, %c0_217, %c0_218], %225 {strides = array<i32>} : memref<2x7x22x16xf32, #tpu.memory_space<vmem>>, vector<1x1x22x16xf32>,
    %c1_219 = arith.constant 1 : index
    %c0_220 = arith.constant 0 : index
    %c3_221 = arith.constant 3 : index
    %226 = vector.load %arg5[%c1_219, %c0_220, %c3_221] : memref<2x22x22xf32, #tpu.memory_space<vmem>>, vector<1x22x16xf32>
    %227 = vector.shape_cast %226 : vector<1x22x16xf32> to vector<22x16xf32>
    %c1_222 = arith.constant 1 : index
    %c3_223 = arith.constant 3 : index
    %c0_224 = arith.constant 0 : index
    %c0_225 = arith.constant 0 : index
    %228 = vector.load %arg6[%c1_222, %c3_223, %c0_224, %c0_225] : memref<2x7x22x16xf32, #tpu.memory_space<vmem>>, vector<1x1x22x16xf32>
    %229 = vector.shape_cast %228 : vector<1x1x22x16xf32> to vector<22x16xf32>
    %230 = vector.shape_cast %227 : vector<22x16xf32> to vector<1x1x22x16xf32>
    tpu.vector_store %arg6[%c1_222, %c3_223, %c0_224, %c0_225], %230 {strides = array<i32>} : memref<2x7x22x16xf32, #tpu.memory_space<vmem>>, vector<1x1x22x16xf32>,
    %c1_226 = arith.constant 1 : index
    %c0_227 = arith.constant 0 : index
    %c4_228 = arith.constant 4 : index
    %231 = vector.load %arg5[%c1_226, %c0_227, %c4_228] : memref<2x22x22xf32, #tpu.memory_space<vmem>>, vector<1x22x16xf32>
    %232 = vector.shape_cast %231 : vector<1x22x16xf32> to vector<22x16xf32>
    %c1_229 = arith.constant 1 : index
    %c4_230 = arith.constant 4 : index
    %c0_231 = arith.constant 0 : index
    %c0_232 = arith.constant 0 : index
    %233 = vector.load %arg6[%c1_229, %c4_230, %c0_231, %c0_232] : memref<2x7x22x16xf32, #tpu.memory_space<vmem>>, vector<1x1x22x16xf32>
    %234 = vector.shape_cast %233 : vector<1x1x22x16xf32> to vector<22x16xf32>
    %235 = vector.shape_cast %232 : vector<22x16xf32> to vector<1x1x22x16xf32>
    tpu.vector_store %arg6[%c1_229, %c4_230, %c0_231, %c0_232], %235 {strides = array<i32>} : memref<2x7x22x16xf32, #tpu.memory_space<vmem>>, vector<1x1x22x16xf32>,
    %c1_233 = arith.constant 1 : index
    %c0_234 = arith.constant 0 : index
    %c5_235 = arith.constant 5 : index
    %236 = vector.load %arg5[%c1_233, %c0_234, %c5_235] : memref<2x22x22xf32, #tpu.memory_space<vmem>>, vector<1x22x16xf32>
    %237 = vector.shape_cast %236 : vector<1x22x16xf32> to vector<22x16xf32>
    %c1_236 = arith.constant 1 : index
    %c5_237 = arith.constant 5 : index
    %c0_238 = arith.constant 0 : index
    %c0_239 = arith.constant 0 : index
    %238 = vector.load %arg6[%c1_236, %c5_237, %c0_238, %c0_239] : memref<2x7x22x16xf32, #tpu.memory_space<vmem>>, vector<1x1x22x16xf32>
    %239 = vector.shape_cast %238 : vector<1x1x22x16xf32> to vector<22x16xf32>
    %240 = vector.shape_cast %237 : vector<22x16xf32> to vector<1x1x22x16xf32>
    tpu.vector_store %arg6[%c1_236, %c5_237, %c0_238, %c0_239], %240 {strides = array<i32>} : memref<2x7x22x16xf32, #tpu.memory_space<vmem>>, vector<1x1x22x16xf32>,
    %c1_240 = arith.constant 1 : index
    %c0_241 = arith.constant 0 : index
    %c6_242 = arith.constant 6 : index
    %241 = vector.load %arg5[%c1_240, %c0_241, %c6_242] : memref<2x22x22xf32, #tpu.memory_space<vmem>>, vector<1x22x16xf32>
    %242 = vector.shape_cast %241 : vector<1x22x16xf32> to vector<22x16xf32>
    %c1_243 = arith.constant 1 : index
    %c6_244 = arith.constant 6 : index
    %c0_245 = arith.constant 0 : index
    %c0_246 = arith.constant 0 : index
    %243 = vector.load %arg6[%c1_243, %c6_244, %c0_245, %c0_246] : memref<2x7x22x16xf32, #tpu.memory_space<vmem>>, vector<1x1x22x16xf32>
    %244 = vector.shape_cast %243 : vector<1x1x22x16xf32> to vector<22x16xf32>
    %245 = vector.shape_cast %242 : vector<22x16xf32> to vector<1x1x22x16xf32>
    tpu.vector_store %arg6[%c1_243, %c6_244, %c0_245, %c0_246], %245 {strides = array<i32>} : memref<2x7x22x16xf32, #tpu.memory_space<vmem>>, vector<1x1x22x16xf32>,
    %cst_247 = arith.constant 0.000000e+00 : f32
    %246 = vector.broadcast %cst_247 : f32 to vector<16x16xf32>
    %cst_248 = arith.constant 0.000000e+00 : f32
    %247 = vector.broadcast %cst_248 : f32 to vector<16x16xf32>
    %cst_249 = arith.constant 0.000000e+00 : f32
    %248 = vector.broadcast %cst_249 : f32 to vector<16x16xf32>
    %cst_250 = arith.constant 0.000000e+00 : f32
    %249 = vector.broadcast %cst_250 : f32 to vector<16x16xf32>
    %c0_251 = arith.constant 0 : index
    %250 = memref.load %arg1[%c0_251] : memref<98xf32, #tpu.memory_space<smem>>
    %c0_252 = arith.constant 0 : index
    %c0_253 = arith.constant 0 : index
    %c0_254 = arith.constant 0 : index
    %c0_255 = arith.constant 0 : index
    %251 = vector.load %arg6[%c0_252, %c0_253, %c0_254, %c0_255] : memref<2x7x22x16xf32, #tpu.memory_space<vmem>>, vector<1x1x16x16xf32>
    %252 = vector.shape_cast %251 : vector<1x1x16x16xf32> to vector<16x16xf32>
    %253 = vector.broadcast %250 : f32 to vector<16x16xf32>
    %254 = arith.mulf %253, %252 : vector<16x16xf32>
    %255 = arith.addf %246, %254 : vector<16x16xf32>
    %c1_256 = arith.constant 1 : index
    %256 = memref.load %arg1[%c1_256] : memref<98xf32, #tpu.memory_space<smem>>
    %c0_257 = arith.constant 0 : index
    %c1_258 = arith.constant 1 : index
    %c0_259 = arith.constant 0 : index
    %c0_260 = arith.constant 0 : index
    %257 = vector.load %arg6[%c0_257, %c1_258, %c0_259, %c0_260] : memref<2x7x22x16xf32, #tpu.memory_space<vmem>>, vector<1x1x16x16xf32>
    %258 = vector.shape_cast %257 : vector<1x1x16x16xf32> to vector<16x16xf32>
    %259 = vector.broadcast %256 : f32 to vector<16x16xf32>
    %260 = arith.mulf %259, %258 : vector<16x16xf32>
    %261 = arith.addf %255, %260 : vector<16x16xf32>
    %c2_261 = arith.constant 2 : index
    %262 = memref.load %arg1[%c2_261] : memref<98xf32, #tpu.memory_space<smem>>
    %c0_262 = arith.constant 0 : index
    %c2_263 = arith.constant 2 : index
    %c0_264 = arith.constant 0 : index
    %c0_265 = arith.constant 0 : index
    %263 = vector.load %arg6[%c0_262, %c2_263, %c0_264, %c0_265] : memref<2x7x22x16xf32, #tpu.memory_space<vmem>>, vector<1x1x16x16xf32>
    %264 = vector.shape_cast %263 : vector<1x1x16x16xf32> to vector<16x16xf32>
    %265 = vector.broadcast %262 : f32 to vector<16x16xf32>
    %266 = arith.mulf %265, %264 : vector<16x16xf32>
    %267 = arith.addf %261, %266 : vector<16x16xf32>
    %c3_266 = arith.constant 3 : index
    %268 = memref.load %arg1[%c3_266] : memref<98xf32, #tpu.memory_space<smem>>
    %c0_267 = arith.constant 0 : index
    %c3_268 = arith.constant 3 : index
    %c0_269 = arith.constant 0 : index
    %c0_270 = arith.constant 0 : index
    %269 = vector.load %arg6[%c0_267, %c3_268, %c0_269, %c0_270] : memref<2x7x22x16xf32, #tpu.memory_space<vmem>>, vector<1x1x16x16xf32>
    %270 = vector.shape_cast %269 : vector<1x1x16x16xf32> to vector<16x16xf32>
    %271 = vector.broadcast %268 : f32 to vector<16x16xf32>
    %272 = arith.mulf %271, %270 : vector<16x16xf32>
    %273 = arith.addf %267, %272 : vector<16x16xf32>
    %c4_271 = arith.constant 4 : index
    %274 = memref.load %arg1[%c4_271] : memref<98xf32, #tpu.memory_space<smem>>
    %c0_272 = arith.constant 0 : index
    %c4_273 = arith.constant 4 : index
    %c0_274 = arith.constant 0 : index
    %c0_275 = arith.constant 0 : index
    %275 = vector.load %arg6[%c0_272, %c4_273, %c0_274, %c0_275] : memref<2x7x22x16xf32, #tpu.memory_space<vmem>>, vector<1x1x16x16xf32>
    %276 = vector.shape_cast %275 : vector<1x1x16x16xf32> to vector<16x16xf32>
    %277 = vector.broadcast %274 : f32 to vector<16x16xf32>
    %278 = arith.mulf %277, %276 : vector<16x16xf32>
    %279 = arith.addf %273, %278 : vector<16x16xf32>
    %c5_276 = arith.constant 5 : index
    %280 = memref.load %arg1[%c5_276] : memref<98xf32, #tpu.memory_space<smem>>
    %c0_277 = arith.constant 0 : index
    %c5_278 = arith.constant 5 : index
    %c0_279 = arith.constant 0 : index
    %c0_280 = arith.constant 0 : index
    %281 = vector.load %arg6[%c0_277, %c5_278, %c0_279, %c0_280] : memref<2x7x22x16xf32, #tpu.memory_space<vmem>>, vector<1x1x16x16xf32>
    %282 = vector.shape_cast %281 : vector<1x1x16x16xf32> to vector<16x16xf32>
    %283 = vector.broadcast %280 : f32 to vector<16x16xf32>
    %284 = arith.mulf %283, %282 : vector<16x16xf32>
    %285 = arith.addf %279, %284 : vector<16x16xf32>
    %c6_281 = arith.constant 6 : index
    %286 = memref.load %arg1[%c6_281] : memref<98xf32, #tpu.memory_space<smem>>
    %c0_282 = arith.constant 0 : index
    %c6_283 = arith.constant 6 : index
    %c0_284 = arith.constant 0 : index
    %c0_285 = arith.constant 0 : index
    %287 = vector.load %arg6[%c0_282, %c6_283, %c0_284, %c0_285] : memref<2x7x22x16xf32, #tpu.memory_space<vmem>>, vector<1x1x16x16xf32>
    %288 = vector.shape_cast %287 : vector<1x1x16x16xf32> to vector<16x16xf32>
    %289 = vector.broadcast %286 : f32 to vector<16x16xf32>
    %290 = arith.mulf %289, %288 : vector<16x16xf32>
    %291 = arith.addf %285, %290 : vector<16x16xf32>
    %c7_286 = arith.constant 7 : index
    %292 = memref.load %arg1[%c7_286] : memref<98xf32, #tpu.memory_space<smem>>
    %c0_287 = arith.constant 0 : index
    %c0_288 = arith.constant 0 : index
    %c1_289 = arith.constant 1 : index
    %c0_290 = arith.constant 0 : index
    %293 = vector.load %arg6[%c0_287, %c0_288, %c1_289, %c0_290] : memref<2x7x22x16xf32, #tpu.memory_space<vmem>>, vector<1x1x16x16xf32>
    %294 = vector.shape_cast %293 : vector<1x1x16x16xf32> to vector<16x16xf32>
    %295 = vector.broadcast %292 : f32 to vector<16x16xf32>
    %296 = arith.mulf %295, %294 : vector<16x16xf32>
    %297 = arith.addf %247, %296 : vector<16x16xf32>
    %c8_291 = arith.constant 8 : index
    %298 = memref.load %arg1[%c8_291] : memref<98xf32, #tpu.memory_space<smem>>
    %c0_292 = arith.constant 0 : index
    %c1_293 = arith.constant 1 : index
    %c1_294 = arith.constant 1 : index
    %c0_295 = arith.constant 0 : index
    %299 = vector.load %arg6[%c0_292, %c1_293, %c1_294, %c0_295] : memref<2x7x22x16xf32, #tpu.memory_space<vmem>>, vector<1x1x16x16xf32>
    %300 = vector.shape_cast %299 : vector<1x1x16x16xf32> to vector<16x16xf32>
    %301 = vector.broadcast %298 : f32 to vector<16x16xf32>
    %302 = arith.mulf %301, %300 : vector<16x16xf32>
    %303 = arith.addf %297, %302 : vector<16x16xf32>
    %c9_296 = arith.constant 9 : index
    %304 = memref.load %arg1[%c9_296] : memref<98xf32, #tpu.memory_space<smem>>
    %c0_297 = arith.constant 0 : index
    %c2_298 = arith.constant 2 : index
    %c1_299 = arith.constant 1 : index
    %c0_300 = arith.constant 0 : index
    %305 = vector.load %arg6[%c0_297, %c2_298, %c1_299, %c0_300] : memref<2x7x22x16xf32, #tpu.memory_space<vmem>>, vector<1x1x16x16xf32>
    %306 = vector.shape_cast %305 : vector<1x1x16x16xf32> to vector<16x16xf32>
    %307 = vector.broadcast %304 : f32 to vector<16x16xf32>
    %308 = arith.mulf %307, %306 : vector<16x16xf32>
    %309 = arith.addf %303, %308 : vector<16x16xf32>
    %c10_301 = arith.constant 10 : index
    %310 = memref.load %arg1[%c10_301] : memref<98xf32, #tpu.memory_space<smem>>
    %c0_302 = arith.constant 0 : index
    %c3_303 = arith.constant 3 : index
    %c1_304 = arith.constant 1 : index
    %c0_305 = arith.constant 0 : index
    %311 = vector.load %arg6[%c0_302, %c3_303, %c1_304, %c0_305] : memref<2x7x22x16xf32, #tpu.memory_space<vmem>>, vector<1x1x16x16xf32>
    %312 = vector.shape_cast %311 : vector<1x1x16x16xf32> to vector<16x16xf32>
    %313 = vector.broadcast %310 : f32 to vector<16x16xf32>
    %314 = arith.mulf %313, %312 : vector<16x16xf32>
    %315 = arith.addf %309, %314 : vector<16x16xf32>
    %c11_306 = arith.constant 11 : index
    %316 = memref.load %arg1[%c11_306] : memref<98xf32, #tpu.memory_space<smem>>
    %c0_307 = arith.constant 0 : index
    %c4_308 = arith.constant 4 : index
    %c1_309 = arith.constant 1 : index
    %c0_310 = arith.constant 0 : index
    %317 = vector.load %arg6[%c0_307, %c4_308, %c1_309, %c0_310] : memref<2x7x22x16xf32, #tpu.memory_space<vmem>>, vector<1x1x16x16xf32>
    %318 = vector.shape_cast %317 : vector<1x1x16x16xf32> to vector<16x16xf32>
    %319 = vector.broadcast %316 : f32 to vector<16x16xf32>
    %320 = arith.mulf %319, %318 : vector<16x16xf32>
    %321 = arith.addf %315, %320 : vector<16x16xf32>
    %c12_311 = arith.constant 12 : index
    %322 = memref.load %arg1[%c12_311] : memref<98xf32, #tpu.memory_space<smem>>
    %c0_312 = arith.constant 0 : index
    %c5_313 = arith.constant 5 : index
    %c1_314 = arith.constant 1 : index
    %c0_315 = arith.constant 0 : index
    %323 = vector.load %arg6[%c0_312, %c5_313, %c1_314, %c0_315] : memref<2x7x22x16xf32, #tpu.memory_space<vmem>>, vector<1x1x16x16xf32>
    %324 = vector.shape_cast %323 : vector<1x1x16x16xf32> to vector<16x16xf32>
    %325 = vector.broadcast %322 : f32 to vector<16x16xf32>
    %326 = arith.mulf %325, %324 : vector<16x16xf32>
    %327 = arith.addf %321, %326 : vector<16x16xf32>
    %c13_316 = arith.constant 13 : index
    %328 = memref.load %arg1[%c13_316] : memref<98xf32, #tpu.memory_space<smem>>
    %c0_317 = arith.constant 0 : index
    %c6_318 = arith.constant 6 : index
    %c1_319 = arith.constant 1 : index
    %c0_320 = arith.constant 0 : index
    %329 = vector.load %arg6[%c0_317, %c6_318, %c1_319, %c0_320] : memref<2x7x22x16xf32, #tpu.memory_space<vmem>>, vector<1x1x16x16xf32>
    %330 = vector.shape_cast %329 : vector<1x1x16x16xf32> to vector<16x16xf32>
    %331 = vector.broadcast %328 : f32 to vector<16x16xf32>
    %332 = arith.mulf %331, %330 : vector<16x16xf32>
    %333 = arith.addf %327, %332 : vector<16x16xf32>
    %c14_321 = arith.constant 14 : index
    %334 = memref.load %arg1[%c14_321] : memref<98xf32, #tpu.memory_space<smem>>
    %c0_322 = arith.constant 0 : index
    %c0_323 = arith.constant 0 : index
    %c2_324 = arith.constant 2 : index
    %c0_325 = arith.constant 0 : index
    %335 = vector.load %arg6[%c0_322, %c0_323, %c2_324, %c0_325] : memref<2x7x22x16xf32, #tpu.memory_space<vmem>>, vector<1x1x16x16xf32>
    %336 = vector.shape_cast %335 : vector<1x1x16x16xf32> to vector<16x16xf32>
    %337 = vector.broadcast %334 : f32 to vector<16x16xf32>
    %338 = arith.mulf %337, %336 : vector<16x16xf32>
    %339 = arith.addf %291, %338 : vector<16x16xf32>
    %c15_326 = arith.constant 15 : index
    %340 = memref.load %arg1[%c15_326] : memref<98xf32, #tpu.memory_space<smem>>
    %c0_327 = arith.constant 0 : index
    %c1_328 = arith.constant 1 : index
    %c2_329 = arith.constant 2 : index
    %c0_330 = arith.constant 0 : index
    %341 = vector.load %arg6[%c0_327, %c1_328, %c2_329, %c0_330] : memref<2x7x22x16xf32, #tpu.memory_space<vmem>>, vector<1x1x16x16xf32>
    %342 = vector.shape_cast %341 : vector<1x1x16x16xf32> to vector<16x16xf32>
    %343 = vector.broadcast %340 : f32 to vector<16x16xf32>
    %344 = arith.mulf %343, %342 : vector<16x16xf32>
    %345 = arith.addf %339, %344 : vector<16x16xf32>
    %c16_331 = arith.constant 16 : index
    %346 = memref.load %arg1[%c16_331] : memref<98xf32, #tpu.memory_space<smem>>
    %c0_332 = arith.constant 0 : index
    %c2_333 = arith.constant 2 : index
    %c2_334 = arith.constant 2 : index
    %c0_335 = arith.constant 0 : index
    %347 = vector.load %arg6[%c0_332, %c2_333, %c2_334, %c0_335] : memref<2x7x22x16xf32, #tpu.memory_space<vmem>>, vector<1x1x16x16xf32>
    %348 = vector.shape_cast %347 : vector<1x1x16x16xf32> to vector<16x16xf32>
    %349 = vector.broadcast %346 : f32 to vector<16x16xf32>
    %350 = arith.mulf %349, %348 : vector<16x16xf32>
    %351 = arith.addf %345, %350 : vector<16x16xf32>
    %c17_336 = arith.constant 17 : index
    %352 = memref.load %arg1[%c17_336] : memref<98xf32, #tpu.memory_space<smem>>
    %c0_337 = arith.constant 0 : index
    %c3_338 = arith.constant 3 : index
    %c2_339 = arith.constant 2 : index
    %c0_340 = arith.constant 0 : index
    %353 = vector.load %arg6[%c0_337, %c3_338, %c2_339, %c0_340] : memref<2x7x22x16xf32, #tpu.memory_space<vmem>>, vector<1x1x16x16xf32>
    %354 = vector.shape_cast %353 : vector<1x1x16x16xf32> to vector<16x16xf32>
    %355 = vector.broadcast %352 : f32 to vector<16x16xf32>
    %356 = arith.mulf %355, %354 : vector<16x16xf32>
    %357 = arith.addf %351, %356 : vector<16x16xf32>
    %c18_341 = arith.constant 18 : index
    %358 = memref.load %arg1[%c18_341] : memref<98xf32, #tpu.memory_space<smem>>
    %c0_342 = arith.constant 0 : index
    %c4_343 = arith.constant 4 : index
    %c2_344 = arith.constant 2 : index
    %c0_345 = arith.constant 0 : index
    %359 = vector.load %arg6[%c0_342, %c4_343, %c2_344, %c0_345] : memref<2x7x22x16xf32, #tpu.memory_space<vmem>>, vector<1x1x16x16xf32>
    %360 = vector.shape_cast %359 : vector<1x1x16x16xf32> to vector<16x16xf32>
    %361 = vector.broadcast %358 : f32 to vector<16x16xf32>
    %362 = arith.mulf %361, %360 : vector<16x16xf32>
    %363 = arith.addf %357, %362 : vector<16x16xf32>
    %c19_346 = arith.constant 19 : index
    %364 = memref.load %arg1[%c19_346] : memref<98xf32, #tpu.memory_space<smem>>
    %c0_347 = arith.constant 0 : index
    %c5_348 = arith.constant 5 : index
    %c2_349 = arith.constant 2 : index
    %c0_350 = arith.constant 0 : index
    %365 = vector.load %arg6[%c0_347, %c5_348, %c2_349, %c0_350] : memref<2x7x22x16xf32, #tpu.memory_space<vmem>>, vector<1x1x16x16xf32>
    %366 = vector.shape_cast %365 : vector<1x1x16x16xf32> to vector<16x16xf32>
    %367 = vector.broadcast %364 : f32 to vector<16x16xf32>
    %368 = arith.mulf %367, %366 : vector<16x16xf32>
    %369 = arith.addf %363, %368 : vector<16x16xf32>
    %c20 = arith.constant 20 : index
    %370 = memref.load %arg1[%c20] : memref<98xf32, #tpu.memory_space<smem>>
    %c0_351 = arith.constant 0 : index
    %c6_352 = arith.constant 6 : index
    %c2_353 = arith.constant 2 : index
    %c0_354 = arith.constant 0 : index
    %371 = vector.load %arg6[%c0_351, %c6_352, %c2_353, %c0_354] : memref<2x7x22x16xf32, #tpu.memory_space<vmem>>, vector<1x1x16x16xf32>
    %372 = vector.shape_cast %371 : vector<1x1x16x16xf32> to vector<16x16xf32>
    %373 = vector.broadcast %370 : f32 to vector<16x16xf32>
    %374 = arith.mulf %373, %372 : vector<16x16xf32>
    %375 = arith.addf %369, %374 : vector<16x16xf32>
    %c21 = arith.constant 21 : index
    %376 = memref.load %arg1[%c21] : memref<98xf32, #tpu.memory_space<smem>>
    %c0_355 = arith.constant 0 : index
    %c0_356 = arith.constant 0 : index
    %c3_357 = arith.constant 3 : index
    %c0_358 = arith.constant 0 : index
    %377 = vector.load %arg6[%c0_355, %c0_356, %c3_357, %c0_358] : memref<2x7x22x16xf32, #tpu.memory_space<vmem>>, vector<1x1x16x16xf32>
    %378 = vector.shape_cast %377 : vector<1x1x16x16xf32> to vector<16x16xf32>
    %379 = vector.broadcast %376 : f32 to vector<16x16xf32>
    %380 = arith.mulf %379, %378 : vector<16x16xf32>
    %381 = arith.addf %333, %380 : vector<16x16xf32>
    %c22 = arith.constant 22 : index
    %382 = memref.load %arg1[%c22] : memref<98xf32, #tpu.memory_space<smem>>
    %c0_359 = arith.constant 0 : index
    %c1_360 = arith.constant 1 : index
    %c3_361 = arith.constant 3 : index
    %c0_362 = arith.constant 0 : index
    %383 = vector.load %arg6[%c0_359, %c1_360, %c3_361, %c0_362] : memref<2x7x22x16xf32, #tpu.memory_space<vmem>>, vector<1x1x16x16xf32>
    %384 = vector.shape_cast %383 : vector<1x1x16x16xf32> to vector<16x16xf32>
    %385 = vector.broadcast %382 : f32 to vector<16x16xf32>
    %386 = arith.mulf %385, %384 : vector<16x16xf32>
    %387 = arith.addf %381, %386 : vector<16x16xf32>
    %c23 = arith.constant 23 : index
    %388 = memref.load %arg1[%c23] : memref<98xf32, #tpu.memory_space<smem>>
    %c0_363 = arith.constant 0 : index
    %c2_364 = arith.constant 2 : index
    %c3_365 = arith.constant 3 : index
    %c0_366 = arith.constant 0 : index
    %389 = vector.load %arg6[%c0_363, %c2_364, %c3_365, %c0_366] : memref<2x7x22x16xf32, #tpu.memory_space<vmem>>, vector<1x1x16x16xf32>
    %390 = vector.shape_cast %389 : vector<1x1x16x16xf32> to vector<16x16xf32>
    %391 = vector.broadcast %388 : f32 to vector<16x16xf32>
    %392 = arith.mulf %391, %390 : vector<16x16xf32>
    %393 = arith.addf %387, %392 : vector<16x16xf32>
    %c24 = arith.constant 24 : index
    %394 = memref.load %arg1[%c24] : memref<98xf32, #tpu.memory_space<smem>>
    %c0_367 = arith.constant 0 : index
    %c3_368 = arith.constant 3 : index
    %c3_369 = arith.constant 3 : index
    %c0_370 = arith.constant 0 : index
    %395 = vector.load %arg6[%c0_367, %c3_368, %c3_369, %c0_370] : memref<2x7x22x16xf32, #tpu.memory_space<vmem>>, vector<1x1x16x16xf32>
    %396 = vector.shape_cast %395 : vector<1x1x16x16xf32> to vector<16x16xf32>
    %397 = vector.broadcast %394 : f32 to vector<16x16xf32>
    %398 = arith.mulf %397, %396 : vector<16x16xf32>
    %399 = arith.addf %393, %398 : vector<16x16xf32>
    %c25 = arith.constant 25 : index
    %400 = memref.load %arg1[%c25] : memref<98xf32, #tpu.memory_space<smem>>
    %c0_371 = arith.constant 0 : index
    %c4_372 = arith.constant 4 : index
    %c3_373 = arith.constant 3 : index
    %c0_374 = arith.constant 0 : index
    %401 = vector.load %arg6[%c0_371, %c4_372, %c3_373, %c0_374] : memref<2x7x22x16xf32, #tpu.memory_space<vmem>>, vector<1x1x16x16xf32>
    %402 = vector.shape_cast %401 : vector<1x1x16x16xf32> to vector<16x16xf32>
    %403 = vector.broadcast %400 : f32 to vector<16x16xf32>
    %404 = arith.mulf %403, %402 : vector<16x16xf32>
    %405 = arith.addf %399, %404 : vector<16x16xf32>
    %c26 = arith.constant 26 : index
    %406 = memref.load %arg1[%c26] : memref<98xf32, #tpu.memory_space<smem>>
    %c0_375 = arith.constant 0 : index
    %c5_376 = arith.constant 5 : index
    %c3_377 = arith.constant 3 : index
    %c0_378 = arith.constant 0 : index
    %407 = vector.load %arg6[%c0_375, %c5_376, %c3_377, %c0_378] : memref<2x7x22x16xf32, #tpu.memory_space<vmem>>, vector<1x1x16x16xf32>
    %408 = vector.shape_cast %407 : vector<1x1x16x16xf32> to vector<16x16xf32>
    %409 = vector.broadcast %406 : f32 to vector<16x16xf32>
    %410 = arith.mulf %409, %408 : vector<16x16xf32>
    %411 = arith.addf %405, %410 : vector<16x16xf32>
    %c27 = arith.constant 27 : index
    %412 = memref.load %arg1[%c27] : memref<98xf32, #tpu.memory_space<smem>>
    %c0_379 = arith.constant 0 : index
    %c6_380 = arith.constant 6 : index
    %c3_381 = arith.constant 3 : index
    %c0_382 = arith.constant 0 : index
    %413 = vector.load %arg6[%c0_379, %c6_380, %c3_381, %c0_382] : memref<2x7x22x16xf32, #tpu.memory_space<vmem>>, vector<1x1x16x16xf32>
    %414 = vector.shape_cast %413 : vector<1x1x16x16xf32> to vector<16x16xf32>
    %415 = vector.broadcast %412 : f32 to vector<16x16xf32>
    %416 = arith.mulf %415, %414 : vector<16x16xf32>
    %417 = arith.addf %411, %416 : vector<16x16xf32>
    %c28 = arith.constant 28 : index
    %418 = memref.load %arg1[%c28] : memref<98xf32, #tpu.memory_space<smem>>
    %c0_383 = arith.constant 0 : index
    %c0_384 = arith.constant 0 : index
    %c4_385 = arith.constant 4 : index
    %c0_386 = arith.constant 0 : index
    %419 = vector.load %arg6[%c0_383, %c0_384, %c4_385, %c0_386] : memref<2x7x22x16xf32, #tpu.memory_space<vmem>>, vector<1x1x16x16xf32>
    %420 = vector.shape_cast %419 : vector<1x1x16x16xf32> to vector<16x16xf32>
    %421 = vector.broadcast %418 : f32 to vector<16x16xf32>
    %422 = arith.mulf %421, %420 : vector<16x16xf32>
    %423 = arith.addf %375, %422 : vector<16x16xf32>
    %c29 = arith.constant 29 : index
    %424 = memref.load %arg1[%c29] : memref<98xf32, #tpu.memory_space<smem>>
    %c0_387 = arith.constant 0 : index
    %c1_388 = arith.constant 1 : index
    %c4_389 = arith.constant 4 : index
    %c0_390 = arith.constant 0 : index
    %425 = vector.load %arg6[%c0_387, %c1_388, %c4_389, %c0_390] : memref<2x7x22x16xf32, #tpu.memory_space<vmem>>, vector<1x1x16x16xf32>
    %426 = vector.shape_cast %425 : vector<1x1x16x16xf32> to vector<16x16xf32>
    %427 = vector.broadcast %424 : f32 to vector<16x16xf32>
    %428 = arith.mulf %427, %426 : vector<16x16xf32>
    %429 = arith.addf %423, %428 : vector<16x16xf32>
    %c30 = arith.constant 30 : index
    %430 = memref.load %arg1[%c30] : memref<98xf32, #tpu.memory_space<smem>>
    %c0_391 = arith.constant 0 : index
    %c2_392 = arith.constant 2 : index
    %c4_393 = arith.constant 4 : index
    %c0_394 = arith.constant 0 : index
    %431 = vector.load %arg6[%c0_391, %c2_392, %c4_393, %c0_394] : memref<2x7x22x16xf32, #tpu.memory_space<vmem>>, vector<1x1x16x16xf32>
    %432 = vector.shape_cast %431 : vector<1x1x16x16xf32> to vector<16x16xf32>
    %433 = vector.broadcast %430 : f32 to vector<16x16xf32>
    %434 = arith.mulf %433, %432 : vector<16x16xf32>
    %435 = arith.addf %429, %434 : vector<16x16xf32>
    %c31 = arith.constant 31 : index
    %436 = memref.load %arg1[%c31] : memref<98xf32, #tpu.memory_space<smem>>
    %c0_395 = arith.constant 0 : index
    %c3_396 = arith.constant 3 : index
    %c4_397 = arith.constant 4 : index
    %c0_398 = arith.constant 0 : index
    %437 = vector.load %arg6[%c0_395, %c3_396, %c4_397, %c0_398] : memref<2x7x22x16xf32, #tpu.memory_space<vmem>>, vector<1x1x16x16xf32>
    %438 = vector.shape_cast %437 : vector<1x1x16x16xf32> to vector<16x16xf32>
    %439 = vector.broadcast %436 : f32 to vector<16x16xf32>
    %440 = arith.mulf %439, %438 : vector<16x16xf32>
    %441 = arith.addf %435, %440 : vector<16x16xf32>
    %c32_399 = arith.constant 32 : index
    %442 = memref.load %arg1[%c32_399] : memref<98xf32, #tpu.memory_space<smem>>
    %c0_400 = arith.constant 0 : index
    %c4_401 = arith.constant 4 : index
    %c4_402 = arith.constant 4 : index
    %c0_403 = arith.constant 0 : index
    %443 = vector.load %arg6[%c0_400, %c4_401, %c4_402, %c0_403] : memref<2x7x22x16xf32, #tpu.memory_space<vmem>>, vector<1x1x16x16xf32>
    %444 = vector.shape_cast %443 : vector<1x1x16x16xf32> to vector<16x16xf32>
    %445 = vector.broadcast %442 : f32 to vector<16x16xf32>
    %446 = arith.mulf %445, %444 : vector<16x16xf32>
    %447 = arith.addf %441, %446 : vector<16x16xf32>
    %c33 = arith.constant 33 : index
    %448 = memref.load %arg1[%c33] : memref<98xf32, #tpu.memory_space<smem>>
    %c0_404 = arith.constant 0 : index
    %c5_405 = arith.constant 5 : index
    %c4_406 = arith.constant 4 : index
    %c0_407 = arith.constant 0 : index
    %449 = vector.load %arg6[%c0_404, %c5_405, %c4_406, %c0_407] : memref<2x7x22x16xf32, #tpu.memory_space<vmem>>, vector<1x1x16x16xf32>
    %450 = vector.shape_cast %449 : vector<1x1x16x16xf32> to vector<16x16xf32>
    %451 = vector.broadcast %448 : f32 to vector<16x16xf32>
    %452 = arith.mulf %451, %450 : vector<16x16xf32>
    %453 = arith.addf %447, %452 : vector<16x16xf32>
    %c34 = arith.constant 34 : index
    %454 = memref.load %arg1[%c34] : memref<98xf32, #tpu.memory_space<smem>>
    %c0_408 = arith.constant 0 : index
    %c6_409 = arith.constant 6 : index
    %c4_410 = arith.constant 4 : index
    %c0_411 = arith.constant 0 : index
    %455 = vector.load %arg6[%c0_408, %c6_409, %c4_410, %c0_411] : memref<2x7x22x16xf32, #tpu.memory_space<vmem>>, vector<1x1x16x16xf32>
    %456 = vector.shape_cast %455 : vector<1x1x16x16xf32> to vector<16x16xf32>
    %457 = vector.broadcast %454 : f32 to vector<16x16xf32>
    %458 = arith.mulf %457, %456 : vector<16x16xf32>
    %459 = arith.addf %453, %458 : vector<16x16xf32>
    %c35 = arith.constant 35 : index
    %460 = memref.load %arg1[%c35] : memref<98xf32, #tpu.memory_space<smem>>
    %c0_412 = arith.constant 0 : index
    %c0_413 = arith.constant 0 : index
    %c5_414 = arith.constant 5 : index
    %c0_415 = arith.constant 0 : index
    %461 = vector.load %arg6[%c0_412, %c0_413, %c5_414, %c0_415] : memref<2x7x22x16xf32, #tpu.memory_space<vmem>>, vector<1x1x16x16xf32>
    %462 = vector.shape_cast %461 : vector<1x1x16x16xf32> to vector<16x16xf32>
    %463 = vector.broadcast %460 : f32 to vector<16x16xf32>
    %464 = arith.mulf %463, %462 : vector<16x16xf32>
    %465 = arith.addf %417, %464 : vector<16x16xf32>
    %c36 = arith.constant 36 : index
    %466 = memref.load %arg1[%c36] : memref<98xf32, #tpu.memory_space<smem>>
    %c0_416 = arith.constant 0 : index
    %c1_417 = arith.constant 1 : index
    %c5_418 = arith.constant 5 : index
    %c0_419 = arith.constant 0 : index
    %467 = vector.load %arg6[%c0_416, %c1_417, %c5_418, %c0_419] : memref<2x7x22x16xf32, #tpu.memory_space<vmem>>, vector<1x1x16x16xf32>
    %468 = vector.shape_cast %467 : vector<1x1x16x16xf32> to vector<16x16xf32>
    %469 = vector.broadcast %466 : f32 to vector<16x16xf32>
    %470 = arith.mulf %469, %468 : vector<16x16xf32>
    %471 = arith.addf %465, %470 : vector<16x16xf32>
    %c37 = arith.constant 37 : index
    %472 = memref.load %arg1[%c37] : memref<98xf32, #tpu.memory_space<smem>>
    %c0_420 = arith.constant 0 : index
    %c2_421 = arith.constant 2 : index
    %c5_422 = arith.constant 5 : index
    %c0_423 = arith.constant 0 : index
    %473 = vector.load %arg6[%c0_420, %c2_421, %c5_422, %c0_423] : memref<2x7x22x16xf32, #tpu.memory_space<vmem>>, vector<1x1x16x16xf32>
    %474 = vector.shape_cast %473 : vector<1x1x16x16xf32> to vector<16x16xf32>
    %475 = vector.broadcast %472 : f32 to vector<16x16xf32>
    %476 = arith.mulf %475, %474 : vector<16x16xf32>
    %477 = arith.addf %471, %476 : vector<16x16xf32>
    %c38 = arith.constant 38 : index
    %478 = memref.load %arg1[%c38] : memref<98xf32, #tpu.memory_space<smem>>
    %c0_424 = arith.constant 0 : index
    %c3_425 = arith.constant 3 : index
    %c5_426 = arith.constant 5 : index
    %c0_427 = arith.constant 0 : index
    %479 = vector.load %arg6[%c0_424, %c3_425, %c5_426, %c0_427] : memref<2x7x22x16xf32, #tpu.memory_space<vmem>>, vector<1x1x16x16xf32>
    %480 = vector.shape_cast %479 : vector<1x1x16x16xf32> to vector<16x16xf32>
    %481 = vector.broadcast %478 : f32 to vector<16x16xf32>
    %482 = arith.mulf %481, %480 : vector<16x16xf32>
    %483 = arith.addf %477, %482 : vector<16x16xf32>
    %c39 = arith.constant 39 : index
    %484 = memref.load %arg1[%c39] : memref<98xf32, #tpu.memory_space<smem>>
    %c0_428 = arith.constant 0 : index
    %c4_429 = arith.constant 4 : index
    %c5_430 = arith.constant 5 : index
    %c0_431 = arith.constant 0 : index
    %485 = vector.load %arg6[%c0_428, %c4_429, %c5_430, %c0_431] : memref<2x7x22x16xf32, #tpu.memory_space<vmem>>, vector<1x1x16x16xf32>
    %486 = vector.shape_cast %485 : vector<1x1x16x16xf32> to vector<16x16xf32>
    %487 = vector.broadcast %484 : f32 to vector<16x16xf32>
    %488 = arith.mulf %487, %486 : vector<16x16xf32>
    %489 = arith.addf %483, %488 : vector<16x16xf32>
    %c40 = arith.constant 40 : index
    %490 = memref.load %arg1[%c40] : memref<98xf32, #tpu.memory_space<smem>>
    %c0_432 = arith.constant 0 : index
    %c5_433 = arith.constant 5 : index
    %c5_434 = arith.constant 5 : index
    %c0_435 = arith.constant 0 : index
    %491 = vector.load %arg6[%c0_432, %c5_433, %c5_434, %c0_435] : memref<2x7x22x16xf32, #tpu.memory_space<vmem>>, vector<1x1x16x16xf32>
    %492 = vector.shape_cast %491 : vector<1x1x16x16xf32> to vector<16x16xf32>
    %493 = vector.broadcast %490 : f32 to vector<16x16xf32>
    %494 = arith.mulf %493, %492 : vector<16x16xf32>
    %495 = arith.addf %489, %494 : vector<16x16xf32>
    %c41 = arith.constant 41 : index
    %496 = memref.load %arg1[%c41] : memref<98xf32, #tpu.memory_space<smem>>
    %c0_436 = arith.constant 0 : index
    %c6_437 = arith.constant 6 : index
    %c5_438 = arith.constant 5 : index
    %c0_439 = arith.constant 0 : index
    %497 = vector.load %arg6[%c0_436, %c6_437, %c5_438, %c0_439] : memref<2x7x22x16xf32, #tpu.memory_space<vmem>>, vector<1x1x16x16xf32>
    %498 = vector.shape_cast %497 : vector<1x1x16x16xf32> to vector<16x16xf32>
    %499 = vector.broadcast %496 : f32 to vector<16x16xf32>
    %500 = arith.mulf %499, %498 : vector<16x16xf32>
    %501 = arith.addf %495, %500 : vector<16x16xf32>
    %c42 = arith.constant 42 : index
    %502 = memref.load %arg1[%c42] : memref<98xf32, #tpu.memory_space<smem>>
    %c0_440 = arith.constant 0 : index
    %c0_441 = arith.constant 0 : index
    %c6_442 = arith.constant 6 : index
    %c0_443 = arith.constant 0 : index
    %503 = vector.load %arg6[%c0_440, %c0_441, %c6_442, %c0_443] : memref<2x7x22x16xf32, #tpu.memory_space<vmem>>, vector<1x1x16x16xf32>
    %504 = vector.shape_cast %503 : vector<1x1x16x16xf32> to vector<16x16xf32>
    %505 = vector.broadcast %502 : f32 to vector<16x16xf32>
    %506 = arith.mulf %505, %504 : vector<16x16xf32>
    %507 = arith.addf %459, %506 : vector<16x16xf32>
    %c43 = arith.constant 43 : index
    %508 = memref.load %arg1[%c43] : memref<98xf32, #tpu.memory_space<smem>>
    %c0_444 = arith.constant 0 : index
    %c1_445 = arith.constant 1 : index
    %c6_446 = arith.constant 6 : index
    %c0_447 = arith.constant 0 : index
    %509 = vector.load %arg6[%c0_444, %c1_445, %c6_446, %c0_447] : memref<2x7x22x16xf32, #tpu.memory_space<vmem>>, vector<1x1x16x16xf32>
    %510 = vector.shape_cast %509 : vector<1x1x16x16xf32> to vector<16x16xf32>
    %511 = vector.broadcast %508 : f32 to vector<16x16xf32>
    %512 = arith.mulf %511, %510 : vector<16x16xf32>
    %513 = arith.addf %507, %512 : vector<16x16xf32>
    %c44 = arith.constant 44 : index
    %514 = memref.load %arg1[%c44] : memref<98xf32, #tpu.memory_space<smem>>
    %c0_448 = arith.constant 0 : index
    %c2_449 = arith.constant 2 : index
    %c6_450 = arith.constant 6 : index
    %c0_451 = arith.constant 0 : index
    %515 = vector.load %arg6[%c0_448, %c2_449, %c6_450, %c0_451] : memref<2x7x22x16xf32, #tpu.memory_space<vmem>>, vector<1x1x16x16xf32>
    %516 = vector.shape_cast %515 : vector<1x1x16x16xf32> to vector<16x16xf32>
    %517 = vector.broadcast %514 : f32 to vector<16x16xf32>
    %518 = arith.mulf %517, %516 : vector<16x16xf32>
    %519 = arith.addf %513, %518 : vector<16x16xf32>
    %c45 = arith.constant 45 : index
    %520 = memref.load %arg1[%c45] : memref<98xf32, #tpu.memory_space<smem>>
    %c0_452 = arith.constant 0 : index
    %c3_453 = arith.constant 3 : index
    %c6_454 = arith.constant 6 : index
    %c0_455 = arith.constant 0 : index
    %521 = vector.load %arg6[%c0_452, %c3_453, %c6_454, %c0_455] : memref<2x7x22x16xf32, #tpu.memory_space<vmem>>, vector<1x1x16x16xf32>
    %522 = vector.shape_cast %521 : vector<1x1x16x16xf32> to vector<16x16xf32>
    %523 = vector.broadcast %520 : f32 to vector<16x16xf32>
    %524 = arith.mulf %523, %522 : vector<16x16xf32>
    %525 = arith.addf %519, %524 : vector<16x16xf32>
    %c46 = arith.constant 46 : index
    %526 = memref.load %arg1[%c46] : memref<98xf32, #tpu.memory_space<smem>>
    %c0_456 = arith.constant 0 : index
    %c4_457 = arith.constant 4 : index
    %c6_458 = arith.constant 6 : index
    %c0_459 = arith.constant 0 : index
    %527 = vector.load %arg6[%c0_456, %c4_457, %c6_458, %c0_459] : memref<2x7x22x16xf32, #tpu.memory_space<vmem>>, vector<1x1x16x16xf32>
    %528 = vector.shape_cast %527 : vector<1x1x16x16xf32> to vector<16x16xf32>
    %529 = vector.broadcast %526 : f32 to vector<16x16xf32>
    %530 = arith.mulf %529, %528 : vector<16x16xf32>
    %531 = arith.addf %525, %530 : vector<16x16xf32>
    %c47 = arith.constant 47 : index
    %532 = memref.load %arg1[%c47] : memref<98xf32, #tpu.memory_space<smem>>
    %c0_460 = arith.constant 0 : index
    %c5_461 = arith.constant 5 : index
    %c6_462 = arith.constant 6 : index
    %c0_463 = arith.constant 0 : index
    %533 = vector.load %arg6[%c0_460, %c5_461, %c6_462, %c0_463] : memref<2x7x22x16xf32, #tpu.memory_space<vmem>>, vector<1x1x16x16xf32>
    %534 = vector.shape_cast %533 : vector<1x1x16x16xf32> to vector<16x16xf32>
    %535 = vector.broadcast %532 : f32 to vector<16x16xf32>
    %536 = arith.mulf %535, %534 : vector<16x16xf32>
    %537 = arith.addf %531, %536 : vector<16x16xf32>
    %c48_464 = arith.constant 48 : index
    %538 = memref.load %arg1[%c48_464] : memref<98xf32, #tpu.memory_space<smem>>
    %c0_465 = arith.constant 0 : index
    %c6_466 = arith.constant 6 : index
    %c6_467 = arith.constant 6 : index
    %c0_468 = arith.constant 0 : index
    %539 = vector.load %arg6[%c0_465, %c6_466, %c6_467, %c0_468] : memref<2x7x22x16xf32, #tpu.memory_space<vmem>>, vector<1x1x16x16xf32>
    %540 = vector.shape_cast %539 : vector<1x1x16x16xf32> to vector<16x16xf32>
    %541 = vector.broadcast %538 : f32 to vector<16x16xf32>
    %542 = arith.mulf %541, %540 : vector<16x16xf32>
    %543 = arith.addf %537, %542 : vector<16x16xf32>
    %c49 = arith.constant 49 : index
    %544 = memref.load %arg1[%c49] : memref<98xf32, #tpu.memory_space<smem>>
    %c1_469 = arith.constant 1 : index
    %c0_470 = arith.constant 0 : index
    %c0_471 = arith.constant 0 : index
    %c0_472 = arith.constant 0 : index
    %545 = vector.load %arg6[%c1_469, %c0_470, %c0_471, %c0_472] : memref<2x7x22x16xf32, #tpu.memory_space<vmem>>, vector<1x1x16x16xf32>
    %546 = vector.shape_cast %545 : vector<1x1x16x16xf32> to vector<16x16xf32>
    %547 = vector.broadcast %544 : f32 to vector<16x16xf32>
    %548 = arith.mulf %547, %546 : vector<16x16xf32>
    %549 = arith.addf %248, %548 : vector<16x16xf32>
    %c50 = arith.constant 50 : index
    %550 = memref.load %arg1[%c50] : memref<98xf32, #tpu.memory_space<smem>>
    %c1_473 = arith.constant 1 : index
    %c1_474 = arith.constant 1 : index
    %c0_475 = arith.constant 0 : index
    %c0_476 = arith.constant 0 : index
    %551 = vector.load %arg6[%c1_473, %c1_474, %c0_475, %c0_476] : memref<2x7x22x16xf32, #tpu.memory_space<vmem>>, vector<1x1x16x16xf32>
    %552 = vector.shape_cast %551 : vector<1x1x16x16xf32> to vector<16x16xf32>
    %553 = vector.broadcast %550 : f32 to vector<16x16xf32>
    %554 = arith.mulf %553, %552 : vector<16x16xf32>
    %555 = arith.addf %549, %554 : vector<16x16xf32>
    %c51 = arith.constant 51 : index
    %556 = memref.load %arg1[%c51] : memref<98xf32, #tpu.memory_space<smem>>
    %c1_477 = arith.constant 1 : index
    %c2_478 = arith.constant 2 : index
    %c0_479 = arith.constant 0 : index
    %c0_480 = arith.constant 0 : index
    %557 = vector.load %arg6[%c1_477, %c2_478, %c0_479, %c0_480] : memref<2x7x22x16xf32, #tpu.memory_space<vmem>>, vector<1x1x16x16xf32>
    %558 = vector.shape_cast %557 : vector<1x1x16x16xf32> to vector<16x16xf32>
    %559 = vector.broadcast %556 : f32 to vector<16x16xf32>
    %560 = arith.mulf %559, %558 : vector<16x16xf32>
    %561 = arith.addf %555, %560 : vector<16x16xf32>
    %c52 = arith.constant 52 : index
    %562 = memref.load %arg1[%c52] : memref<98xf32, #tpu.memory_space<smem>>
    %c1_481 = arith.constant 1 : index
    %c3_482 = arith.constant 3 : index
    %c0_483 = arith.constant 0 : index
    %c0_484 = arith.constant 0 : index
    %563 = vector.load %arg6[%c1_481, %c3_482, %c0_483, %c0_484] : memref<2x7x22x16xf32, #tpu.memory_space<vmem>>, vector<1x1x16x16xf32>
    %564 = vector.shape_cast %563 : vector<1x1x16x16xf32> to vector<16x16xf32>
    %565 = vector.broadcast %562 : f32 to vector<16x16xf32>
    %566 = arith.mulf %565, %564 : vector<16x16xf32>
    %567 = arith.addf %561, %566 : vector<16x16xf32>
    %c53 = arith.constant 53 : index
    %568 = memref.load %arg1[%c53] : memref<98xf32, #tpu.memory_space<smem>>
    %c1_485 = arith.constant 1 : index
    %c4_486 = arith.constant 4 : index
    %c0_487 = arith.constant 0 : index
    %c0_488 = arith.constant 0 : index
    %569 = vector.load %arg6[%c1_485, %c4_486, %c0_487, %c0_488] : memref<2x7x22x16xf32, #tpu.memory_space<vmem>>, vector<1x1x16x16xf32>
    %570 = vector.shape_cast %569 : vector<1x1x16x16xf32> to vector<16x16xf32>
    %571 = vector.broadcast %568 : f32 to vector<16x16xf32>
    %572 = arith.mulf %571, %570 : vector<16x16xf32>
    %573 = arith.addf %567, %572 : vector<16x16xf32>
    %c54 = arith.constant 54 : index
    %574 = memref.load %arg1[%c54] : memref<98xf32, #tpu.memory_space<smem>>
    %c1_489 = arith.constant 1 : index
    %c5_490 = arith.constant 5 : index
    %c0_491 = arith.constant 0 : index
    %c0_492 = arith.constant 0 : index
    %575 = vector.load %arg6[%c1_489, %c5_490, %c0_491, %c0_492] : memref<2x7x22x16xf32, #tpu.memory_space<vmem>>, vector<1x1x16x16xf32>
    %576 = vector.shape_cast %575 : vector<1x1x16x16xf32> to vector<16x16xf32>
    %577 = vector.broadcast %574 : f32 to vector<16x16xf32>
    %578 = arith.mulf %577, %576 : vector<16x16xf32>
    %579 = arith.addf %573, %578 : vector<16x16xf32>
    %c55 = arith.constant 55 : index
    %580 = memref.load %arg1[%c55] : memref<98xf32, #tpu.memory_space<smem>>
    %c1_493 = arith.constant 1 : index
    %c6_494 = arith.constant 6 : index
    %c0_495 = arith.constant 0 : index
    %c0_496 = arith.constant 0 : index
    %581 = vector.load %arg6[%c1_493, %c6_494, %c0_495, %c0_496] : memref<2x7x22x16xf32, #tpu.memory_space<vmem>>, vector<1x1x16x16xf32>
    %582 = vector.shape_cast %581 : vector<1x1x16x16xf32> to vector<16x16xf32>
    %583 = vector.broadcast %580 : f32 to vector<16x16xf32>
    %584 = arith.mulf %583, %582 : vector<16x16xf32>
    %585 = arith.addf %579, %584 : vector<16x16xf32>
    %c56 = arith.constant 56 : index
    %586 = memref.load %arg1[%c56] : memref<98xf32, #tpu.memory_space<smem>>
    %c1_497 = arith.constant 1 : index
    %c0_498 = arith.constant 0 : index
    %c1_499 = arith.constant 1 : index
    %c0_500 = arith.constant 0 : index
    %587 = vector.load %arg6[%c1_497, %c0_498, %c1_499, %c0_500] : memref<2x7x22x16xf32, #tpu.memory_space<vmem>>, vector<1x1x16x16xf32>
    %588 = vector.shape_cast %587 : vector<1x1x16x16xf32> to vector<16x16xf32>
    %589 = vector.broadcast %586 : f32 to vector<16x16xf32>
    %590 = arith.mulf %589, %588 : vector<16x16xf32>
    %591 = arith.addf %249, %590 : vector<16x16xf32>
    %c57 = arith.constant 57 : index
    %592 = memref.load %arg1[%c57] : memref<98xf32, #tpu.memory_space<smem>>
    %c1_501 = arith.constant 1 : index
    %c1_502 = arith.constant 1 : index
    %c1_503 = arith.constant 1 : index
    %c0_504 = arith.constant 0 : index
    %593 = vector.load %arg6[%c1_501, %c1_502, %c1_503, %c0_504] : memref<2x7x22x16xf32, #tpu.memory_space<vmem>>, vector<1x1x16x16xf32>
    %594 = vector.shape_cast %593 : vector<1x1x16x16xf32> to vector<16x16xf32>
    %595 = vector.broadcast %592 : f32 to vector<16x16xf32>
    %596 = arith.mulf %595, %594 : vector<16x16xf32>
    %597 = arith.addf %591, %596 : vector<16x16xf32>
    %c58 = arith.constant 58 : index
    %598 = memref.load %arg1[%c58] : memref<98xf32, #tpu.memory_space<smem>>
    %c1_505 = arith.constant 1 : index
    %c2_506 = arith.constant 2 : index
    %c1_507 = arith.constant 1 : index
    %c0_508 = arith.constant 0 : index
    %599 = vector.load %arg6[%c1_505, %c2_506, %c1_507, %c0_508] : memref<2x7x22x16xf32, #tpu.memory_space<vmem>>, vector<1x1x16x16xf32>
    %600 = vector.shape_cast %599 : vector<1x1x16x16xf32> to vector<16x16xf32>
    %601 = vector.broadcast %598 : f32 to vector<16x16xf32>
    %602 = arith.mulf %601, %600 : vector<16x16xf32>
    %603 = arith.addf %597, %602 : vector<16x16xf32>
    %c59 = arith.constant 59 : index
    %604 = memref.load %arg1[%c59] : memref<98xf32, #tpu.memory_space<smem>>
    %c1_509 = arith.constant 1 : index
    %c3_510 = arith.constant 3 : index
    %c1_511 = arith.constant 1 : index
    %c0_512 = arith.constant 0 : index
    %605 = vector.load %arg6[%c1_509, %c3_510, %c1_511, %c0_512] : memref<2x7x22x16xf32, #tpu.memory_space<vmem>>, vector<1x1x16x16xf32>
    %606 = vector.shape_cast %605 : vector<1x1x16x16xf32> to vector<16x16xf32>
    %607 = vector.broadcast %604 : f32 to vector<16x16xf32>
    %608 = arith.mulf %607, %606 : vector<16x16xf32>
    %609 = arith.addf %603, %608 : vector<16x16xf32>
    %c60 = arith.constant 60 : index
    %610 = memref.load %arg1[%c60] : memref<98xf32, #tpu.memory_space<smem>>
    %c1_513 = arith.constant 1 : index
    %c4_514 = arith.constant 4 : index
    %c1_515 = arith.constant 1 : index
    %c0_516 = arith.constant 0 : index
    %611 = vector.load %arg6[%c1_513, %c4_514, %c1_515, %c0_516] : memref<2x7x22x16xf32, #tpu.memory_space<vmem>>, vector<1x1x16x16xf32>
    %612 = vector.shape_cast %611 : vector<1x1x16x16xf32> to vector<16x16xf32>
    %613 = vector.broadcast %610 : f32 to vector<16x16xf32>
    %614 = arith.mulf %613, %612 : vector<16x16xf32>
    %615 = arith.addf %609, %614 : vector<16x16xf32>
    %c61 = arith.constant 61 : index
    %616 = memref.load %arg1[%c61] : memref<98xf32, #tpu.memory_space<smem>>
    %c1_517 = arith.constant 1 : index
    %c5_518 = arith.constant 5 : index
    %c1_519 = arith.constant 1 : index
    %c0_520 = arith.constant 0 : index
    %617 = vector.load %arg6[%c1_517, %c5_518, %c1_519, %c0_520] : memref<2x7x22x16xf32, #tpu.memory_space<vmem>>, vector<1x1x16x16xf32>
    %618 = vector.shape_cast %617 : vector<1x1x16x16xf32> to vector<16x16xf32>
    %619 = vector.broadcast %616 : f32 to vector<16x16xf32>
    %620 = arith.mulf %619, %618 : vector<16x16xf32>
    %621 = arith.addf %615, %620 : vector<16x16xf32>
    %c62 = arith.constant 62 : index
    %622 = memref.load %arg1[%c62] : memref<98xf32, #tpu.memory_space<smem>>
    %c1_521 = arith.constant 1 : index
    %c6_522 = arith.constant 6 : index
    %c1_523 = arith.constant 1 : index
    %c0_524 = arith.constant 0 : index
    %623 = vector.load %arg6[%c1_521, %c6_522, %c1_523, %c0_524] : memref<2x7x22x16xf32, #tpu.memory_space<vmem>>, vector<1x1x16x16xf32>
    %624 = vector.shape_cast %623 : vector<1x1x16x16xf32> to vector<16x16xf32>
    %625 = vector.broadcast %622 : f32 to vector<16x16xf32>
    %626 = arith.mulf %625, %624 : vector<16x16xf32>
    %627 = arith.addf %621, %626 : vector<16x16xf32>
    %c63 = arith.constant 63 : index
    %628 = memref.load %arg1[%c63] : memref<98xf32, #tpu.memory_space<smem>>
    %c1_525 = arith.constant 1 : index
    %c0_526 = arith.constant 0 : index
    %c2_527 = arith.constant 2 : index
    %c0_528 = arith.constant 0 : index
    %629 = vector.load %arg6[%c1_525, %c0_526, %c2_527, %c0_528] : memref<2x7x22x16xf32, #tpu.memory_space<vmem>>, vector<1x1x16x16xf32>
    %630 = vector.shape_cast %629 : vector<1x1x16x16xf32> to vector<16x16xf32>
    %631 = vector.broadcast %628 : f32 to vector<16x16xf32>
    %632 = arith.mulf %631, %630 : vector<16x16xf32>
    %633 = arith.addf %585, %632 : vector<16x16xf32>
    %c64_529 = arith.constant 64 : index
    %634 = memref.load %arg1[%c64_529] : memref<98xf32, #tpu.memory_space<smem>>
    %c1_530 = arith.constant 1 : index
    %c1_531 = arith.constant 1 : index
    %c2_532 = arith.constant 2 : index
    %c0_533 = arith.constant 0 : index
    %635 = vector.load %arg6[%c1_530, %c1_531, %c2_532, %c0_533] : memref<2x7x22x16xf32, #tpu.memory_space<vmem>>, vector<1x1x16x16xf32>
    %636 = vector.shape_cast %635 : vector<1x1x16x16xf32> to vector<16x16xf32>
    %637 = vector.broadcast %634 : f32 to vector<16x16xf32>
    %638 = arith.mulf %637, %636 : vector<16x16xf32>
    %639 = arith.addf %633, %638 : vector<16x16xf32>
    %c65 = arith.constant 65 : index
    %640 = memref.load %arg1[%c65] : memref<98xf32, #tpu.memory_space<smem>>
    %c1_534 = arith.constant 1 : index
    %c2_535 = arith.constant 2 : index
    %c2_536 = arith.constant 2 : index
    %c0_537 = arith.constant 0 : index
    %641 = vector.load %arg6[%c1_534, %c2_535, %c2_536, %c0_537] : memref<2x7x22x16xf32, #tpu.memory_space<vmem>>, vector<1x1x16x16xf32>
    %642 = vector.shape_cast %641 : vector<1x1x16x16xf32> to vector<16x16xf32>
    %643 = vector.broadcast %640 : f32 to vector<16x16xf32>
    %644 = arith.mulf %643, %642 : vector<16x16xf32>
    %645 = arith.addf %639, %644 : vector<16x16xf32>
    %c66 = arith.constant 66 : index
    %646 = memref.load %arg1[%c66] : memref<98xf32, #tpu.memory_space<smem>>
    %c1_538 = arith.constant 1 : index
    %c3_539 = arith.constant 3 : index
    %c2_540 = arith.constant 2 : index
    %c0_541 = arith.constant 0 : index
    %647 = vector.load %arg6[%c1_538, %c3_539, %c2_540, %c0_541] : memref<2x7x22x16xf32, #tpu.memory_space<vmem>>, vector<1x1x16x16xf32>
    %648 = vector.shape_cast %647 : vector<1x1x16x16xf32> to vector<16x16xf32>
    %649 = vector.broadcast %646 : f32 to vector<16x16xf32>
    %650 = arith.mulf %649, %648 : vector<16x16xf32>
    %651 = arith.addf %645, %650 : vector<16x16xf32>
    %c67 = arith.constant 67 : index
    %652 = memref.load %arg1[%c67] : memref<98xf32, #tpu.memory_space<smem>>
    %c1_542 = arith.constant 1 : index
    %c4_543 = arith.constant 4 : index
    %c2_544 = arith.constant 2 : index
    %c0_545 = arith.constant 0 : index
    %653 = vector.load %arg6[%c1_542, %c4_543, %c2_544, %c0_545] : memref<2x7x22x16xf32, #tpu.memory_space<vmem>>, vector<1x1x16x16xf32>
    %654 = vector.shape_cast %653 : vector<1x1x16x16xf32> to vector<16x16xf32>
    %655 = vector.broadcast %652 : f32 to vector<16x16xf32>
    %656 = arith.mulf %655, %654 : vector<16x16xf32>
    %657 = arith.addf %651, %656 : vector<16x16xf32>
    %c68 = arith.constant 68 : index
    %658 = memref.load %arg1[%c68] : memref<98xf32, #tpu.memory_space<smem>>
    %c1_546 = arith.constant 1 : index
    %c5_547 = arith.constant 5 : index
    %c2_548 = arith.constant 2 : index
    %c0_549 = arith.constant 0 : index
    %659 = vector.load %arg6[%c1_546, %c5_547, %c2_548, %c0_549] : memref<2x7x22x16xf32, #tpu.memory_space<vmem>>, vector<1x1x16x16xf32>
    %660 = vector.shape_cast %659 : vector<1x1x16x16xf32> to vector<16x16xf32>
    %661 = vector.broadcast %658 : f32 to vector<16x16xf32>
    %662 = arith.mulf %661, %660 : vector<16x16xf32>
    %663 = arith.addf %657, %662 : vector<16x16xf32>
    %c69 = arith.constant 69 : index
    %664 = memref.load %arg1[%c69] : memref<98xf32, #tpu.memory_space<smem>>
    %c1_550 = arith.constant 1 : index
    %c6_551 = arith.constant 6 : index
    %c2_552 = arith.constant 2 : index
    %c0_553 = arith.constant 0 : index
    %665 = vector.load %arg6[%c1_550, %c6_551, %c2_552, %c0_553] : memref<2x7x22x16xf32, #tpu.memory_space<vmem>>, vector<1x1x16x16xf32>
    %666 = vector.shape_cast %665 : vector<1x1x16x16xf32> to vector<16x16xf32>
    %667 = vector.broadcast %664 : f32 to vector<16x16xf32>
    %668 = arith.mulf %667, %666 : vector<16x16xf32>
    %669 = arith.addf %663, %668 : vector<16x16xf32>
    %c70 = arith.constant 70 : index
    %670 = memref.load %arg1[%c70] : memref<98xf32, #tpu.memory_space<smem>>
    %c1_554 = arith.constant 1 : index
    %c0_555 = arith.constant 0 : index
    %c3_556 = arith.constant 3 : index
    %c0_557 = arith.constant 0 : index
    %671 = vector.load %arg6[%c1_554, %c0_555, %c3_556, %c0_557] : memref<2x7x22x16xf32, #tpu.memory_space<vmem>>, vector<1x1x16x16xf32>
    %672 = vector.shape_cast %671 : vector<1x1x16x16xf32> to vector<16x16xf32>
    %673 = vector.broadcast %670 : f32 to vector<16x16xf32>
    %674 = arith.mulf %673, %672 : vector<16x16xf32>
    %675 = arith.addf %627, %674 : vector<16x16xf32>
    %c71 = arith.constant 71 : index
    %676 = memref.load %arg1[%c71] : memref<98xf32, #tpu.memory_space<smem>>
    %c1_558 = arith.constant 1 : index
    %c1_559 = arith.constant 1 : index
    %c3_560 = arith.constant 3 : index
    %c0_561 = arith.constant 0 : index
    %677 = vector.load %arg6[%c1_558, %c1_559, %c3_560, %c0_561] : memref<2x7x22x16xf32, #tpu.memory_space<vmem>>, vector<1x1x16x16xf32>
    %678 = vector.shape_cast %677 : vector<1x1x16x16xf32> to vector<16x16xf32>
    %679 = vector.broadcast %676 : f32 to vector<16x16xf32>
    %680 = arith.mulf %679, %678 : vector<16x16xf32>
    %681 = arith.addf %675, %680 : vector<16x16xf32>
    %c72 = arith.constant 72 : index
    %682 = memref.load %arg1[%c72] : memref<98xf32, #tpu.memory_space<smem>>
    %c1_562 = arith.constant 1 : index
    %c2_563 = arith.constant 2 : index
    %c3_564 = arith.constant 3 : index
    %c0_565 = arith.constant 0 : index
    %683 = vector.load %arg6[%c1_562, %c2_563, %c3_564, %c0_565] : memref<2x7x22x16xf32, #tpu.memory_space<vmem>>, vector<1x1x16x16xf32>
    %684 = vector.shape_cast %683 : vector<1x1x16x16xf32> to vector<16x16xf32>
    %685 = vector.broadcast %682 : f32 to vector<16x16xf32>
    %686 = arith.mulf %685, %684 : vector<16x16xf32>
    %687 = arith.addf %681, %686 : vector<16x16xf32>
    %c73 = arith.constant 73 : index
    %688 = memref.load %arg1[%c73] : memref<98xf32, #tpu.memory_space<smem>>
    %c1_566 = arith.constant 1 : index
    %c3_567 = arith.constant 3 : index
    %c3_568 = arith.constant 3 : index
    %c0_569 = arith.constant 0 : index
    %689 = vector.load %arg6[%c1_566, %c3_567, %c3_568, %c0_569] : memref<2x7x22x16xf32, #tpu.memory_space<vmem>>, vector<1x1x16x16xf32>
    %690 = vector.shape_cast %689 : vector<1x1x16x16xf32> to vector<16x16xf32>
    %691 = vector.broadcast %688 : f32 to vector<16x16xf32>
    %692 = arith.mulf %691, %690 : vector<16x16xf32>
    %693 = arith.addf %687, %692 : vector<16x16xf32>
    %c74 = arith.constant 74 : index
    %694 = memref.load %arg1[%c74] : memref<98xf32, #tpu.memory_space<smem>>
    %c1_570 = arith.constant 1 : index
    %c4_571 = arith.constant 4 : index
    %c3_572 = arith.constant 3 : index
    %c0_573 = arith.constant 0 : index
    %695 = vector.load %arg6[%c1_570, %c4_571, %c3_572, %c0_573] : memref<2x7x22x16xf32, #tpu.memory_space<vmem>>, vector<1x1x16x16xf32>
    %696 = vector.shape_cast %695 : vector<1x1x16x16xf32> to vector<16x16xf32>
    %697 = vector.broadcast %694 : f32 to vector<16x16xf32>
    %698 = arith.mulf %697, %696 : vector<16x16xf32>
    %699 = arith.addf %693, %698 : vector<16x16xf32>
    %c75 = arith.constant 75 : index
    %700 = memref.load %arg1[%c75] : memref<98xf32, #tpu.memory_space<smem>>
    %c1_574 = arith.constant 1 : index
    %c5_575 = arith.constant 5 : index
    %c3_576 = arith.constant 3 : index
    %c0_577 = arith.constant 0 : index
    %701 = vector.load %arg6[%c1_574, %c5_575, %c3_576, %c0_577] : memref<2x7x22x16xf32, #tpu.memory_space<vmem>>, vector<1x1x16x16xf32>
    %702 = vector.shape_cast %701 : vector<1x1x16x16xf32> to vector<16x16xf32>
    %703 = vector.broadcast %700 : f32 to vector<16x16xf32>
    %704 = arith.mulf %703, %702 : vector<16x16xf32>
    %705 = arith.addf %699, %704 : vector<16x16xf32>
    %c76 = arith.constant 76 : index
    %706 = memref.load %arg1[%c76] : memref<98xf32, #tpu.memory_space<smem>>
    %c1_578 = arith.constant 1 : index
    %c6_579 = arith.constant 6 : index
    %c3_580 = arith.constant 3 : index
    %c0_581 = arith.constant 0 : index
    %707 = vector.load %arg6[%c1_578, %c6_579, %c3_580, %c0_581] : memref<2x7x22x16xf32, #tpu.memory_space<vmem>>, vector<1x1x16x16xf32>
    %708 = vector.shape_cast %707 : vector<1x1x16x16xf32> to vector<16x16xf32>
    %709 = vector.broadcast %706 : f32 to vector<16x16xf32>
    %710 = arith.mulf %709, %708 : vector<16x16xf32>
    %711 = arith.addf %705, %710 : vector<16x16xf32>
    %c77 = arith.constant 77 : index
    %712 = memref.load %arg1[%c77] : memref<98xf32, #tpu.memory_space<smem>>
    %c1_582 = arith.constant 1 : index
    %c0_583 = arith.constant 0 : index
    %c4_584 = arith.constant 4 : index
    %c0_585 = arith.constant 0 : index
    %713 = vector.load %arg6[%c1_582, %c0_583, %c4_584, %c0_585] : memref<2x7x22x16xf32, #tpu.memory_space<vmem>>, vector<1x1x16x16xf32>
    %714 = vector.shape_cast %713 : vector<1x1x16x16xf32> to vector<16x16xf32>
    %715 = vector.broadcast %712 : f32 to vector<16x16xf32>
    %716 = arith.mulf %715, %714 : vector<16x16xf32>
    %717 = arith.addf %669, %716 : vector<16x16xf32>
    %c78 = arith.constant 78 : index
    %718 = memref.load %arg1[%c78] : memref<98xf32, #tpu.memory_space<smem>>
    %c1_586 = arith.constant 1 : index
    %c1_587 = arith.constant 1 : index
    %c4_588 = arith.constant 4 : index
    %c0_589 = arith.constant 0 : index
    %719 = vector.load %arg6[%c1_586, %c1_587, %c4_588, %c0_589] : memref<2x7x22x16xf32, #tpu.memory_space<vmem>>, vector<1x1x16x16xf32>
    %720 = vector.shape_cast %719 : vector<1x1x16x16xf32> to vector<16x16xf32>
    %721 = vector.broadcast %718 : f32 to vector<16x16xf32>
    %722 = arith.mulf %721, %720 : vector<16x16xf32>
    %723 = arith.addf %717, %722 : vector<16x16xf32>
    %c79 = arith.constant 79 : index
    %724 = memref.load %arg1[%c79] : memref<98xf32, #tpu.memory_space<smem>>
    %c1_590 = arith.constant 1 : index
    %c2_591 = arith.constant 2 : index
    %c4_592 = arith.constant 4 : index
    %c0_593 = arith.constant 0 : index
    %725 = vector.load %arg6[%c1_590, %c2_591, %c4_592, %c0_593] : memref<2x7x22x16xf32, #tpu.memory_space<vmem>>, vector<1x1x16x16xf32>
    %726 = vector.shape_cast %725 : vector<1x1x16x16xf32> to vector<16x16xf32>
    %727 = vector.broadcast %724 : f32 to vector<16x16xf32>
    %728 = arith.mulf %727, %726 : vector<16x16xf32>
    %729 = arith.addf %723, %728 : vector<16x16xf32>
    %c80_594 = arith.constant 80 : index
    %730 = memref.load %arg1[%c80_594] : memref<98xf32, #tpu.memory_space<smem>>
    %c1_595 = arith.constant 1 : index
    %c3_596 = arith.constant 3 : index
    %c4_597 = arith.constant 4 : index
    %c0_598 = arith.constant 0 : index
    %731 = vector.load %arg6[%c1_595, %c3_596, %c4_597, %c0_598] : memref<2x7x22x16xf32, #tpu.memory_space<vmem>>, vector<1x1x16x16xf32>
    %732 = vector.shape_cast %731 : vector<1x1x16x16xf32> to vector<16x16xf32>
    %733 = vector.broadcast %730 : f32 to vector<16x16xf32>
    %734 = arith.mulf %733, %732 : vector<16x16xf32>
    %735 = arith.addf %729, %734 : vector<16x16xf32>
    %c81 = arith.constant 81 : index
    %736 = memref.load %arg1[%c81] : memref<98xf32, #tpu.memory_space<smem>>
    %c1_599 = arith.constant 1 : index
    %c4_600 = arith.constant 4 : index
    %c4_601 = arith.constant 4 : index
    %c0_602 = arith.constant 0 : index
    %737 = vector.load %arg6[%c1_599, %c4_600, %c4_601, %c0_602] : memref<2x7x22x16xf32, #tpu.memory_space<vmem>>, vector<1x1x16x16xf32>
    %738 = vector.shape_cast %737 : vector<1x1x16x16xf32> to vector<16x16xf32>
    %739 = vector.broadcast %736 : f32 to vector<16x16xf32>
    %740 = arith.mulf %739, %738 : vector<16x16xf32>
    %741 = arith.addf %735, %740 : vector<16x16xf32>
    %c82 = arith.constant 82 : index
    %742 = memref.load %arg1[%c82] : memref<98xf32, #tpu.memory_space<smem>>
    %c1_603 = arith.constant 1 : index
    %c5_604 = arith.constant 5 : index
    %c4_605 = arith.constant 4 : index
    %c0_606 = arith.constant 0 : index
    %743 = vector.load %arg6[%c1_603, %c5_604, %c4_605, %c0_606] : memref<2x7x22x16xf32, #tpu.memory_space<vmem>>, vector<1x1x16x16xf32>
    %744 = vector.shape_cast %743 : vector<1x1x16x16xf32> to vector<16x16xf32>
    %745 = vector.broadcast %742 : f32 to vector<16x16xf32>
    %746 = arith.mulf %745, %744 : vector<16x16xf32>
    %747 = arith.addf %741, %746 : vector<16x16xf32>
    %c83 = arith.constant 83 : index
    %748 = memref.load %arg1[%c83] : memref<98xf32, #tpu.memory_space<smem>>
    %c1_607 = arith.constant 1 : index
    %c6_608 = arith.constant 6 : index
    %c4_609 = arith.constant 4 : index
    %c0_610 = arith.constant 0 : index
    %749 = vector.load %arg6[%c1_607, %c6_608, %c4_609, %c0_610] : memref<2x7x22x16xf32, #tpu.memory_space<vmem>>, vector<1x1x16x16xf32>
    %750 = vector.shape_cast %749 : vector<1x1x16x16xf32> to vector<16x16xf32>
    %751 = vector.broadcast %748 : f32 to vector<16x16xf32>
    %752 = arith.mulf %751, %750 : vector<16x16xf32>
    %753 = arith.addf %747, %752 : vector<16x16xf32>
    %c84 = arith.constant 84 : index
    %754 = memref.load %arg1[%c84] : memref<98xf32, #tpu.memory_space<smem>>
    %c1_611 = arith.constant 1 : index
    %c0_612 = arith.constant 0 : index
    %c5_613 = arith.constant 5 : index
    %c0_614 = arith.constant 0 : index
    %755 = vector.load %arg6[%c1_611, %c0_612, %c5_613, %c0_614] : memref<2x7x22x16xf32, #tpu.memory_space<vmem>>, vector<1x1x16x16xf32>
    %756 = vector.shape_cast %755 : vector<1x1x16x16xf32> to vector<16x16xf32>
    %757 = vector.broadcast %754 : f32 to vector<16x16xf32>
    %758 = arith.mulf %757, %756 : vector<16x16xf32>
    %759 = arith.addf %711, %758 : vector<16x16xf32>
    %c85 = arith.constant 85 : index
    %760 = memref.load %arg1[%c85] : memref<98xf32, #tpu.memory_space<smem>>
    %c1_615 = arith.constant 1 : index
    %c1_616 = arith.constant 1 : index
    %c5_617 = arith.constant 5 : index
    %c0_618 = arith.constant 0 : index
    %761 = vector.load %arg6[%c1_615, %c1_616, %c5_617, %c0_618] : memref<2x7x22x16xf32, #tpu.memory_space<vmem>>, vector<1x1x16x16xf32>
    %762 = vector.shape_cast %761 : vector<1x1x16x16xf32> to vector<16x16xf32>
    %763 = vector.broadcast %760 : f32 to vector<16x16xf32>
    %764 = arith.mulf %763, %762 : vector<16x16xf32>
    %765 = arith.addf %759, %764 : vector<16x16xf32>
    %c86 = arith.constant 86 : index
    %766 = memref.load %arg1[%c86] : memref<98xf32, #tpu.memory_space<smem>>
    %c1_619 = arith.constant 1 : index
    %c2_620 = arith.constant 2 : index
    %c5_621 = arith.constant 5 : index
    %c0_622 = arith.constant 0 : index
    %767 = vector.load %arg6[%c1_619, %c2_620, %c5_621, %c0_622] : memref<2x7x22x16xf32, #tpu.memory_space<vmem>>, vector<1x1x16x16xf32>
    %768 = vector.shape_cast %767 : vector<1x1x16x16xf32> to vector<16x16xf32>
    %769 = vector.broadcast %766 : f32 to vector<16x16xf32>
    %770 = arith.mulf %769, %768 : vector<16x16xf32>
    %771 = arith.addf %765, %770 : vector<16x16xf32>
    %c87 = arith.constant 87 : index
    %772 = memref.load %arg1[%c87] : memref<98xf32, #tpu.memory_space<smem>>
    %c1_623 = arith.constant 1 : index
    %c3_624 = arith.constant 3 : index
    %c5_625 = arith.constant 5 : index
    %c0_626 = arith.constant 0 : index
    %773 = vector.load %arg6[%c1_623, %c3_624, %c5_625, %c0_626] : memref<2x7x22x16xf32, #tpu.memory_space<vmem>>, vector<1x1x16x16xf32>
    %774 = vector.shape_cast %773 : vector<1x1x16x16xf32> to vector<16x16xf32>
    %775 = vector.broadcast %772 : f32 to vector<16x16xf32>
    %776 = arith.mulf %775, %774 : vector<16x16xf32>
    %777 = arith.addf %771, %776 : vector<16x16xf32>
    %c88 = arith.constant 88 : index
    %778 = memref.load %arg1[%c88] : memref<98xf32, #tpu.memory_space<smem>>
    %c1_627 = arith.constant 1 : index
    %c4_628 = arith.constant 4 : index
    %c5_629 = arith.constant 5 : index
    %c0_630 = arith.constant 0 : index
    %779 = vector.load %arg6[%c1_627, %c4_628, %c5_629, %c0_630] : memref<2x7x22x16xf32, #tpu.memory_space<vmem>>, vector<1x1x16x16xf32>
    %780 = vector.shape_cast %779 : vector<1x1x16x16xf32> to vector<16x16xf32>
    %781 = vector.broadcast %778 : f32 to vector<16x16xf32>
    %782 = arith.mulf %781, %780 : vector<16x16xf32>
    %783 = arith.addf %777, %782 : vector<16x16xf32>
    %c89 = arith.constant 89 : index
    %784 = memref.load %arg1[%c89] : memref<98xf32, #tpu.memory_space<smem>>
    %c1_631 = arith.constant 1 : index
    %c5_632 = arith.constant 5 : index
    %c5_633 = arith.constant 5 : index
    %c0_634 = arith.constant 0 : index
    %785 = vector.load %arg6[%c1_631, %c5_632, %c5_633, %c0_634] : memref<2x7x22x16xf32, #tpu.memory_space<vmem>>, vector<1x1x16x16xf32>
    %786 = vector.shape_cast %785 : vector<1x1x16x16xf32> to vector<16x16xf32>
    %787 = vector.broadcast %784 : f32 to vector<16x16xf32>
    %788 = arith.mulf %787, %786 : vector<16x16xf32>
    %789 = arith.addf %783, %788 : vector<16x16xf32>
    %c90 = arith.constant 90 : index
    %790 = memref.load %arg1[%c90] : memref<98xf32, #tpu.memory_space<smem>>
    %c1_635 = arith.constant 1 : index
    %c6_636 = arith.constant 6 : index
    %c5_637 = arith.constant 5 : index
    %c0_638 = arith.constant 0 : index
    %791 = vector.load %arg6[%c1_635, %c6_636, %c5_637, %c0_638] : memref<2x7x22x16xf32, #tpu.memory_space<vmem>>, vector<1x1x16x16xf32>
    %792 = vector.shape_cast %791 : vector<1x1x16x16xf32> to vector<16x16xf32>
    %793 = vector.broadcast %790 : f32 to vector<16x16xf32>
    %794 = arith.mulf %793, %792 : vector<16x16xf32>
    %795 = arith.addf %789, %794 : vector<16x16xf32>
    %c91 = arith.constant 91 : index
    %796 = memref.load %arg1[%c91] : memref<98xf32, #tpu.memory_space<smem>>
    %c1_639 = arith.constant 1 : index
    %c0_640 = arith.constant 0 : index
    %c6_641 = arith.constant 6 : index
    %c0_642 = arith.constant 0 : index
    %797 = vector.load %arg6[%c1_639, %c0_640, %c6_641, %c0_642] : memref<2x7x22x16xf32, #tpu.memory_space<vmem>>, vector<1x1x16x16xf32>
    %798 = vector.shape_cast %797 : vector<1x1x16x16xf32> to vector<16x16xf32>
    %799 = vector.broadcast %796 : f32 to vector<16x16xf32>
    %800 = arith.mulf %799, %798 : vector<16x16xf32>
    %801 = arith.addf %753, %800 : vector<16x16xf32>
    %c92 = arith.constant 92 : index
    %802 = memref.load %arg1[%c92] : memref<98xf32, #tpu.memory_space<smem>>
    %c1_643 = arith.constant 1 : index
    %c1_644 = arith.constant 1 : index
    %c6_645 = arith.constant 6 : index
    %c0_646 = arith.constant 0 : index
    %803 = vector.load %arg6[%c1_643, %c1_644, %c6_645, %c0_646] : memref<2x7x22x16xf32, #tpu.memory_space<vmem>>, vector<1x1x16x16xf32>
    %804 = vector.shape_cast %803 : vector<1x1x16x16xf32> to vector<16x16xf32>
    %805 = vector.broadcast %802 : f32 to vector<16x16xf32>
    %806 = arith.mulf %805, %804 : vector<16x16xf32>
    %807 = arith.addf %801, %806 : vector<16x16xf32>
    %c93 = arith.constant 93 : index
    %808 = memref.load %arg1[%c93] : memref<98xf32, #tpu.memory_space<smem>>
    %c1_647 = arith.constant 1 : index
    %c2_648 = arith.constant 2 : index
    %c6_649 = arith.constant 6 : index
    %c0_650 = arith.constant 0 : index
    %809 = vector.load %arg6[%c1_647, %c2_648, %c6_649, %c0_650] : memref<2x7x22x16xf32, #tpu.memory_space<vmem>>, vector<1x1x16x16xf32>
    %810 = vector.shape_cast %809 : vector<1x1x16x16xf32> to vector<16x16xf32>
    %811 = vector.broadcast %808 : f32 to vector<16x16xf32>
    %812 = arith.mulf %811, %810 : vector<16x16xf32>
    %813 = arith.addf %807, %812 : vector<16x16xf32>
    %c94 = arith.constant 94 : index
    %814 = memref.load %arg1[%c94] : memref<98xf32, #tpu.memory_space<smem>>
    %c1_651 = arith.constant 1 : index
    %c3_652 = arith.constant 3 : index
    %c6_653 = arith.constant 6 : index
    %c0_654 = arith.constant 0 : index
    %815 = vector.load %arg6[%c1_651, %c3_652, %c6_653, %c0_654] : memref<2x7x22x16xf32, #tpu.memory_space<vmem>>, vector<1x1x16x16xf32>
    %816 = vector.shape_cast %815 : vector<1x1x16x16xf32> to vector<16x16xf32>
    %817 = vector.broadcast %814 : f32 to vector<16x16xf32>
    %818 = arith.mulf %817, %816 : vector<16x16xf32>
    %819 = arith.addf %813, %818 : vector<16x16xf32>
    %c95 = arith.constant 95 : index
    %820 = memref.load %arg1[%c95] : memref<98xf32, #tpu.memory_space<smem>>
    %c1_655 = arith.constant 1 : index
    %c4_656 = arith.constant 4 : index
    %c6_657 = arith.constant 6 : index
    %c0_658 = arith.constant 0 : index
    %821 = vector.load %arg6[%c1_655, %c4_656, %c6_657, %c0_658] : memref<2x7x22x16xf32, #tpu.memory_space<vmem>>, vector<1x1x16x16xf32>
    %822 = vector.shape_cast %821 : vector<1x1x16x16xf32> to vector<16x16xf32>
    %823 = vector.broadcast %820 : f32 to vector<16x16xf32>
    %824 = arith.mulf %823, %822 : vector<16x16xf32>
    %825 = arith.addf %819, %824 : vector<16x16xf32>
    %c96_659 = arith.constant 96 : index
    %826 = memref.load %arg1[%c96_659] : memref<98xf32, #tpu.memory_space<smem>>
    %c1_660 = arith.constant 1 : index
    %c5_661 = arith.constant 5 : index
    %c6_662 = arith.constant 6 : index
    %c0_663 = arith.constant 0 : index
    %827 = vector.load %arg6[%c1_660, %c5_661, %c6_662, %c0_663] : memref<2x7x22x16xf32, #tpu.memory_space<vmem>>, vector<1x1x16x16xf32>
    %828 = vector.shape_cast %827 : vector<1x1x16x16xf32> to vector<16x16xf32>
    %829 = vector.broadcast %826 : f32 to vector<16x16xf32>
    %830 = arith.mulf %829, %828 : vector<16x16xf32>
    %831 = arith.addf %825, %830 : vector<16x16xf32>
    %c97 = arith.constant 97 : index
    %832 = memref.load %arg1[%c97] : memref<98xf32, #tpu.memory_space<smem>>
    %c1_664 = arith.constant 1 : index
    %c6_665 = arith.constant 6 : index
    %c6_666 = arith.constant 6 : index
    %c0_667 = arith.constant 0 : index
    %833 = vector.load %arg6[%c1_664, %c6_665, %c6_666, %c0_667] : memref<2x7x22x16xf32, #tpu.memory_space<vmem>>, vector<1x1x16x16xf32>
    %834 = vector.shape_cast %833 : vector<1x1x16x16xf32> to vector<16x16xf32>
    %835 = vector.broadcast %832 : f32 to vector<16x16xf32>
    %836 = arith.mulf %835, %834 : vector<16x16xf32>
    %837 = arith.addf %831, %836 : vector<16x16xf32>
    %838 = arith.addf %543, %501 : vector<16x16xf32>
    %839 = arith.addf %837, %795 : vector<16x16xf32>
    %840 = arith.addf %838, %839 : vector<16x16xf32>
    %c0_668 = arith.constant 0 : index
    %841 = memref.load %arg2[%c0_668] : memref<1xf32, #tpu.memory_space<smem>>
    %842 = vector.broadcast %841 : f32 to vector<16x16xf32>
    %843 = arith.addf %840, %842 : vector<16x16xf32>
    %844 = arith.negf %843 : vector<16x16xf32>
    %845 = math.exp %844 : vector<16x16xf32>
    %cst_669 = arith.constant 1.000000e+00 : f32
    %846 = vector.broadcast %cst_669 : f32 to vector<16x16xf32>
    %847 = arith.addf %846, %845 : vector<16x16xf32>
    %848 = arith.divf %846, %847 : vector<16x16xf32>
    %849 = vector.extract_strided_slice %848 {offsets = [0, 0], sizes = [1, 16], strides = [1, 1]} : vector<16x16xf32> to vector<1x16xf32>
    %850 = vector.shape_cast %849 : vector<1x16xf32> to vector<16xf32>
    %c2_670 = arith.constant 2 : index
    %c0_671 = arith.constant 0 : index
    %851 = vector.load %arg7[%c2_670, %c0_671] : memref<4x256xf32, #tpu.memory_space<vmem>>, vector<1x16xf32>
    %852 = vector.shape_cast %851 : vector<1x16xf32> to vector<16xf32>
    %853 = vector.shape_cast %850 : vector<16xf32> to vector<1x16xf32>
    tpu.vector_store %arg7[%c2_670, %c0_671], %853 {strides = array<i32>} : memref<4x256xf32, #tpu.memory_space<vmem>>, vector<1x16xf32>,
    %854 = vector.extract_strided_slice %848 {offsets = [1, 0], sizes = [1, 16], strides = [1, 1]} : vector<16x16xf32> to vector<1x16xf32>
    %855 = vector.shape_cast %854 : vector<1x16xf32> to vector<16xf32>
    %c2_672 = arith.constant 2 : index
    %c16_673 = arith.constant 16 : index
    %856 = vector.load %arg7[%c2_672, %c16_673] : memref<4x256xf32, #tpu.memory_space<vmem>>, vector<1x16xf32>
    %857 = vector.shape_cast %856 : vector<1x16xf32> to vector<16xf32>
    %858 = vector.shape_cast %855 : vector<16xf32> to vector<1x16xf32>
    tpu.vector_store %arg7[%c2_672, %c16_673], %858 {strides = array<i32>} : memref<4x256xf32, #tpu.memory_space<vmem>>, vector<1x16xf32>,
    %859 = vector.extract_strided_slice %848 {offsets = [2, 0], sizes = [1, 16], strides = [1, 1]} : vector<16x16xf32> to vector<1x16xf32>
    %860 = vector.shape_cast %859 : vector<1x16xf32> to vector<16xf32>
    %c2_674 = arith.constant 2 : index
    %c32_675 = arith.constant 32 : index
    %861 = vector.load %arg7[%c2_674, %c32_675] : memref<4x256xf32, #tpu.memory_space<vmem>>, vector<1x16xf32>
    %862 = vector.shape_cast %861 : vector<1x16xf32> to vector<16xf32>
    %863 = vector.shape_cast %860 : vector<16xf32> to vector<1x16xf32>
    tpu.vector_store %arg7[%c2_674, %c32_675], %863 {strides = array<i32>} : memref<4x256xf32, #tpu.memory_space<vmem>>, vector<1x16xf32>,
    %864 = vector.extract_strided_slice %848 {offsets = [3, 0], sizes = [1, 16], strides = [1, 1]} : vector<16x16xf32> to vector<1x16xf32>
    %865 = vector.shape_cast %864 : vector<1x16xf32> to vector<16xf32>
    %c2_676 = arith.constant 2 : index
    %c48_677 = arith.constant 48 : index
    %866 = vector.load %arg7[%c2_676, %c48_677] : memref<4x256xf32, #tpu.memory_space<vmem>>, vector<1x16xf32>
    %867 = vector.shape_cast %866 : vector<1x16xf32> to vector<16xf32>
    %868 = vector.shape_cast %865 : vector<16xf32> to vector<1x16xf32>
    tpu.vector_store %arg7[%c2_676, %c48_677], %868 {strides = array<i32>} : memref<4x256xf32, #tpu.memory_space<vmem>>, vector<1x16xf32>,
    %869 = vector.extract_strided_slice %848 {offsets = [4, 0], sizes = [1, 16], strides = [1, 1]} : vector<16x16xf32> to vector<1x16xf32>
    %870 = vector.shape_cast %869 : vector<1x16xf32> to vector<16xf32>
    %c2_678 = arith.constant 2 : index
    %c64_679 = arith.constant 64 : index
    %871 = vector.load %arg7[%c2_678, %c64_679] : memref<4x256xf32, #tpu.memory_space<vmem>>, vector<1x16xf32>
    %872 = vector.shape_cast %871 : vector<1x16xf32> to vector<16xf32>
    %873 = vector.shape_cast %870 : vector<16xf32> to vector<1x16xf32>
    tpu.vector_store %arg7[%c2_678, %c64_679], %873 {strides = array<i32>} : memref<4x256xf32, #tpu.memory_space<vmem>>, vector<1x16xf32>,
    %874 = vector.extract_strided_slice %848 {offsets = [5, 0], sizes = [1, 16], strides = [1, 1]} : vector<16x16xf32> to vector<1x16xf32>
    %875 = vector.shape_cast %874 : vector<1x16xf32> to vector<16xf32>
    %c2_680 = arith.constant 2 : index
    %c80_681 = arith.constant 80 : index
    %876 = vector.load %arg7[%c2_680, %c80_681] : memref<4x256xf32, #tpu.memory_space<vmem>>, vector<1x16xf32>
    %877 = vector.shape_cast %876 : vector<1x16xf32> to vector<16xf32>
    %878 = vector.shape_cast %875 : vector<16xf32> to vector<1x16xf32>
    tpu.vector_store %arg7[%c2_680, %c80_681], %878 {strides = array<i32>} : memref<4x256xf32, #tpu.memory_space<vmem>>, vector<1x16xf32>,
    %879 = vector.extract_strided_slice %848 {offsets = [6, 0], sizes = [1, 16], strides = [1, 1]} : vector<16x16xf32> to vector<1x16xf32>
    %880 = vector.shape_cast %879 : vector<1x16xf32> to vector<16xf32>
    %c2_682 = arith.constant 2 : index
    %c96_683 = arith.constant 96 : index
    %881 = vector.load %arg7[%c2_682, %c96_683] : memref<4x256xf32, #tpu.memory_space<vmem>>, vector<1x16xf32>
    %882 = vector.shape_cast %881 : vector<1x16xf32> to vector<16xf32>
    %883 = vector.shape_cast %880 : vector<16xf32> to vector<1x16xf32>
    tpu.vector_store %arg7[%c2_682, %c96_683], %883 {strides = array<i32>} : memref<4x256xf32, #tpu.memory_space<vmem>>, vector<1x16xf32>,
    %884 = vector.extract_strided_slice %848 {offsets = [7, 0], sizes = [1, 16], strides = [1, 1]} : vector<16x16xf32> to vector<1x16xf32>
    %885 = vector.shape_cast %884 : vector<1x16xf32> to vector<16xf32>
    %c2_684 = arith.constant 2 : index
    %c112_685 = arith.constant 112 : index
    %886 = vector.load %arg7[%c2_684, %c112_685] : memref<4x256xf32, #tpu.memory_space<vmem>>, vector<1x16xf32>
    %887 = vector.shape_cast %886 : vector<1x16xf32> to vector<16xf32>
    %888 = vector.shape_cast %885 : vector<16xf32> to vector<1x16xf32>
    tpu.vector_store %arg7[%c2_684, %c112_685], %888 {strides = array<i32>} : memref<4x256xf32, #tpu.memory_space<vmem>>, vector<1x16xf32>,
    %889 = vector.extract_strided_slice %848 {offsets = [8, 0], sizes = [1, 16], strides = [1, 1]} : vector<16x16xf32> to vector<1x16xf32>
    %890 = vector.shape_cast %889 : vector<1x16xf32> to vector<16xf32>
    %c2_686 = arith.constant 2 : index
    %c128_687 = arith.constant 128 : index
    %891 = vector.load %arg7[%c2_686, %c128_687] : memref<4x256xf32, #tpu.memory_space<vmem>>, vector<1x16xf32>
    %892 = vector.shape_cast %891 : vector<1x16xf32> to vector<16xf32>
    %893 = vector.shape_cast %890 : vector<16xf32> to vector<1x16xf32>
    tpu.vector_store %arg7[%c2_686, %c128_687], %893 {strides = array<i32>} : memref<4x256xf32, #tpu.memory_space<vmem>>, vector<1x16xf32>,
    %894 = vector.extract_strided_slice %848 {offsets = [9, 0], sizes = [1, 16], strides = [1, 1]} : vector<16x16xf32> to vector<1x16xf32>
    %895 = vector.shape_cast %894 : vector<1x16xf32> to vector<16xf32>
    %c2_688 = arith.constant 2 : index
    %c144_689 = arith.constant 144 : index
    %896 = vector.load %arg7[%c2_688, %c144_689] : memref<4x256xf32, #tpu.memory_space<vmem>>, vector<1x16xf32>
    %897 = vector.shape_cast %896 : vector<1x16xf32> to vector<16xf32>
    %898 = vector.shape_cast %895 : vector<16xf32> to vector<1x16xf32>
    tpu.vector_store %arg7[%c2_688, %c144_689], %898 {strides = array<i32>} : memref<4x256xf32, #tpu.memory_space<vmem>>, vector<1x16xf32>,
    %899 = vector.extract_strided_slice %848 {offsets = [10, 0], sizes = [1, 16], strides = [1, 1]} : vector<16x16xf32> to vector<1x16xf32>
    %900 = vector.shape_cast %899 : vector<1x16xf32> to vector<16xf32>
    %c2_690 = arith.constant 2 : index
    %c160_691 = arith.constant 160 : index
    %901 = vector.load %arg7[%c2_690, %c160_691] : memref<4x256xf32, #tpu.memory_space<vmem>>, vector<1x16xf32>
    %902 = vector.shape_cast %901 : vector<1x16xf32> to vector<16xf32>
    %903 = vector.shape_cast %900 : vector<16xf32> to vector<1x16xf32>
    tpu.vector_store %arg7[%c2_690, %c160_691], %903 {strides = array<i32>} : memref<4x256xf32, #tpu.memory_space<vmem>>, vector<1x16xf32>,
    %904 = vector.extract_strided_slice %848 {offsets = [11, 0], sizes = [1, 16], strides = [1, 1]} : vector<16x16xf32> to vector<1x16xf32>
    %905 = vector.shape_cast %904 : vector<1x16xf32> to vector<16xf32>
    %c2_692 = arith.constant 2 : index
    %c176_693 = arith.constant 176 : index
    %906 = vector.load %arg7[%c2_692, %c176_693] : memref<4x256xf32, #tpu.memory_space<vmem>>, vector<1x16xf32>
    %907 = vector.shape_cast %906 : vector<1x16xf32> to vector<16xf32>
    %908 = vector.shape_cast %905 : vector<16xf32> to vector<1x16xf32>
    tpu.vector_store %arg7[%c2_692, %c176_693], %908 {strides = array<i32>} : memref<4x256xf32, #tpu.memory_space<vmem>>, vector<1x16xf32>,
    %909 = vector.extract_strided_slice %848 {offsets = [12, 0], sizes = [1, 16], strides = [1, 1]} : vector<16x16xf32> to vector<1x16xf32>
    %910 = vector.shape_cast %909 : vector<1x16xf32> to vector<16xf32>
    %c2_694 = arith.constant 2 : index
    %c192_695 = arith.constant 192 : index
    %911 = vector.load %arg7[%c2_694, %c192_695] : memref<4x256xf32, #tpu.memory_space<vmem>>, vector<1x16xf32>
    %912 = vector.shape_cast %911 : vector<1x16xf32> to vector<16xf32>
    %913 = vector.shape_cast %910 : vector<16xf32> to vector<1x16xf32>
    tpu.vector_store %arg7[%c2_694, %c192_695], %913 {strides = array<i32>} : memref<4x256xf32, #tpu.memory_space<vmem>>, vector<1x16xf32>,
    %914 = vector.extract_strided_slice %848 {offsets = [13, 0], sizes = [1, 16], strides = [1, 1]} : vector<16x16xf32> to vector<1x16xf32>
    %915 = vector.shape_cast %914 : vector<1x16xf32> to vector<16xf32>
    %c2_696 = arith.constant 2 : index
    %c208_697 = arith.constant 208 : index
    %916 = vector.load %arg7[%c2_696, %c208_697] : memref<4x256xf32, #tpu.memory_space<vmem>>, vector<1x16xf32>
    %917 = vector.shape_cast %916 : vector<1x16xf32> to vector<16xf32>
    %918 = vector.shape_cast %915 : vector<16xf32> to vector<1x16xf32>
    tpu.vector_store %arg7[%c2_696, %c208_697], %918 {strides = array<i32>} : memref<4x256xf32, #tpu.memory_space<vmem>>, vector<1x16xf32>,
    %919 = vector.extract_strided_slice %848 {offsets = [14, 0], sizes = [1, 16], strides = [1, 1]} : vector<16x16xf32> to vector<1x16xf32>
    %920 = vector.shape_cast %919 : vector<1x16xf32> to vector<16xf32>
    %c2_698 = arith.constant 2 : index
    %c224_699 = arith.constant 224 : index
    %921 = vector.load %arg7[%c2_698, %c224_699] : memref<4x256xf32, #tpu.memory_space<vmem>>, vector<1x16xf32>
    %922 = vector.shape_cast %921 : vector<1x16xf32> to vector<16xf32>
    %923 = vector.shape_cast %920 : vector<16xf32> to vector<1x16xf32>
    tpu.vector_store %arg7[%c2_698, %c224_699], %923 {strides = array<i32>} : memref<4x256xf32, #tpu.memory_space<vmem>>, vector<1x16xf32>,
    %924 = vector.extract_strided_slice %848 {offsets = [15, 0], sizes = [1, 16], strides = [1, 1]} : vector<16x16xf32> to vector<1x16xf32>
    %925 = vector.shape_cast %924 : vector<1x16xf32> to vector<16xf32>
    %c2_700 = arith.constant 2 : index
    %c240_701 = arith.constant 240 : index
    %926 = vector.load %arg7[%c2_700, %c240_701] : memref<4x256xf32, #tpu.memory_space<vmem>>, vector<1x16xf32>
    %927 = vector.shape_cast %926 : vector<1x16xf32> to vector<16xf32>
    %928 = vector.shape_cast %925 : vector<16xf32> to vector<1x16xf32>
    tpu.vector_store %arg7[%c2_700, %c240_701], %928 {strides = array<i32>} : memref<4x256xf32, #tpu.memory_space<vmem>>, vector<1x16xf32>,
    %c2_702 = arith.constant 2 : index
    %c0_703 = arith.constant 0 : index
    %929 = vector.load %arg7[%c2_702, %c0_703] : memref<4x256xf32, #tpu.memory_space<vmem>>, vector<1x256xf32>
    %c0_704 = arith.constant 0 : index
    %c0_705 = arith.constant 0 : index
    %c0_706 = arith.constant 0 : index
    %930 = vector.load %arg3[%c0_704, %c0_705, %c0_706] : memref<1x4x256xf32, #tpu.memory_space<vmem>>, vector<1x4x256xf32>
    %931 = vector.shape_cast %930 : vector<1x4x256xf32> to vector<4x256xf32>
    %932 = vector.broadcast %929 : vector<1x256xf32> to vector<4x256xf32>
    %933 = arith.mulf %931, %932 : vector<4x256xf32>
    %c0_707 = arith.constant 0 : index
    %c0_708 = arith.constant 0 : index
    %c0_709 = arith.constant 0 : index
    %934 = vector.load %arg4[%c0_707, %c0_708, %c0_709] : memref<1x4x256xf32, #tpu.memory_space<vmem>>, vector<1x4x256xf32>
    %935 = vector.shape_cast %934 : vector<1x4x256xf32> to vector<4x256xf32>
    %936 = vector.shape_cast %933 : vector<4x256xf32> to vector<1x4x256xf32>
    tpu.vector_store %arg4[%c0_707, %c0_708, %c0_709], %936 {strides = array<i32>} : memref<1x4x256xf32, #tpu.memory_space<vmem>>, vector<1x4x256xf32>,
    return
  }
  func.func @transform_0(%arg0: i32) -> i32 {
    %c0_i32 = arith.constant 0 : i32
    %c0_i32_0 = arith.constant 0 : i32
    return %c0_i32 : i32
  }
  func.func @transform_1(%arg0: i32) -> i32 {
    %c0_i32 = arith.constant 0 : i32
    %c0_i32_0 = arith.constant 0 : i32
    return %c0_i32 : i32
  }
  func.func @transform_2(%arg0: i32) -> (i32, i32, i32) {
    %c0_i32 = arith.constant 0 : i32
    %c0_i32_0 = arith.constant 0 : i32
    %c0_i32_1 = arith.constant 0 : i32
    return %arg0, %c0_i32, %c0_i32_0 : i32, i32, i32
  }
  func.func @transform_3(%arg0: i32) -> (i32, i32, i32) {
    %c0_i32 = arith.constant 0 : i32
    %c0_i32_0 = arith.constant 0 : i32
    %c0_i32_1 = arith.constant 0 : i32
    return %arg0, %c0_i32, %c0_i32_0 : i32, i32, i32
  }
}

</mosaic_0001>

<llo_original>
// kernel: tpu_custom_call.1
$region0: #{tpu_custom_call.1}
  #allocation0 [shape = 'u32[]', space=smem, size = 0x4, offset = 0x4, fixed_abs, tag = 'smem constant byte address 0x4 - core index']
  #allocation1 [shape = 'u32[144,128]{1,0:T(1,128)}', space=vmem, size = 0x12000, scoped, tag = 'internal scratch']
  #allocation2 [shape = 'f32[2,22,22]{2,1,0:T(8,128)}', space=vmem, size = 0x6000, scoped, tag = 'scratch operand']
  #allocation3 [shape = 'f32[2,7,22,16]{3,2,1,0:T(8,128)}', space=vmem, size = 0x2a000, scoped, tag = 'scratch operand']
  #allocation4 [shape = 'f32[4,256]{1,0:T(4,128)}', space=vmem, size = 0x1000, scoped, tag = 'scratch operand']
  #allocation5 [shape = 'f32[1]{0:T(128)S(6)}', space=smem, size = 0x200, scoped, tag = 'scoped memory for tpu_custom_call.1']
  %s0 = inlined_call_operand.vmem [shape: f32[98], index: 0, kind: input, shape index: {}]
  %s1 = inlined_call_operand.<no memory space> [shape: f32[1], index: 1, kind: input, shape index: {}]
  %s2 = inlined_call_operand.hbm [shape: f32[2,4,256], index: 2, kind: input, shape index: {}]
  %s3 = inlined_call_operand.hbm [shape: f32[2,4,256], index: 3, kind: output, shape index: {}]
  %s4 = sld [smem:[#allocation0]]
  $region53: #{tpu_custom_call.1} parent=0
    _
  %s6 = ssub.s32 1, %s4
  %s7 = scalar_select 0, %s6, %s4
  %8 = sst [smem:[#allocation5]] %s1
  $region1: #{tpu_custom_call.1} parent=0
    #allocation6 [shape = 'u8[512]{0}', space=smem, size = 0x200, scoped, tag = 'input window, operand 0, single buffered']
    #allocation7 [shape = 's32[2]{0}', space=sflag, size = 0x8, scoped, tag = 'scoped memory for tpu_custom_call.1']
    #allocation8 [shape = 's32[2]{0}', space=sflag, size = 0x8, scoped, tag = 'scoped memory for tpu_custom_call.1']
    #allocation9 [shape = 's32[2]{0}', space=sflag, size = 0x8, scoped, tag = 'scoped memory for tpu_custom_call.1']
    #allocation10 [shape = 'u8[8192]{0}', space=vmem, size = 0x2000, scoped, tag = 'input window, operand 2']
    #allocation11 [shape = 'u8[8192]{0}', space=vmem, size = 0x2000, scoped, tag = 'output window, operand 0']
    %9 = vsyncpa [#allocation9], 0
    %10 = vsyncpa [#allocation7], 0
    %s11 = scalar_lea.sflag [#allocation7], 1
    %12 = vsyncpa %s11, 0
    %13 = vsyncpa [#allocation8], 0
    %s14 = scalar_lea.sflag [#allocation8], 1
    %15 = vsyncpa %s14, 0
    loop: start=0, step=1, limit=4
    $region2: #{tpu_custom_call.1} parent=1 // loop_pre_header
      _
    $region3: #{tpu_custom_call.1} parent=1 // loop_header
      %s17 = sphi 0, %s21
      %p18 = scmp.ge.s32.totalorder %s17, 4
      %s25 = sphi 0, %s25
      %s27 = sphi 0, %s25
      %s28 = sphi 0, %s27
      %s42 = sphi 0, %s28
      %s46 = sphi 0, %s46
      %s48 = sphi 0, %s46
      %s49 = sphi 0, %s48
      %s63 = sphi 0, %s49
      %s69 = sphi 0, %s71
      %s72 = sphi 0, %s69
      %s73 = sphi 0, %s72
      %s89 = sphi 0, %s73
      %s95 = sphi 0, %s97
      %s98 = sphi 0, %s95
      %s99 = sphi 0, %s98
      %s115 = sphi 0, %s99
    $region4: #{tpu_custom_call.1} parent=1 // loop_header_branch
      %20 = sbr.rel (%p18) target = $region8
    $region5: #{tpu_custom_call.1} parent=1 // loop_body
      %s22 = ssub.s32 %s17, 1
      %s23 = ssub.s32 %s17, 2
      %s24 = sadd.s32 %s17, 1
      %s26 = sadd.s32 %s25, 1
      %p29 = scmp.eq.s32.totalorder %s17, 1
      %p30 = scmp.ne.s32.totalorder %s25, %s27
      %p31 = scmp.eq.s32.totalorder %s17, 0
      %p32 = por %p30, %p31
      %p33 = scmp.ne.s32.totalorder %s25, %s27
      %p34 = scmp.eq.s32.totalorder %s22, 1
      %p35 = por %p33, %p34
      %p36 = scmp.ne.s32.totalorder %s27, %s28
      %p37 = scmp.eq.s32.totalorder %s22, 0
      %p38 = por %p36, %p37
      %p39 = scmp.ne.s32.totalorder %s27, %s28
      %p40 = scmp.eq.s32.totalorder %s23, 1
      %p41 = por %p39, %p40
      %p43 = scmp.ne.s32.totalorder %s28, %s42
      %p44 = scmp.eq.s32.totalorder %s23, 0
      %p45 = por %p43, %p44
      %s47 = sadd.s32 %s46, 1
      %p50 = scmp.eq.s32.totalorder %s17, 1
      %p51 = scmp.ne.s32.totalorder %s46, %s48
      %p52 = scmp.eq.s32.totalorder %s17, 0
      %p53 = por %p51, %p52
      %p54 = scmp.ne.s32.totalorder %s46, %s48
      %p55 = scmp.eq.s32.totalorder %s22, 1
      %p56 = por %p54, %p55
      %p57 = scmp.ne.s32.totalorder %s48, %s49
      %p58 = scmp.eq.s32.totalorder %s22, 0
      %p59 = por %p57, %p58
      %p60 = scmp.ne.s32.totalorder %s48, %s49
      %p61 = scmp.eq.s32.totalorder %s23, 1
      %p62 = por %p60, %p61
      %p64 = scmp.ne.s32.totalorder %s49, %s63
      %p65 = scmp.eq.s32.totalorder %s23, 0
      %p66 = por %p64, %p65
      %s67 = ssub.s32 %s17, %s24
      %p68 = scmp.eq.s32.totalorder %s67, 0
      %s70 = sadd.s32 %s69, 1
      %s71 = scalar_select %p68, %s69, %s70
      %p74 = pneg %p68
      %p75 = scmp.eq.s32.totalorder %s17, 1
      %p76 = por %p74, %p75
      %p77 = scmp.ne.s32.totalorder %s69, %s72
      %p78 = scmp.eq.s32.totalorder %s17, 0
      %p79 = por %p77, %p78
      %p80 = scmp.ne.s32.totalorder %s69, %s72
      %p81 = scmp.eq.s32.totalorder %s22, 1
      %p82 = por %p80, %p81
      %p83 = scmp.ne.s32.totalorder %s72, %s73
      %p84 = scmp.eq.s32.totalorder %s22, 0
      %p85 = por %p83, %p84
      %p86 = scmp.ne.s32.totalorder %s72, %s73
      %p87 = scmp.eq.s32.totalorder %s23, 1
      %p88 = por %p86, %p87
      %p90 = scmp.ne.s32.totalorder %s73, %s89
      %p91 = scmp.eq.s32.totalorder %s23, 0
      %p92 = por %p90, %p91
      %s93 = ssub.s32 %s17, %s24
      %p94 = scmp.eq.s32.totalorder %s93, 0
      %s96 = sadd.s32 %s95, 1
      %s97 = scalar_select %p94, %s95, %s96
      %p100 = pneg %p94
      %p101 = scmp.eq.s32.totalorder %s17, 1
      %p102 = por %p100, %p101
      %p103 = scmp.ne.s32.totalorder %s95, %s98
      %p104 = scmp.eq.s32.totalorder %s17, 0
      %p105 = por %p103, %p104
      %p106 = scmp.ne.s32.totalorder %s95, %s98
      %p107 = scmp.eq.s32.totalorder %s22, 1
      %p108 = por %p106, %p107
      %p109 = scmp.ne.s32.totalorder %s98, %s99
      %p110 = scmp.eq.s32.totalorder %s22, 0
      %p111 = por %p109, %p110
      %p112 = scmp.ne.s32.totalorder %s98, %s99
      %p113 = scmp.eq.s32.totalorder %s23, 1
      %p114 = por %p112, %p113
      %p116 = scmp.ne.s32.totalorder %s99, %s115
      %p117 = scmp.eq.s32.totalorder %s23, 0
      %p118 = por %p116, %p117
      %p119 = scmp.le.s32.totalorder 1, %s17
      %p120 = scmp.lt.s32.totalorder %s17, 3
      %p121 = pnand %p119, %p120
      %p122 = pneg %p121
      // Predicated region
      $region9: #{tpu_custom_call.1} parent=5 // pred_check
        _
      $region10: #{tpu_custom_call.1} parent=5 // pred_check_branch
        %124 = sbr.rel (%p121) target = $region12
      $region11: #{tpu_custom_call.1} parent=5 // pred_region
        %s125 = ssub.s32 %s17, 1
        // Predicated region
        $region13: #{tpu_custom_call.1} parent=11 // pred_check
          %p126 = pneg %p38
        $region14: #{tpu_custom_call.1} parent=11 // pred_check_branch
          %128 = sbr.rel (%p126) target = $region16
        $region15: #{tpu_custom_call.1} parent=11 // pred_region
          %s130 = ssub.s32 16, 16
          %131 = vsyncadd [#allocation9], %s130
          %s133 = sshll.u32 %s0, 4
          %s134 = int_to_ptr.vmem [resolvable:$true] %s133
          %136 = dma.vmem_to_smem %s134, 16, [#allocation6], [#allocation9]
        $region16: #{tpu_custom_call.1} parent=11 // pred_fallthru
          _
        // Predicated region
        $region17: #{tpu_custom_call.1} parent=11 // pred_check
          %p137 = pneg %p59
        $region18: #{tpu_custom_call.1} parent=11 // pred_check_branch
          %139 = sbr.rel (%p137) target = $region20
        $region19: #{tpu_custom_call.1} parent=11 // pred_region
          _
        $region20: #{tpu_custom_call.1} parent=11 // pred_fallthru
          _
      $region12: #{tpu_custom_call.1} parent=5 // pred_fallthru
        _
      %p140 = scmp.lt.s32.totalorder %s17, 2
      // Predicated region
      $region21: #{tpu_custom_call.1} parent=5 // pred_check
        %p141 = pneg %p140
      $region22: #{tpu_custom_call.1} parent=5 // pred_check_branch
        %143 = sbr.rel (%p141) target = $region24
      $region23: #{tpu_custom_call.1} parent=5 // pred_region
        // Predicated region
        $region25: #{tpu_custom_call.1} parent=23 // pred_check
          %p144 = pneg %p79
        $region26: #{tpu_custom_call.1} parent=23 // pred_check_branch
          %146 = sbr.rel (%p144) target = $region28
        $region27: #{tpu_custom_call.1} parent=23 // pred_region
          %s147 = sand.u32 %s69, 1
          %s148 = scalar_lea.sflag [#allocation7], %s147
          %s149 = sand.u32 %s69, 1
          %s150 = smul.addr %s149, 8
          %s151 = scalar_lea.vmem [#allocation10], %s150
          %s153 = ssub.s32 128, 128
          %154 = vsyncadd %s148, %s153
          %s155 = smul.addr %s17, 2
          %s156 = smul.addr %s155, 64
          %s157 = scalar_lea.hbm %s2, %s156
          %s159 = sshll.u32 %s151, 4
          %s160 = int_to_ptr.vmem [resolvable:$true] %s159
          %162 = dma.hbm_to_vmem [thread:$0]  %s157, 128, %s160, %s148
        $region28: #{tpu_custom_call.1} parent=23 // pred_fallthru
          _
      $region24: #{tpu_custom_call.1} parent=5 // pred_fallthru
        _
      %p163 = scmp.le.s32.totalorder 1, %s17
      %p164 = scmp.lt.s32.totalorder %s17, 3
      %p165 = pnand %p163, %p164
      %p166 = pneg %p165
      // Predicated region
      $region29: #{tpu_custom_call.1} parent=5 // pred_check
        _
      $region30: #{tpu_custom_call.1} parent=5 // pred_check_branch
        %168 = sbr.rel (%p165) target = $region32
      $region31: #{tpu_custom_call.1} parent=5 // pred_region
        %s169 = ssub.s32 %s17, 1
        // Predicated region
        $region33: #{tpu_custom_call.1} parent=31 // pred_check
          %p170 = pneg %p38
        $region34: #{tpu_custom_call.1} parent=31 // pred_check_branch
          %172 = sbr.rel (%p170) target = $region36
        $region35: #{tpu_custom_call.1} parent=31 // pred_region
          %173 = dma.done [#allocation9], 16
        $region36: #{tpu_custom_call.1} parent=31 // pred_fallthru
          _
        %s174 = sand.u32 %s72, 1
        %s175 = scalar_lea.sflag [#allocation7], %s174
        %s176 = sand.u32 %s72, 1
        %s177 = smul.addr %s176, 8
        %s178 = scalar_lea.vmem [#allocation10], %s177
        // Predicated region
        $region37: #{tpu_custom_call.1} parent=31 // pred_check
          %p179 = pneg %p85
        $region38: #{tpu_custom_call.1} parent=31 // pred_check_branch
          %181 = sbr.rel (%p179) target = $region40
        $region39: #{tpu_custom_call.1} parent=31 // pred_region
          %182 = dma.done %s175, 128
        $region40: #{tpu_custom_call.1} parent=31 // pred_fallthru
          _
        %183 = sfence
        %p184 = pneg %p38
        %p185 = pneg %p35
        %p186 = pneg %p59
        %p187 = pneg %p56
        %s188 = sand.u32 %s72, 1
        %s189 = scalar_lea.sflag [#allocation7], %s188
        %s190 = sand.u32 %s72, 1
        %s191 = smul.addr %s190, 8
        %s192 = scalar_lea.vmem [#allocation10], %s191
        %p193 = pneg %p85
        %p194 = pneg %p82
        %p195 = pneg %p111
        %p196 = pneg %p108
        %s197 = sand.u32 %s98, 1
        %s198 = scalar_lea.sflag [#allocation8], %s197
        %s199 = sand.u32 %s98, 1
        %s200 = smul.addr %s199, 8
        %s201 = scalar_lea.vmem [#allocation11], %s200
        %vm202 = vcmask 174080
        %203 = vst.msk [vmem:[#allocation2] sm:$0x7] %vm202, 0.0
        %204 = vst.msk [vmem:[#allocation2 + $0x18] sm:$0x7] %vm202, 0.0
        %205 = vst.msk [vmem:[#allocation2 + $0x13] sm:$0x7] %vm202, 0.0
        %206 = vst.msk [vmem:[#allocation2 + $0x2b] sm:$0x7] %vm202, 0.0
        %vm207 = vcmask 23552
        %208 = vst.msk [vmem:[#allocation2 + $0x3] sm:$0xff] %vm207, 0.0
        %209 = vst.msk [vmem:[#allocation2 + $0xb] sm:$0xff] %vm207, 0.0
        %210 = vst.msk [vmem:[#allocation2 + $0x1b] sm:$0xff] %vm207, 0.0
        %211 = vst.msk [vmem:[#allocation2 + $0x23] sm:$0xff] %vm207, 0.0
        %vm212 = vcmask 179352
        %213 = vst.msk [vmem:[#allocation2 + $0x3] sm:$0xff] %vm212, 0.0
        %214 = vst.msk [vmem:[#allocation2 + $0xb] sm:$0xff] %vm212, 0.0
        %215 = vst.msk [vmem:[#allocation2 + $0x1b] sm:$0xff] %vm212, 0.0
        %216 = vst.msk [vmem:[#allocation2 + $0x23] sm:$0xff] %vm212, 0.0
        %v217 = vld [vmem:[%s178] sm:$0xff]
        %v219 = vcombine.high %v217, %v217
        %vm221 = vcmask 1043456
        %v222 = vsel %vm221, %v217, 0.0
        %v223 = vrot.slane %v222, 4
        %v224 = vadd.f32 %v222, %v223
        %v225 = vrot.slane %v224, 2
        %v226 = vadd.f32 %v224, %v225
        %v227 = vrot.slane %v226, 1
        %v228 = vadd.f32 %v226, %v227
        %v229 = vsel %vm221, %v219, 0.0
        %v230 = vrot.slane %v229, 4
        %v231 = vadd.f32 %v229, %v230
        %v232 = vrot.slane %v231, 2
        %v233 = vadd.f32 %v231, %v232
        %v234 = vrot.slane %v233, 1
        %v235 = vadd.f32 %v233, %v234
        %v236 = vsel %vm221, %v217, -inf
        %v237 = vrot.slane %v236, 4
        %v238 = vmax.f32 %v236, %v237
        %v239 = vrot.slane %v238, 2
        %v240 = vmax.f32 %v238, %v239
        %v241 = vrot.slane %v240, 1
        %v242 = vmax.f32 %v240, %v241
        %v243 = vsel %vm221, %v219, -inf
        %v244 = vrot.slane %v243, 4
        %v245 = vmax.f32 %v243, %v244
        %v246 = vrot.slane %v245, 2
        %v247 = vmax.f32 %v245, %v246
        %v248 = vrot.slane %v247, 1
        %v249 = vmax.f32 %v247, %v248
        %v250 = vmul.f32 %v228, 0.25
        %v251 = vmul.f32 %v235, 0.25
        %v254 = vcombine.low %v250, %v251
        %v256 = vunpack.c.l.s4 1966171168
        %v257 = vunpack.c.0.s8 %v256
        %v258 = vlaneseq
        %v259 = vshrl.u32 %v258, 7
        %v260 = vsub.s32 %v257, %v259
        %v261 = vrot.slane %v254, %v260
        %v263 = vunpack.c.l.s4 1966171168
        %v264 = vunpack.c.0.s8 %v263
        %v265 = vlaneseq
        %v266 = vshrl.u32 %v265, 7
        %v267 = vsub.s32 %v264, %v266
        %v268 = vrot.slane %v261, %v267
        %v270 = vlaneseq
        %vm271 = vcmp.ge.s32.totalorder %v270, 0
        %vm272 = vcmp.lt.s32.totalorder %v270, 256
        %vm273 = vmand %vm271, %vm272
        %274 = vst.msk [vmem:[#allocation4] ss:$4 sm:$0x3] %vm273, %v268
        %v277 = vcombine.low %v242, %v249
        %v279 = vunpack.c.l.s4 1966171168
        %v280 = vunpack.c.0.s8 %v279
        %v281 = vlaneseq
        %v282 = vshrl.u32 %v281, 7
        %v283 = vsub.s32 %v280, %v282
        %v284 = vrot.slane %v277, %v283
        %v286 = vunpack.c.l.s4 1966171168
        %v287 = vunpack.c.0.s8 %v286
        %v288 = vlaneseq
        %v289 = vshrl.u32 %v288, 7
        %v290 = vsub.s32 %v287, %v289
        %v291 = vrot.slane %v284, %v290
        %s293 = scalar_lea.vmem [#allocation4], 1
        %294 = vst.msk [vmem:[%s293] ss:$4 sm:$0x3] %vm273, %v291
        %v295 = vld [vmem:[#allocation4] sm:$0x1]
        %v297 = vlaneseq
        %v298 = vshrl.u32 %v297, 7
        %v299 = vsub.s32 0, %v298
        %v300 = vrot.slane %v295, %v299
        %301 = vrot.lane.b32.xlu0 %v300, 3
        %v302 = vpop.permute.xlu0 %301
        %vm304 = vcmask 147480
        %305 = vst.msk [vmem:[#allocation2 + $0x3] sm:$0x1] %vm304, %v302
        %v306 = vld [vmem:[#allocation4 + $0x1] sm:$0x1]
        %v308 = vlaneseq
        %v309 = vshrl.u32 %v308, 7
        %v310 = vsub.s32 0, %v309
        %v311 = vrot.slane %v306, %v310
        %312 = vrot.lane.b32.xlu0 %v311, 3
        %v313 = vpop.permute.xlu0 %312
        %s315 = scalar_lea.vmem [#allocation2], 24
        %316 = vst.msk [vmem:[%s315 + $0x3] sm:$0x1] %vm304, %v313
        %v317 = vld [vmem:[#allocation4] sm:$0x1]
        %v319 = vlaneseq
        %v320 = vshrl.u32 %v319, 7
        %v321 = vsub.s32 0, %v320
        %v322 = vrot.slane %v317, %v321
        %323 = vrot.lane.b32.xlu0 %v322, 115
        %v324 = vpop.permute.xlu0 %323
        %326 = vst.msk [vmem:[#allocation2 + $0x4] sm:$0x1] %vm304, %v324
        %v327 = vld [vmem:[#allocation4 + $0x1] sm:$0x1]
        %v329 = vlaneseq
        %v330 = vshrl.u32 %v329, 7
        %v331 = vsub.s32 0, %v330
        %v332 = vrot.slane %v327, %v331
        %333 = vrot.lane.b32.xlu0 %v332, 115
        %v334 = vpop.permute.xlu0 %333
        %336 = vst.msk [vmem:[%s315 + $0x4] sm:$0x1] %vm304, %v334
        %v337 = vld [vmem:[#allocation4] sm:$0x1]
        %v339 = vlaneseq
        %v340 = vshrl.u32 %v339, 7
        %v341 = vsub.s32 0, %v340
        %v342 = vrot.slane %v337, %v341
        %343 = vrot.lane.b32.xlu0 %v342, 99
        %v344 = vpop.permute.xlu0 %343
        %346 = vst.msk [vmem:[#allocation2 + $0x5] sm:$0x1] %vm304, %v344
        %v347 = vld [vmem:[#allocation4 + $0x1] sm:$0x1]
        %v349 = vlaneseq
        %v350 = vshrl.u32 %v349, 7
        %v351 = vsub.s32 0, %v350
        %v352 = vrot.slane %v347, %v351
        %353 = vrot.lane.b32.xlu0 %v352, 99
        %v354 = vpop.permute.xlu0 %353
        %356 = vst.msk [vmem:[%s315 + $0x5] sm:$0x1] %vm304, %v354
        %v357 = vld [vmem:[#allocation4] sm:$0x1]
        %v359 = vlaneseq
        %v360 = vshrl.u32 %v359, 7
        %v361 = vsub.s32 0, %v360
        %v362 = vrot.slane %v357, %v361
        %363 = vrot.lane.b32.xlu0 %v362, 83
        %v364 = vpop.permute.xlu0 %363
        %366 = vst.msk [vmem:[#allocation2 + $0x6] sm:$0x1] %vm304, %v364
        %v367 = vld [vmem:[#allocation4 + $0x1] sm:$0x1]
        %v369 = vlaneseq
        %v370 = vshrl.u32 %v369, 7
        %v371 = vsub.s32 0, %v370
        %v372 = vrot.slane %v367, %v371
        %373 = vrot.lane.b32.xlu0 %v372, 83
        %v374 = vpop.permute.xlu0 %373
        %376 = vst.msk [vmem:[%s315 + $0x6] sm:$0x1] %vm304, %v374
        %v377 = vld [vmem:[#allocation4] sm:$0x1]
        %v379 = vlaneseq
        %v380 = vshrl.u32 %v379, 7
        %v381 = vsub.s32 0, %v380
        %v382 = vrot.slane %v377, %v381
        %383 = vrot.lane.b32.xlu0 %v382, 67
        %v384 = vpop.permute.xlu0 %383
        %386 = vst.msk [vmem:[#allocation2 + $0x7] sm:$0x1] %vm304, %v384
        %v387 = vld [vmem:[#allocation4 + $0x1] sm:$0x1]
        %v389 = vlaneseq
        %v390 = vshrl.u32 %v389, 7
        %v391 = vsub.s32 0, %v390
        %v392 = vrot.slane %v387, %v391
        %393 = vrot.lane.b32.xlu0 %v392, 67
        %v394 = vpop.permute.xlu0 %393
        %396 = vst.msk [vmem:[%s315 + $0x7] sm:$0x1] %vm304, %v394
        %v397 = vld [vmem:[#allocation4] sm:$0x1]
        %v399 = vlaneseq
        %v400 = vshrl.u32 %v399, 7
        %v401 = vsub.s32 0, %v400
        %v402 = vrot.slane %v397, %v401
        %403 = vrot.lane.b32.xlu0 %v402, 51
        %v404 = vpop.permute.xlu0 %403
        %406 = vst.msk [vmem:[#allocation2 + $0x8] sm:$0x1] %vm304, %v404
        %v407 = vld [vmem:[#allocation4 + $0x1] sm:$0x1]
        %v409 = vlaneseq
        %v410 = vshrl.u32 %v409, 7
        %v411 = vsub.s32 0, %v410
        %v412 = vrot.slane %v407, %v411
        %413 = vrot.lane.b32.xlu0 %v412, 51
        %v414 = vpop.permute.xlu0 %413
        %416 = vst.msk [vmem:[%s315 + $0x8] sm:$0x1] %vm304, %v414
        %v417 = vld [vmem:[#allocation4] sm:$0x1]
        %v419 = vlaneseq
        %v420 = vshrl.u32 %v419, 7
        %v421 = vsub.s32 0, %v420
        %v422 = vrot.slane %v417, %v421
        %423 = vrot.lane.b32.xlu0 %v422, 35
        %v424 = vpop.permute.xlu0 %423
        %426 = vst.msk [vmem:[#allocation2 + $0x9] sm:$0x1] %vm304, %v424
        %v427 = vld [vmem:[#allocation4 + $0x1] sm:$0x1]
        %v429 = vlaneseq
        %v430 = vshrl.u32 %v429, 7
        %v431 = vsub.s32 0, %v430
        %v432 = vrot.slane %v427, %v431
        %433 = vrot.lane.b32.xlu0 %v432, 35
        %v434 = vpop.permute.xlu0 %433
        %436 = vst.msk [vmem:[%s315 + $0x9] sm:$0x1] %vm304, %v434
        %v437 = vld [vmem:[#allocation4] sm:$0x1]
        %v439 = vlaneseq
        %v440 = vshrl.u32 %v439, 7
        %v441 = vsub.s32 0, %v440
        %v442 = vrot.slane %v437, %v441
        %443 = vrot.lane.b32.xlu0 %v442, 19
        %v444 = vpop.permute.xlu0 %443
        %446 = vst.msk [vmem:[#allocation2 + $0xa] sm:$0x1] %vm304, %v444
        %v447 = vld [vmem:[#allocation4 + $0x1] sm:$0x1]
        %v449 = vlaneseq
        %v450 = vshrl.u32 %v449, 7
        %v451 = vsub.s32 0, %v450
        %v452 = vrot.slane %v447, %v451
        %453 = vrot.lane.b32.xlu0 %v452, 19
        %v454 = vpop.permute.xlu0 %453
        %456 = vst.msk [vmem:[%s315 + $0xa] sm:$0x1] %vm304, %v454
        %v457 = vld [vmem:[#allocation4 + $0x4] sm:$0x1]
        %v459 = vlaneseq
        %v460 = vshrl.u32 %v459, 7
        %v461 = vsub.s32 0, %v460
        %v462 = vrot.slane %v457, %v461
        %463 = vrot.lane.b32.xlu0 %v462, 3
        %v464 = vpop.permute.xlu0 %463
        %466 = vst.msk [vmem:[#allocation2 + $0xb] sm:$0x1] %vm304, %v464
        %v467 = vld [vmem:[#allocation4 + $0x5] sm:$0x1]
        %v469 = vlaneseq
        %v470 = vshrl.u32 %v469, 7
        %v471 = vsub.s32 0, %v470
        %v472 = vrot.slane %v467, %v471
        %473 = vrot.lane.b32.xlu0 %v472, 3
        %v474 = vpop.permute.xlu0 %473
        %476 = vst.msk [vmem:[%s315 + $0xb] sm:$0x1] %vm304, %v474
        %v477 = vld [vmem:[#allocation4 + $0x4] sm:$0x1]
        %v479 = vlaneseq
        %v480 = vshrl.u32 %v479, 7
        %v481 = vsub.s32 0, %v480
        %v482 = vrot.slane %v477, %v481
        %483 = vrot.lane.b32.xlu0 %v482, 115
        %v484 = vpop.permute.xlu0 %483
        %486 = vst.msk [vmem:[#allocation2 + $0xc] sm:$0x1] %vm304, %v484
        %v487 = vld [vmem:[#allocation4 + $0x5] sm:$0x1]
        %v489 = vlaneseq
        %v490 = vshrl.u32 %v489, 7
        %v491 = vsub.s32 0, %v490
        %v492 = vrot.slane %v487, %v491
        %493 = vrot.lane.b32.xlu0 %v492, 115
        %v494 = vpop.permute.xlu0 %493
        %496 = vst.msk [vmem:[%s315 + $0xc] sm:$0x1] %vm304, %v494
        %v497 = vld [vmem:[#allocation4 + $0x4] sm:$0x1]
        %v499 = vlaneseq
        %v500 = vshrl.u32 %v499, 7
        %v501 = vsub.s32 0, %v500
        %v502 = vrot.slane %v497, %v501
        %503 = vrot.lane.b32.xlu0 %v502, 99
        %v504 = vpop.permute.xlu0 %503
        %506 = vst.msk [vmem:[#allocation2 + $0xd] sm:$0x1] %vm304, %v504
        %v507 = vld [vmem:[#allocation4 + $0x5] sm:$0x1]
        %v509 = vlaneseq
        %v510 = vshrl.u32 %v509, 7
        %v511 = vsub.s32 0, %v510
        %v512 = vrot.slane %v507, %v511
        %513 = vrot.lane.b32.xlu0 %v512, 99
        %v514 = vpop.permute.xlu0 %513
        %516 = vst.msk [vmem:[%s315 + $0xd] sm:$0x1] %vm304, %v514
        %v517 = vld [vmem:[#allocation4 + $0x4] sm:$0x1]
        %v519 = vlaneseq
        %v520 = vshrl.u32 %v519, 7
        %v521 = vsub.s32 0, %v520
        %v522 = vrot.slane %v517, %v521
        %523 = vrot.lane.b32.xlu0 %v522, 83
        %v524 = vpop.permute.xlu0 %523
        %526 = vst.msk [vmem:[#allocation2 + $0xe] sm:$0x1] %vm304, %v524
        %v527 = vld [vmem:[#allocation4 + $0x5] sm:$0x1]
        %v529 = vlaneseq
        %v530 = vshrl.u32 %v529, 7
        %v531 = vsub.s32 0, %v530
        %v532 = vrot.slane %v527, %v531
        %533 = vrot.lane.b32.xlu0 %v532, 83
        %v534 = vpop.permute.xlu0 %533
        %536 = vst.msk [vmem:[%s315 + $0xe] sm:$0x1] %vm304, %v534
        %v537 = vld [vmem:[#allocation4 + $0x4] sm:$0x1]
        %v539 = vlaneseq
        %v540 = vshrl.u32 %v539, 7
        %v541 = vsub.s32 0, %v540
        %v542 = vrot.slane %v537, %v541
        %543 = vrot.lane.b32.xlu0 %v542, 67
        %v544 = vpop.permute.xlu0 %543
        %546 = vst.msk [vmem:[#allocation2 + $0xf] sm:$0x1] %vm304, %v544
        %v547 = vld [vmem:[#allocation4 + $0x5] sm:$0x1]
        %v549 = vlaneseq
        %v550 = vshrl.u32 %v549, 7
        %v551 = vsub.s32 0, %v550
        %v552 = vrot.slane %v547, %v551
        %553 = vrot.lane.b32.xlu0 %v552, 67
        %v554 = vpop.permute.xlu0 %553
        %556 = vst.msk [vmem:[%s315 + $0xf] sm:$0x1] %vm304, %v554
        %v557 = vld [vmem:[#allocation4 + $0x4] sm:$0x1]
        %v559 = vlaneseq
        %v560 = vshrl.u32 %v559, 7
        %v561 = vsub.s32 0, %v560
        %v562 = vrot.slane %v557, %v561
        %563 = vrot.lane.b32.xlu0 %v562, 51
        %v564 = vpop.permute.xlu0 %563
        %566 = vst.msk [vmem:[#allocation2 + $0x10] sm:$0x1] %vm304, %v564
        %v567 = vld [vmem:[#allocation4 + $0x5] sm:$0x1]
        %v569 = vlaneseq
        %v570 = vshrl.u32 %v569, 7
        %v571 = vsub.s32 0, %v570
        %v572 = vrot.slane %v567, %v571
        %573 = vrot.lane.b32.xlu0 %v572, 51
        %v574 = vpop.permute.xlu0 %573
        %576 = vst.msk [vmem:[%s315 + $0x10] sm:$0x1] %vm304, %v574
        %v577 = vld [vmem:[#allocation4 + $0x4] sm:$0x1]
        %v579 = vlaneseq
        %v580 = vshrl.u32 %v579, 7
        %v581 = vsub.s32 0, %v580
        %v582 = vrot.slane %v577, %v581
        %583 = vrot.lane.b32.xlu0 %v582, 35
        %v584 = vpop.permute.xlu0 %583
        %586 = vst.msk [vmem:[#allocation2 + $0x11] sm:$0x1] %vm304, %v584
        %v587 = vld [vmem:[#allocation4 + $0x5] sm:$0x1]
        %v589 = vlaneseq
        %v590 = vshrl.u32 %v589, 7
        %v591 = vsub.s32 0, %v590
        %v592 = vrot.slane %v587, %v591
        %593 = vrot.lane.b32.xlu0 %v592, 35
        %v594 = vpop.permute.xlu0 %593
        %596 = vst.msk [vmem:[%s315 + $0x11] sm:$0x1] %vm304, %v594
        %v597 = vld [vmem:[#allocation4 + $0x4] sm:$0x1]
        %v599 = vlaneseq
        %v600 = vshrl.u32 %v599, 7
        %v601 = vsub.s32 0, %v600
        %v602 = vrot.slane %v597, %v601
        %603 = vrot.lane.b32.xlu0 %v602, 19
        %v604 = vpop.permute.xlu0 %603
        %606 = vst.msk [vmem:[#allocation2 + $0x12] sm:$0x1] %vm304, %v604
        %v607 = vld [vmem:[#allocation4 + $0x5] sm:$0x1]
        %v609 = vlaneseq
        %v610 = vshrl.u32 %v609, 7
        %v611 = vsub.s32 0, %v610
        %v612 = vrot.slane %v607, %v611
        %613 = vrot.lane.b32.xlu0 %v612, 19
        %v614 = vpop.permute.xlu0 %613
        %616 = vst.msk [vmem:[%s315 + $0x12] sm:$0x1] %vm304, %v614
        %v617 = vld [vmem:[#allocation2] sm:$0xff]
        %v618 = vld [vmem:[#allocation2 + $0x8] sm:$0xff]
        %v619 = vld [vmem:[#allocation2 + $0x10] sm:$0x3f]
        %vm620 = vcmask 130048
        %621 = vst.msk [vmem:[#allocation3] sm:$0xff] %vm620, %v617
        %622 = vst.msk [vmem:[#allocation3 + $0x8] sm:$0xff] %vm620, %v618
        %vm623 = vcmask 128000
        %624 = vst.msk [vmem:[#allocation3 + $0x10] sm:$0x3f] %vm623, %v619
        %v625 = vld [vmem:[#allocation2] sm:$0xff]
        %v626 = vld [vmem:[#allocation2 + $0x8] sm:$0xff]
        %v627 = vld [vmem:[#allocation2 + $0x10] sm:$0x3f]
        %631 = vrot.lane.b32.xlu0 %v625, 127
        %v632 = vpop.permute.xlu0 %631
        %633 = vrot.lane.b32.xlu0 %v626, 127
        %v634 = vpop.permute.xlu0 %633
        %635 = vrot.lane.b32.xlu0 %v627, 127
        %v636 = vpop.permute.xlu0 %635
        %s640 = scalar_lea.vmem [#allocation3], 24
        %641 = vst.msk [vmem:[%s640] sm:$0xff] %vm620, %v632
        %642 = vst.msk [vmem:[%s640 + $0x8] sm:$0xff] %vm620, %v634
        %643 = vst.msk [vmem:[%s640 + $0x10] sm:$0x3f] %vm623, %v636
        %v644 = vld [vmem:[#allocation2] sm:$0xff]
        %v645 = vld [vmem:[#allocation2 + $0x8] sm:$0xff]
        %v646 = vld [vmem:[#allocation2 + $0x10] sm:$0x3f]
        %650 = vrot.lane.b32.xlu0 %v644, 126
        %v651 = vpop.permute.xlu0 %650
        %652 = vrot.lane.b32.xlu0 %v645, 126
        %v653 = vpop.permute.xlu0 %652
        %654 = vrot.lane.b32.xlu0 %v646, 126
        %v655 = vpop.permute.xlu0 %654
        %s659 = scalar_lea.vmem [#allocation3], 48
        %660 = vst.msk [vmem:[%s659] sm:$0xff] %vm620, %v651
        %661 = vst.msk [vmem:[%s659 + $0x8] sm:$0xff] %vm620, %v653
        %662 = vst.msk [vmem:[%s659 + $0x10] sm:$0x3f] %vm623, %v655
        %v663 = vld [vmem:[#allocation2] sm:$0xff]
        %v664 = vld [vmem:[#allocation2 + $0x8] sm:$0xff]
        %v665 = vld [vmem:[#allocation2 + $0x10] sm:$0x3f]
        %669 = vrot.lane.b32.xlu0 %v663, 125
        %v670 = vpop.permute.xlu0 %669
        %671 = vrot.lane.b32.xlu0 %v664, 125
        %v672 = vpop.permute.xlu0 %671
        %673 = vrot.lane.b32.xlu0 %v665, 125
        %v674 = vpop.permute.xlu0 %673
        %s678 = scalar_lea.vmem [#allocation3], 72
        %679 = vst.msk [vmem:[%s678] sm:$0xff] %vm620, %v670
        %680 = vst.msk [vmem:[%s678 + $0x8] sm:$0xff] %vm620, %v672
        %681 = vst.msk [vmem:[%s678 + $0x10] sm:$0x3f] %vm623, %v674
        %v682 = vld [vmem:[#allocation2] sm:$0xff]
        %v683 = vld [vmem:[#allocation2 + $0x8] sm:$0xff]
        %v684 = vld [vmem:[#allocation2 + $0x10] sm:$0x3f]
        %688 = vrot.lane.b32.xlu0 %v682, 124
        %v689 = vpop.permute.xlu0 %688
        %690 = vrot.lane.b32.xlu0 %v683, 124
        %v691 = vpop.permute.xlu0 %690
        %692 = vrot.lane.b32.xlu0 %v684, 124
        %v693 = vpop.permute.xlu0 %692
        %s697 = scalar_lea.vmem [#allocation3], 96
        %698 = vst.msk [vmem:[%s697] sm:$0xff] %vm620, %v689
        %699 = vst.msk [vmem:[%s697 + $0x8] sm:$0xff] %vm620, %v691
        %700 = vst.msk [vmem:[%s697 + $0x10] sm:$0x3f] %vm623, %v693
        %v701 = vld [vmem:[#allocation2] sm:$0xff]
        %v702 = vld [vmem:[#allocation2 + $0x8] sm:$0xff]
        %v703 = vld [vmem:[#allocation2 + $0x10] sm:$0x3f]
        %707 = vrot.lane.b32.xlu0 %v701, 123
        %v708 = vpop.permute.xlu0 %707
        %709 = vrot.lane.b32.xlu0 %v702, 123
        %v710 = vpop.permute.xlu0 %709
        %711 = vrot.lane.b32.xlu0 %v703, 123
        %v712 = vpop.permute.xlu0 %711
        %s716 = scalar_lea.vmem [#allocation3], 120
        %717 = vst.msk [vmem:[%s716] sm:$0xff] %vm620, %v708
        %718 = vst.msk [vmem:[%s716 + $0x8] sm:$0xff] %vm620, %v710
        %719 = vst.msk [vmem:[%s716 + $0x10] sm:$0x3f] %vm623, %v712
        %v720 = vld [vmem:[#allocation2] sm:$0xff]
        %v721 = vld [vmem:[#allocation2 + $0x8] sm:$0xff]
        %v722 = vld [vmem:[#allocation2 + $0x10] sm:$0x3f]
        %726 = vrot.lane.b32.xlu0 %v720, 122
        %v727 = vpop.permute.xlu0 %726
        %728 = vrot.lane.b32.xlu0 %v721, 122
        %v729 = vpop.permute.xlu0 %728
        %730 = vrot.lane.b32.xlu0 %v722, 122
        %v731 = vpop.permute.xlu0 %730
        %s735 = scalar_lea.vmem [#allocation3], 144
        %736 = vst.msk [vmem:[%s735] sm:$0xff] %vm620, %v727
        %737 = vst.msk [vmem:[%s735 + $0x8] sm:$0xff] %vm620, %v729
        %738 = vst.msk [vmem:[%s735 + $0x10] sm:$0x3f] %vm623, %v731
        %v739 = vld [vmem:[%s315] sm:$0xff]
        %v740 = vld [vmem:[%s315 + $0x8] sm:$0xff]
        %v741 = vld [vmem:[%s315 + $0x10] sm:$0x3f]
        %s742 = scalar_lea.vmem [#allocation3], 168
        %743 = vst.msk [vmem:[%s742] sm:$0xff] %vm620, %v739
        %744 = vst.msk [vmem:[%s742 + $0x8] sm:$0xff] %vm620, %v740
        %745 = vst.msk [vmem:[%s742 + $0x10] sm:$0x3f] %vm623, %v741
        %v746 = vld [vmem:[%s315] sm:$0xff]
        %v747 = vld [vmem:[%s315 + $0x8] sm:$0xff]
        %v748 = vld [vmem:[%s315 + $0x10] sm:$0x3f]
        %752 = vrot.lane.b32.xlu0 %v746, 127
        %v753 = vpop.permute.xlu0 %752
        %754 = vrot.lane.b32.xlu0 %v747, 127
        %v755 = vpop.permute.xlu0 %754
        %756 = vrot.lane.b32.xlu0 %v748, 127
        %v757 = vpop.permute.xlu0 %756
        %s761 = scalar_lea.vmem [#allocation3], 192
        %762 = vst.msk [vmem:[%s761] sm:$0xff] %vm620, %v753
        %763 = vst.msk [vmem:[%s761 + $0x8] sm:$0xff] %vm620, %v755
        %764 = vst.msk [vmem:[%s761 + $0x10] sm:$0x3f] %vm623, %v757
        %v765 = vld [vmem:[%s315] sm:$0xff]
        %v766 = vld [vmem:[%s315 + $0x8] sm:$0xff]
        %v767 = vld [vmem:[%s315 + $0x10] sm:$0x3f]
        %771 = vrot.lane.b32.xlu0 %v765, 126
        %v772 = vpop.permute.xlu0 %771
        %773 = vrot.lane.b32.xlu0 %v766, 126
        %v774 = vpop.permute.xlu0 %773
        %775 = vrot.lane.b32.xlu0 %v767, 126
        %v776 = vpop.permute.xlu0 %775
        %s780 = scalar_lea.vmem [#allocation3], 216
        %781 = vst.msk [vmem:[%s780] sm:$0xff] %vm620, %v772
        %782 = vst.msk [vmem:[%s780 + $0x8] sm:$0xff] %vm620, %v774
        %783 = vst.msk [vmem:[%s780 + $0x10] sm:$0x3f] %vm623, %v776
        %v784 = vld [vmem:[%s315] sm:$0xff]
        %v785 = vld [vmem:[%s315 + $0x8] sm:$0xff]
        %v786 = vld [vmem:[%s315 + $0x10] sm:$0x3f]
        %790 = vrot.lane.b32.xlu0 %v784, 125
        %v791 = vpop.permute.xlu0 %790
        %792 = vrot.lane.b32.xlu0 %v785, 125
        %v793 = vpop.permute.xlu0 %792
        %794 = vrot.lane.b32.xlu0 %v786, 125
        %v795 = vpop.permute.xlu0 %794
        %s799 = scalar_lea.vmem [#allocation3], 240
        %800 = vst.msk [vmem:[%s799] sm:$0xff] %vm620, %v791
        %801 = vst.msk [vmem:[%s799 + $0x8] sm:$0xff] %vm620, %v793
        %802 = vst.msk [vmem:[%s799 + $0x10] sm:$0x3f] %vm623, %v795
        %v803 = vld [vmem:[%s315] sm:$0xff]
        %v804 = vld [vmem:[%s315 + $0x8] sm:$0xff]
        %v805 = vld [vmem:[%s315 + $0x10] sm:$0x3f]
        %809 = vrot.lane.b32.xlu0 %v803, 124
        %v810 = vpop.permute.xlu0 %809
        %811 = vrot.lane.b32.xlu0 %v804, 124
        %v812 = vpop.permute.xlu0 %811
        %813 = vrot.lane.b32.xlu0 %v805, 124
        %v814 = vpop.permute.xlu0 %813
        %s818 = scalar_lea.vmem [#allocation3], 264
        %819 = vst.msk [vmem:[%s818] sm:$0xff] %vm620, %v810
        %820 = vst.msk [vmem:[%s818 + $0x8] sm:$0xff] %vm620, %v812
        %821 = vst.msk [vmem:[%s818 + $0x10] sm:$0x3f] %vm623, %v814
        %v822 = vld [vmem:[%s315] sm:$0xff]
        %v823 = vld [vmem:[%s315 + $0x8] sm:$0xff]
        %v824 = vld [vmem:[%s315 + $0x10] sm:$0x3f]
        %828 = vrot.lane.b32.xlu0 %v822, 123
        %v829 = vpop.permute.xlu0 %828
        %830 = vrot.lane.b32.xlu0 %v823, 123
        %v831 = vpop.permute.xlu0 %830
        %832 = vrot.lane.b32.xlu0 %v824, 123
        %v833 = vpop.permute.xlu0 %832
        %s837 = scalar_lea.vmem [#allocation3], 288
        %838 = vst.msk [vmem:[%s837] sm:$0xff] %vm620, %v829
        %839 = vst.msk [vmem:[%s837 + $0x8] sm:$0xff] %vm620, %v831
        %840 = vst.msk [vmem:[%s837 + $0x10] sm:$0x3f] %vm623, %v833
        %v841 = vld [vmem:[%s315] sm:$0xff]
        %v842 = vld [vmem:[%s315 + $0x8] sm:$0xff]
        %v843 = vld [vmem:[%s315 + $0x10] sm:$0x3f]
        %847 = vrot.lane.b32.xlu0 %v841, 122
        %v848 = vpop.permute.xlu0 %847
        %849 = vrot.lane.b32.xlu0 %v842, 122
        %v850 = vpop.permute.xlu0 %849
        %851 = vrot.lane.b32.xlu0 %v843, 122
        %v852 = vpop.permute.xlu0 %851
        %s856 = scalar_lea.vmem [#allocation3], 312
        %857 = vst.msk [vmem:[%s856] sm:$0xff] %vm620, %v848
        %858 = vst.msk [vmem:[%s856 + $0x8] sm:$0xff] %vm620, %v850
        %859 = vst.msk [vmem:[%s856 + $0x10] sm:$0x3f] %vm623, %v852
        %s860 = sld [smem:[#allocation6]]
        %v861 = vld [vmem:[#allocation3] sm:$0xff]
        %v862 = vld [vmem:[#allocation3 + $0x8] sm:$0xff]
        %v863 = vstv %s860
        %v864 = vmul.f32 %v863, %v861
        %v865 = vmul.f32 %v863, %v862
        %v866 = vadd.f32 %v864, 0.0
        %v867 = vadd.f32 %v865, 0.0
        %s868 = sld [smem:[#allocation6 + $0x1]]
        %v869 = vld [vmem:[%s640] sm:$0xff]
        %v870 = vld [vmem:[%s640 + $0x8] sm:$0xff]
        %v871 = vstv %s868
        %v872 = vmul.f32 %v871, %v869
        %v873 = vmul.f32 %v871, %v870
        %v874 = vadd.f32 %v866, %v872
        %v875 = vadd.f32 %v867, %v873
        %s876 = sld [smem:[#allocation6 + $0x2]]
        %v877 = vld [vmem:[%s659] sm:$0xff]
        %v878 = vld [vmem:[%s659 + $0x8] sm:$0xff]
        %v879 = vstv %s876
        %v880 = vmul.f32 %v879, %v877
        %v881 = vmul.f32 %v879, %v878
        %v882 = vadd.f32 %v874, %v880
        %v883 = vadd.f32 %v875, %v881
        %s884 = sld [smem:[#allocation6 + $0x3]]
        %v885 = vld [vmem:[%s678] sm:$0xff]
        %v886 = vld [vmem:[%s678 + $0x8] sm:$0xff]
        %v887 = vstv %s884
        %v888 = vmul.f32 %v887, %v885
        %v889 = vmul.f32 %v887, %v886
        %v890 = vadd.f32 %v882, %v888
        %v891 = vadd.f32 %v883, %v889
        %s892 = sld [smem:[#allocation6 + $0x4]]
        %v893 = vld [vmem:[%s697] sm:$0xff]
        %v894 = vld [vmem:[%s697 + $0x8] sm:$0xff]
        %v895 = vstv %s892
        %v896 = vmul.f32 %v895, %v893
        %v897 = vmul.f32 %v895, %v894
        %v898 = vadd.f32 %v890, %v896
        %v899 = vadd.f32 %v891, %v897
        %s900 = sld [smem:[#allocation6 + $0x5]]
        %v901 = vld [vmem:[%s716] sm:$0xff]
        %v902 = vld [vmem:[%s716 + $0x8] sm:$0xff]
        %v903 = vstv %s900
        %v904 = vmul.f32 %v903, %v901
        %v905 = vmul.f32 %v903, %v902
        %v906 = vadd.f32 %v898, %v904
        %v907 = vadd.f32 %v899, %v905
        %s908 = sld [smem:[#allocation6 + $0x6]]
        %v909 = vld [vmem:[%s735] sm:$0xff]
        %v910 = vld [vmem:[%s735 + $0x8] sm:$0xff]
        %v911 = vstv %s908
        %v912 = vmul.f32 %v911, %v909
        %v913 = vmul.f32 %v911, %v910
        %v914 = vadd.f32 %v906, %v912
        %v915 = vadd.f32 %v907, %v913
        %s916 = sld [smem:[#allocation6 + $0x7]]
        %v917 = vld [vmem:[#allocation3 + $0x1] sm:$0xff]
        %v918 = vld [vmem:[#allocation3 + $0x9] sm:$0xff]
        %v919 = vstv %s916
        %v920 = vmul.f32 %v919, %v917
        %v921 = vmul.f32 %v919, %v918
        %v922 = vadd.f32 %v920, 0.0
        %v923 = vadd.f32 %v921, 0.0
        %s924 = sld [smem:[#allocation6 + $0x8]]
        %v925 = vld [vmem:[%s640 + $0x1] sm:$0xff]
        %v926 = vld [vmem:[%s640 + $0x9] sm:$0xff]
        %v927 = vstv %s924
        %v928 = vmul.f32 %v927, %v925
        %v929 = vmul.f32 %v927, %v926
        %v930 = vadd.f32 %v922, %v928
        %v931 = vadd.f32 %v923, %v929
        %s932 = sld [smem:[#allocation6 + $0x9]]
        %v933 = vld [vmem:[%s659 + $0x1] sm:$0xff]
        %v934 = vld [vmem:[%s659 + $0x9] sm:$0xff]
        %v935 = vstv %s932
        %v936 = vmul.f32 %v935, %v933
        %v937 = vmul.f32 %v935, %v934
        %v938 = vadd.f32 %v930, %v936
        %v939 = vadd.f32 %v931, %v937
        %s940 = sld [smem:[#allocation6 + $0xa]]
        %v941 = vld [vmem:[%s678 + $0x1] sm:$0xff]
        %v942 = vld [vmem:[%s678 + $0x9] sm:$0xff]
        %v943 = vstv %s940
        %v944 = vmul.f32 %v943, %v941
        %v945 = vmul.f32 %v943, %v942
        %v946 = vadd.f32 %v938, %v944
        %v947 = vadd.f32 %v939, %v945
        %s948 = sld [smem:[#allocation6 + $0xb]]
        %v949 = vld [vmem:[%s697 + $0x1] sm:$0xff]
        %v950 = vld [vmem:[%s697 + $0x9] sm:$0xff]
        %v951 = vstv %s948
        %v952 = vmul.f32 %v951, %v949
        %v953 = vmul.f32 %v951, %v950
        %v954 = vadd.f32 %v946, %v952
        %v955 = vadd.f32 %v947, %v953
        %s956 = sld [smem:[#allocation6 + $0xc]]
        %v957 = vld [vmem:[%s716 + $0x1] sm:$0xff]
        %v958 = vld [vmem:[%s716 + $0x9] sm:$0xff]
        %v959 = vstv %s956
        %v960 = vmul.f32 %v959, %v957
        %v961 = vmul.f32 %v959, %v958
        %v962 = vadd.f32 %v954, %v960
        %v963 = vadd.f32 %v955, %v961
        %s964 = sld [smem:[#allocation6 + $0xd]]
        %v965 = vld [vmem:[%s735 + $0x1] sm:$0xff]
        %v966 = vld [vmem:[%s735 + $0x9] sm:$0xff]
        %v967 = vstv %s964
        %v968 = vmul.f32 %v967, %v965
        %v969 = vmul.f32 %v967, %v966
        %v970 = vadd.f32 %v962, %v968
        %v971 = vadd.f32 %v963, %v969
        %s972 = sld [smem:[#allocation6 + $0xe]]
        %v973 = vld [vmem:[#allocation3 + $0x2] sm:$0xff]
        %v974 = vld [vmem:[#allocation3 + $0xa] sm:$0xff]
        %v975 = vstv %s972
        %v976 = vmul.f32 %v975, %v973
        %v977 = vmul.f32 %v975, %v974
        %v978 = vadd.f32 %v914, %v976
        %v979 = vadd.f32 %v915, %v977
        %s980 = sld [smem:[#allocation6 + $0xf]]
        %v981 = vld [vmem:[%s640 + $0x2] sm:$0xff]
        %v982 = vld [vmem:[%s640 + $0xa] sm:$0xff]
        %v983 = vstv %s980
        %v984 = vmul.f32 %v983, %v981
        %v985 = vmul.f32 %v983, %v982
        %v986 = vadd.f32 %v978, %v984
        %v987 = vadd.f32 %v979, %v985
        %s988 = sld [smem:[#allocation6 + $0x10]]
        %v989 = vld [vmem:[%s659 + $0x2] sm:$0xff]
        %v990 = vld [vmem:[%s659 + $0xa] sm:$0xff]
        %v991 = vstv %s988
        %v992 = vmul.f32 %v991, %v989
        %v993 = vmul.f32 %v991, %v990
        %v994 = vadd.f32 %v986, %v992
        %v995 = vadd.f32 %v987, %v993
        %s996 = sld [smem:[#allocation6 + $0x11]]
        %v997 = vld [vmem:[%s678 + $0x2] sm:$0xff]
        %v998 = vld [vmem:[%s678 + $0xa] sm:$0xff]
        %v999 = vstv %s996
        %v1000 = vmul.f32 %v999, %v997
        %v1001 = vmul.f32 %v999, %v998
        %v1002 = vadd.f32 %v994, %v1000
        %v1003 = vadd.f32 %v995, %v1001
        %s1004 = sld [smem:[#allocation6 + $0x12]]
        %v1005 = vld [vmem:[%s697 + $0x2] sm:$0xff]
        %v1006 = vld [vmem:[%s697 + $0xa] sm:$0xff]
        %v1007 = vstv %s1004
        %v1008 = vmul.f32 %v1007, %v1005
        %v1009 = vmul.f32 %v1007, %v1006
        %v1010 = vadd.f32 %v1002, %v1008
        %v1011 = vadd.f32 %v1003, %v1009
        %s1012 = sld [smem:[#allocation6 + $0x13]]
        %v1013 = vld [vmem:[%s716 + $0x2] sm:$0xff]
        %v1014 = vld [vmem:[%s716 + $0xa] sm:$0xff]
        %v1015 = vstv %s1012
        %v1016 = vmul.f32 %v1015, %v1013
        %v1017 = vmul.f32 %v1015, %v1014
        %v1018 = vadd.f32 %v1010, %v1016
        %v1019 = vadd.f32 %v1011, %v1017
        %s1020 = sld [smem:[#allocation6 + $0x14]]
        %v1021 = vld [vmem:[%s735 + $0x2] sm:$0xff]
        %v1022 = vld [vmem:[%s735 + $0xa] sm:$0xff]
        %v1023 = vstv %s1020
        %v1024 = vmul.f32 %v1023, %v1021
        %v1025 = vmul.f32 %v1023, %v1022
        %v1026 = vadd.f32 %v1018, %v1024
        %v1027 = vadd.f32 %v1019, %v1025
        %s1028 = sld [smem:[#allocation6 + $0x15]]
        %v1029 = vld [vmem:[#allocation3 + $0x3] sm:$0xff]
        %v1030 = vld [vmem:[#allocation3 + $0xb] sm:$0xff]
        %v1031 = vstv %s1028
        %v1032 = vmul.f32 %v1031, %v1029
        %v1033 = vmul.f32 %v1031, %v1030
        %v1034 = vadd.f32 %v970, %v1032
        %v1035 = vadd.f32 %v971, %v1033
        %s1036 = sld [smem:[#allocation6 + $0x16]]
        %v1037 = vld [vmem:[%s640 + $0x3] sm:$0xff]
        %v1038 = vld [vmem:[%s640 + $0xb] sm:$0xff]
        %v1039 = vstv %s1036
        %v1040 = vmul.f32 %v1039, %v1037
        %v1041 = vmul.f32 %v1039, %v1038
        %v1042 = vadd.f32 %v1034, %v1040
        %v1043 = vadd.f32 %v1035, %v1041
        %s1044 = sld [smem:[#allocation6 + $0x17]]
        %v1045 = vld [vmem:[%s659 + $0x3] sm:$0xff]
        %v1046 = vld [vmem:[%s659 + $0xb] sm:$0xff]
        %v1047 = vstv %s1044
        %v1048 = vmul.f32 %v1047, %v1045
        %v1049 = vmul.f32 %v1047, %v1046
        %v1050 = vadd.f32 %v1042, %v1048
        %v1051 = vadd.f32 %v1043, %v1049
        %s1052 = sld [smem:[#allocation6 + $0x18]]
        %v1053 = vld [vmem:[%s678 + $0x3] sm:$0xff]
        %v1054 = vld [vmem:[%s678 + $0xb] sm:$0xff]
        %v1055 = vstv %s1052
        %v1056 = vmul.f32 %v1055, %v1053
        %v1057 = vmul.f32 %v1055, %v1054
        %v1058 = vadd.f32 %v1050, %v1056
        %v1059 = vadd.f32 %v1051, %v1057
        %s1060 = sld [smem:[#allocation6 + $0x19]]
        %v1061 = vld [vmem:[%s697 + $0x3] sm:$0xff]
        %v1062 = vld [vmem:[%s697 + $0xb] sm:$0xff]
        %v1063 = vstv %s1060
        %v1064 = vmul.f32 %v1063, %v1061
        %v1065 = vmul.f32 %v1063, %v1062
        %v1066 = vadd.f32 %v1058, %v1064
        %v1067 = vadd.f32 %v1059, %v1065
        %s1068 = sld [smem:[#allocation6 + $0x1a]]
        %v1069 = vld [vmem:[%s716 + $0x3] sm:$0xff]
        %v1070 = vld [vmem:[%s716 + $0xb] sm:$0xff]
        %v1071 = vstv %s1068
        %v1072 = vmul.f32 %v1071, %v1069
        %v1073 = vmul.f32 %v1071, %v1070
        %v1074 = vadd.f32 %v1066, %v1072
        %v1075 = vadd.f32 %v1067, %v1073
        %s1076 = sld [smem:[#allocation6 + $0x1b]]
        %v1077 = vld [vmem:[%s735 + $0x3] sm:$0xff]
        %v1078 = vld [vmem:[%s735 + $0xb] sm:$0xff]
        %v1079 = vstv %s1076
        %v1080 = vmul.f32 %v1079, %v1077
        %v1081 = vmul.f32 %v1079, %v1078
        %v1082 = vadd.f32 %v1074, %v1080
        %v1083 = vadd.f32 %v1075, %v1081
        %s1084 = sld [smem:[#allocation6 + $0x1c]]
        %v1085 = vld [vmem:[#allocation3 + $0x4] sm:$0xff]
        %v1086 = vld [vmem:[#allocation3 + $0xc] sm:$0xff]
        %v1087 = vstv %s1084
        %v1088 = vmul.f32 %v1087, %v1085
        %v1089 = vmul.f32 %v1087, %v1086
        %v1090 = vadd.f32 %v1026, %v1088
        %v1091 = vadd.f32 %v1027, %v1089
        %s1092 = sld [smem:[#allocation6 + $0x1d]]
        %v1093 = vld [vmem:[%s640 + $0x4] sm:$0xff]
        %v1094 = vld [vmem:[%s640 + $0xc] sm:$0xff]
        %v1095 = vstv %s1092
        %v1096 = vmul.f32 %v1095, %v1093
        %v1097 = vmul.f32 %v1095, %v1094
        %v1098 = vadd.f32 %v1090, %v1096
        %v1099 = vadd.f32 %v1091, %v1097
        %s1100 = sld [smem:[#allocation6 + $0x1e]]
        %v1101 = vld [vmem:[%s659 + $0x4] sm:$0xff]
        %v1102 = vld [vmem:[%s659 + $0xc] sm:$0xff]
        %v1103 = vstv %s1100
        %v1104 = vmul.f32 %v1103, %v1101
        %v1105 = vmul.f32 %v1103, %v1102
        %v1106 = vadd.f32 %v1098, %v1104
        %v1107 = vadd.f32 %v1099, %v1105
        %s1108 = sld [smem:[#allocation6 + $0x1f]]
        %v1109 = vld [vmem:[%s678 + $0x4] sm:$0xff]
        %v1110 = vld [vmem:[%s678 + $0xc] sm:$0xff]
        %v1111 = vstv %s1108
        %v1112 = vmul.f32 %v1111, %v1109
        %v1113 = vmul.f32 %v1111, %v1110
        %v1114 = vadd.f32 %v1106, %v1112
        %v1115 = vadd.f32 %v1107, %v1113
        %s1116 = sld [smem:[#allocation6 + $0x20]]
        %v1117 = vld [vmem:[%s697 + $0x4] sm:$0xff]
        %v1118 = vld [vmem:[%s697 + $0xc] sm:$0xff]
        %v1119 = vstv %s1116
        %v1120 = vmul.f32 %v1119, %v1117
        %v1121 = vmul.f32 %v1119, %v1118
        %v1122 = vadd.f32 %v1114, %v1120
        %v1123 = vadd.f32 %v1115, %v1121
        %s1124 = sld [smem:[#allocation6 + $0x21]]
        %v1125 = vld [vmem:[%s716 + $0x4] sm:$0xff]
        %v1126 = vld [vmem:[%s716 + $0xc] sm:$0xff]
        %v1127 = vstv %s1124
        %v1128 = vmul.f32 %v1127, %v1125
        %v1129 = vmul.f32 %v1127, %v1126
        %v1130 = vadd.f32 %v1122, %v1128
        %v1131 = vadd.f32 %v1123, %v1129
        %s1132 = sld [smem:[#allocation6 + $0x22]]
        %v1133 = vld [vmem:[%s735 + $0x4] sm:$0xff]
        %v1134 = vld [vmem:[%s735 + $0xc] sm:$0xff]
        %v1135 = vstv %s1132
        %v1136 = vmul.f32 %v1135, %v1133
        %v1137 = vmul.f32 %v1135, %v1134
        %v1138 = vadd.f32 %v1130, %v1136
        %v1139 = vadd.f32 %v1131, %v1137
        %s1140 = sld [smem:[#allocation6 + $0x23]]
        %v1141 = vld [vmem:[#allocation3 + $0x5] sm:$0xff]
        %v1142 = vld [vmem:[#allocation3 + $0xd] sm:$0xff]
        %v1143 = vstv %s1140
        %v1144 = vmul.f32 %v1143, %v1141
        %v1145 = vmul.f32 %v1143, %v1142
        %v1146 = vadd.f32 %v1082, %v1144
        %v1147 = vadd.f32 %v1083, %v1145
        %s1148 = sld [smem:[#allocation6 + $0x24]]
        %v1149 = vld [vmem:[%s640 + $0x5] sm:$0xff]
        %v1150 = vld [vmem:[%s640 + $0xd] sm:$0xff]
        %v1151 = vstv %s1148
        %v1152 = vmul.f32 %v1151, %v1149
        %v1153 = vmul.f32 %v1151, %v1150
        %v1154 = vadd.f32 %v1146, %v1152
        %v1155 = vadd.f32 %v1147, %v1153
        %s1156 = sld [smem:[#allocation6 + $0x25]]
        %v1157 = vld [vmem:[%s659 + $0x5] sm:$0xff]
        %v1158 = vld [vmem:[%s659 + $0xd] sm:$0xff]
        %v1159 = vstv %s1156
        %v1160 = vmul.f32 %v1159, %v1157
        %v1161 = vmul.f32 %v1159, %v1158
        %v1162 = vadd.f32 %v1154, %v1160
        %v1163 = vadd.f32 %v1155, %v1161
        %s1164 = sld [smem:[#allocation6 + $0x26]]
        %v1165 = vld [vmem:[%s678 + $0x5] sm:$0xff]
        %v1166 = vld [vmem:[%s678 + $0xd] sm:$0xff]
        %v1167 = vstv %s1164
        %v1168 = vmul.f32 %v1167, %v1165
        %v1169 = vmul.f32 %v1167, %v1166
        %v1170 = vadd.f32 %v1162, %v1168
        %v1171 = vadd.f32 %v1163, %v1169
        %s1172 = sld [smem:[#allocation6 + $0x27]]
        %v1173 = vld [vmem:[%s697 + $0x5] sm:$0xff]
        %v1174 = vld [vmem:[%s697 + $0xd] sm:$0xff]
        %v1175 = vstv %s1172
        %v1176 = vmul.f32 %v1175, %v1173
        %v1177 = vmul.f32 %v1175, %v1174
        %v1178 = vadd.f32 %v1170, %v1176
        %v1179 = vadd.f32 %v1171, %v1177
        %s1180 = sld [smem:[#allocation6 + $0x28]]
        %v1181 = vld [vmem:[%s716 + $0x5] sm:$0xff]
        %v1182 = vld [vmem:[%s716 + $0xd] sm:$0xff]
        %v1183 = vstv %s1180
        %v1184 = vmul.f32 %v1183, %v1181
        %v1185 = vmul.f32 %v1183, %v1182
        %v1186 = vadd.f32 %v1178, %v1184
        %v1187 = vadd.f32 %v1179, %v1185
        %s1188 = sld [smem:[#allocation6 + $0x29]]
        %v1189 = vld [vmem:[%s735 + $0x5] sm:$0xff]
        %v1190 = vld [vmem:[%s735 + $0xd] sm:$0xff]
        %v1191 = vstv %s1188
        %v1192 = vmul.f32 %v1191, %v1189
        %v1193 = vmul.f32 %v1191, %v1190
        %v1194 = vadd.f32 %v1186, %v1192
        %v1195 = vadd.f32 %v1187, %v1193
        %s1196 = sld [smem:[#allocation6 + $0x2a]]
        %v1197 = vld [vmem:[#allocation3 + $0x6] sm:$0xff]
        %v1198 = vld [vmem:[#allocation3 + $0xe] sm:$0xff]
        %v1199 = vstv %s1196
        %v1200 = vmul.f32 %v1199, %v1197
        %v1201 = vmul.f32 %v1199, %v1198
        %v1202 = vadd.f32 %v1138, %v1200
        %v1203 = vadd.f32 %v1139, %v1201
        %s1204 = sld [smem:[#allocation6 + $0x2b]]
        %v1205 = vld [vmem:[%s640 + $0x6] sm:$0xff]
        %v1206 = vld [vmem:[%s640 + $0xe] sm:$0xff]
        %v1207 = vstv %s1204
        %v1208 = vmul.f32 %v1207, %v1205
        %v1209 = vmul.f32 %v1207, %v1206
        %v1210 = vadd.f32 %v1202, %v1208
        %v1211 = vadd.f32 %v1203, %v1209
        %s1212 = sld [smem:[#allocation6 + $0x2c]]
        %v1213 = vld [vmem:[%s659 + $0x6] sm:$0xff]
        %v1214 = vld [vmem:[%s659 + $0xe] sm:$0xff]
        %v1215 = vstv %s1212
        %v1216 = vmul.f32 %v1215, %v1213
        %v1217 = vmul.f32 %v1215, %v1214
        %v1218 = vadd.f32 %v1210, %v1216
        %v1219 = vadd.f32 %v1211, %v1217
        %s1220 = sld [smem:[#allocation6 + $0x2d]]
        %v1221 = vld [vmem:[%s678 + $0x6] sm:$0xff]
        %v1222 = vld [vmem:[%s678 + $0xe] sm:$0xff]
        %v1223 = vstv %s1220
        %v1224 = vmul.f32 %v1223, %v1221
        %v1225 = vmul.f32 %v1223, %v1222
        %v1226 = vadd.f32 %v1218, %v1224
        %v1227 = vadd.f32 %v1219, %v1225
        %s1228 = sld [smem:[#allocation6 + $0x2e]]
        %v1229 = vld [vmem:[%s697 + $0x6] sm:$0xff]
        %v1230 = vld [vmem:[%s697 + $0xe] sm:$0xff]
        %v1231 = vstv %s1228
        %v1232 = vmul.f32 %v1231, %v1229
        %v1233 = vmul.f32 %v1231, %v1230
        %v1234 = vadd.f32 %v1226, %v1232
        %v1235 = vadd.f32 %v1227, %v1233
        %s1236 = sld [smem:[#allocation6 + $0x2f]]
        %v1237 = vld [vmem:[%s716 + $0x6] sm:$0xff]
        %v1238 = vld [vmem:[%s716 + $0xe] sm:$0xff]
        %v1239 = vstv %s1236
        %v1240 = vmul.f32 %v1239, %v1237
        %v1241 = vmul.f32 %v1239, %v1238
        %v1242 = vadd.f32 %v1234, %v1240
        %v1243 = vadd.f32 %v1235, %v1241
        %s1244 = sld [smem:[#allocation6 + $0x30]]
        %v1245 = vld [vmem:[%s735 + $0x6] sm:$0xff]
        %v1246 = vld [vmem:[%s735 + $0xe] sm:$0xff]
        %v1247 = vstv %s1244
        %v1248 = vmul.f32 %v1247, %v1245
        %v1249 = vmul.f32 %v1247, %v1246
        %v1250 = vadd.f32 %v1242, %v1248
        %v1251 = vadd.f32 %v1243, %v1249
        %s1252 = sld [smem:[#allocation6 + $0x31]]
        %v1253 = vld [vmem:[%s742] sm:$0xff]
        %v1254 = vld [vmem:[%s742 + $0x8] sm:$0xff]
        %v1255 = vstv %s1252
        %v1256 = vmul.f32 %v1255, %v1253
        %v1257 = vmul.f32 %v1255, %v1254
        %v1258 = vadd.f32 %v1256, 0.0
        %v1259 = vadd.f32 %v1257, 0.0
        %s1260 = sld [smem:[#allocation6 + $0x32]]
        %v1261 = vld [vmem:[%s761] sm:$0xff]
        %v1262 = vld [vmem:[%s761 + $0x8] sm:$0xff]
        %v1263 = vstv %s1260
        %v1264 = vmul.f32 %v1263, %v1261
        %v1265 = vmul.f32 %v1263, %v1262
        %v1266 = vadd.f32 %v1258, %v1264
        %v1267 = vadd.f32 %v1259, %v1265
        %s1268 = sld [smem:[#allocation6 + $0x33]]
        %v1269 = vld [vmem:[%s780] sm:$0xff]
        %v1270 = vld [vmem:[%s780 + $0x8] sm:$0xff]
        %v1271 = vstv %s1268
        %v1272 = vmul.f32 %v1271, %v1269
        %v1273 = vmul.f32 %v1271, %v1270
        %v1274 = vadd.f32 %v1266, %v1272
        %v1275 = vadd.f32 %v1267, %v1273
        %s1276 = sld [smem:[#allocation6 + $0x34]]
        %v1277 = vld [vmem:[%s799] sm:$0xff]
        %v1278 = vld [vmem:[%s799 + $0x8] sm:$0xff]
        %v1279 = vstv %s1276
        %v1280 = vmul.f32 %v1279, %v1277
        %v1281 = vmul.f32 %v1279, %v1278
        %v1282 = vadd.f32 %v1274, %v1280
        %v1283 = vadd.f32 %v1275, %v1281
        %s1284 = sld [smem:[#allocation6 + $0x35]]
        %v1285 = vld [vmem:[%s818] sm:$0xff]
        %v1286 = vld [vmem:[%s818 + $0x8] sm:$0xff]
        %v1287 = vstv %s1284
        %v1288 = vmul.f32 %v1287, %v1285
        %v1289 = vmul.f32 %v1287, %v1286
        %v1290 = vadd.f32 %v1282, %v1288
        %v1291 = vadd.f32 %v1283, %v1289
        %s1292 = sld [smem:[#allocation6 + $0x36]]
        %v1293 = vld [vmem:[%s837] sm:$0xff]
        %v1294 = vld [vmem:[%s837 + $0x8] sm:$0xff]
        %v1295 = vstv %s1292
        %v1296 = vmul.f32 %v1295, %v1293
        %v1297 = vmul.f32 %v1295, %v1294
        %v1298 = vadd.f32 %v1290, %v1296
        %v1299 = vadd.f32 %v1291, %v1297
        %s1300 = sld [smem:[#allocation6 + $0x37]]
        %v1301 = vld [vmem:[%s856] sm:$0xff]
        %v1302 = vld [vmem:[%s856 + $0x8] sm:$0xff]
        %v1303 = vstv %s1300
        %v1304 = vmul.f32 %v1303, %v1301
        %v1305 = vmul.f32 %v1303, %v1302
        %v1306 = vadd.f32 %v1298, %v1304
        %v1307 = vadd.f32 %v1299, %v1305
        %s1308 = sld [smem:[#allocation6 + $0x38]]
        %v1309 = vld [vmem:[%s742 + $0x1] sm:$0xff]
        %v1310 = vld [vmem:[%s742 + $0x9] sm:$0xff]
        %v1311 = vstv %s1308
        %v1312 = vmul.f32 %v1311, %v1309
        %v1313 = vmul.f32 %v1311, %v1310
        %v1314 = vadd.f32 %v1312, 0.0
        %v1315 = vadd.f32 %v1313, 0.0
        %s1316 = sld [smem:[#allocation6 + $0x39]]
        %v1317 = vld [vmem:[%s761 + $0x1] sm:$0xff]
        %v1318 = vld [vmem:[%s761 + $0x9] sm:$0xff]
        %v1319 = vstv %s1316
        %v1320 = vmul.f32 %v1319, %v1317
        %v1321 = vmul.f32 %v1319, %v1318
        %v1322 = vadd.f32 %v1314, %v1320
        %v1323 = vadd.f32 %v1315, %v1321
        %s1324 = sld [smem:[#allocation6 + $0x3a]]
        %v1325 = vld [vmem:[%s780 + $0x1] sm:$0xff]
        %v1326 = vld [vmem:[%s780 + $0x9] sm:$0xff]
        %v1327 = vstv %s1324
        %v1328 = vmul.f32 %v1327, %v1325
        %v1329 = vmul.f32 %v1327, %v1326
        %v1330 = vadd.f32 %v1322, %v1328
        %v1331 = vadd.f32 %v1323, %v1329
        %s1332 = sld [smem:[#allocation6 + $0x3b]]
        %v1333 = vld [vmem:[%s799 + $0x1] sm:$0xff]
        %v1334 = vld [vmem:[%s799 + $0x9] sm:$0xff]
        %v1335 = vstv %s1332
        %v1336 = vmul.f32 %v1335, %v1333
        %v1337 = vmul.f32 %v1335, %v1334
        %v1338 = vadd.f32 %v1330, %v1336
        %v1339 = vadd.f32 %v1331, %v1337
        %s1340 = sld [smem:[#allocation6 + $0x3c]]
        %v1341 = vld [vmem:[%s818 + $0x1] sm:$0xff]
        %v1342 = vld [vmem:[%s818 + $0x9] sm:$0xff]
        %v1343 = vstv %s1340
        %v1344 = vmul.f32 %v1343, %v1341
        %v1345 = vmul.f32 %v1343, %v1342
        %v1346 = vadd.f32 %v1338, %v1344
        %v1347 = vadd.f32 %v1339, %v1345
        %s1348 = sld [smem:[#allocation6 + $0x3d]]
        %v1349 = vld [vmem:[%s837 + $0x1] sm:$0xff]
        %v1350 = vld [vmem:[%s837 + $0x9] sm:$0xff]
        %v1351 = vstv %s1348
        %v1352 = vmul.f32 %v1351, %v1349
        %v1353 = vmul.f32 %v1351, %v1350
        %v1354 = vadd.f32 %v1346, %v1352
        %v1355 = vadd.f32 %v1347, %v1353
        %s1356 = sld [smem:[#allocation6 + $0x3e]]
        %v1357 = vld [vmem:[%s856 + $0x1] sm:$0xff]
        %v1358 = vld [vmem:[%s856 + $0x9] sm:$0xff]
        %v1359 = vstv %s1356
        %v1360 = vmul.f32 %v1359, %v1357
        %v1361 = vmul.f32 %v1359, %v1358
        %v1362 = vadd.f32 %v1354, %v1360
        %v1363 = vadd.f32 %v1355, %v1361
        %s1364 = sld [smem:[#allocation6 + $0x3f]]
        %v1365 = vld [vmem:[%s742 + $0x2] sm:$0xff]
        %v1366 = vld [vmem:[%s742 + $0xa] sm:$0xff]
        %v1367 = vstv %s1364
        %v1368 = vmul.f32 %v1367, %v1365
        %v1369 = vmul.f32 %v1367, %v1366
        %v1370 = vadd.f32 %v1306, %v1368
        %v1371 = vadd.f32 %v1307, %v1369
        %s1372 = sld [smem:[#allocation6 + $0x40]]
        %v1373 = vld [vmem:[%s761 + $0x2] sm:$0xff]
        %v1374 = vld [vmem:[%s761 + $0xa] sm:$0xff]
        %v1375 = vstv %s1372
        %v1376 = vmul.f32 %v1375, %v1373
        %v1377 = vmul.f32 %v1375, %v1374
        %v1378 = vadd.f32 %v1370, %v1376
        %v1379 = vadd.f32 %v1371, %v1377
        %s1380 = sld [smem:[#allocation6 + $0x41]]
        %v1381 = vld [vmem:[%s780 + $0x2] sm:$0xff]
        %v1382 = vld [vmem:[%s780 + $0xa] sm:$0xff]
        %v1383 = vstv %s1380
        %v1384 = vmul.f32 %v1383, %v1381
        %v1385 = vmul.f32 %v1383, %v1382
        %v1386 = vadd.f32 %v1378, %v1384
        %v1387 = vadd.f32 %v1379, %v1385
        %s1388 = sld [smem:[#allocation6 + $0x42]]
        %v1389 = vld [vmem:[%s799 + $0x2] sm:$0xff]
        %v1390 = vld [vmem:[%s799 + $0xa] sm:$0xff]
        %v1391 = vstv %s1388
        %v1392 = vmul.f32 %v1391, %v1389
        %v1393 = vmul.f32 %v1391, %v1390
        %v1394 = vadd.f32 %v1386, %v1392
        %v1395 = vadd.f32 %v1387, %v1393
        %s1396 = sld [smem:[#allocation6 + $0x43]]
        %v1397 = vld [vmem:[%s818 + $0x2] sm:$0xff]
        %v1398 = vld [vmem:[%s818 + $0xa] sm:$0xff]
        %v1399 = vstv %s1396
        %v1400 = vmul.f32 %v1399, %v1397
        %v1401 = vmul.f32 %v1399, %v1398
        %v1402 = vadd.f32 %v1394, %v1400
        %v1403 = vadd.f32 %v1395, %v1401
        %s1404 = sld [smem:[#allocation6 + $0x44]]
        %v1405 = vld [vmem:[%s837 + $0x2] sm:$0xff]
        %v1406 = vld [vmem:[%s837 + $0xa] sm:$0xff]
        %v1407 = vstv %s1404
        %v1408 = vmul.f32 %v1407, %v1405
        %v1409 = vmul.f32 %v1407, %v1406
        %v1410 = vadd.f32 %v1402, %v1408
        %v1411 = vadd.f32 %v1403, %v1409
        %s1412 = sld [smem:[#allocation6 + $0x45]]
        %v1413 = vld [vmem:[%s856 + $0x2] sm:$0xff]
        %v1414 = vld [vmem:[%s856 + $0xa] sm:$0xff]
        %v1415 = vstv %s1412
        %v1416 = vmul.f32 %v1415, %v1413
        %v1417 = vmul.f32 %v1415, %v1414
        %v1418 = vadd.f32 %v1410, %v1416
        %v1419 = vadd.f32 %v1411, %v1417
        %s1420 = sld [smem:[#allocation6 + $0x46]]
        %v1421 = vld [vmem:[%s742 + $0x3] sm:$0xff]
        %v1422 = vld [vmem:[%s742 + $0xb] sm:$0xff]
        %v1423 = vstv %s1420
        %v1424 = vmul.f32 %v1423, %v1421
        %v1425 = vmul.f32 %v1423, %v1422
        %v1426 = vadd.f32 %v1362, %v1424
        %v1427 = vadd.f32 %v1363, %v1425
        %s1428 = sld [smem:[#allocation6 + $0x47]]
        %v1429 = vld [vmem:[%s761 + $0x3] sm:$0xff]
        %v1430 = vld [vmem:[%s761 + $0xb] sm:$0xff]
        %v1431 = vstv %s1428
        %v1432 = vmul.f32 %v1431, %v1429
        %v1433 = vmul.f32 %v1431, %v1430
        %v1434 = vadd.f32 %v1426, %v1432
        %v1435 = vadd.f32 %v1427, %v1433
        %s1436 = sld [smem:[#allocation6 + $0x48]]
        %v1437 = vld [vmem:[%s780 + $0x3] sm:$0xff]
        %v1438 = vld [vmem:[%s780 + $0xb] sm:$0xff]
        %v1439 = vstv %s1436
        %v1440 = vmul.f32 %v1439, %v1437
        %v1441 = vmul.f32 %v1439, %v1438
        %v1442 = vadd.f32 %v1434, %v1440
        %v1443 = vadd.f32 %v1435, %v1441
        %s1444 = sld [smem:[#allocation6 + $0x49]]
        %v1445 = vld [vmem:[%s799 + $0x3] sm:$0xff]
        %v1446 = vld [vmem:[%s799 + $0xb] sm:$0xff]
        %v1447 = vstv %s1444
        %v1448 = vmul.f32 %v1447, %v1445
        %v1449 = vmul.f32 %v1447, %v1446
        %v1450 = vadd.f32 %v1442, %v1448
        %v1451 = vadd.f32 %v1443, %v1449
        %s1452 = sld [smem:[#allocation6 + $0x4a]]
        %v1453 = vld [vmem:[%s818 + $0x3] sm:$0xff]
        %v1454 = vld [vmem:[%s818 + $0xb] sm:$0xff]
        %v1455 = vstv %s1452
        %v1456 = vmul.f32 %v1455, %v1453
        %v1457 = vmul.f32 %v1455, %v1454
        %v1458 = vadd.f32 %v1450, %v1456
        %v1459 = vadd.f32 %v1451, %v1457
        %s1460 = sld [smem:[#allocation6 + $0x4b]]
        %v1461 = vld [vmem:[%s837 + $0x3] sm:$0xff]
        %v1462 = vld [vmem:[%s837 + $0xb] sm:$0xff]
        %v1463 = vstv %s1460
        %v1464 = vmul.f32 %v1463, %v1461
        %v1465 = vmul.f32 %v1463, %v1462
        %v1466 = vadd.f32 %v1458, %v1464
        %v1467 = vadd.f32 %v1459, %v1465
        %s1468 = sld [smem:[#allocation6 + $0x4c]]
        %v1469 = vld [vmem:[%s856 + $0x3] sm:$0xff]
        %v1470 = vld [vmem:[%s856 + $0xb] sm:$0xff]
        %v1471 = vstv %s1468
        %v1472 = vmul.f32 %v1471, %v1469
        %v1473 = vmul.f32 %v1471, %v1470
        %v1474 = vadd.f32 %v1466, %v1472
        %v1475 = vadd.f32 %v1467, %v1473
        %s1476 = sld [smem:[#allocation6 + $0x4d]]
        %v1477 = vld [vmem:[%s742 + $0x4] sm:$0xff]
        %v1478 = vld [vmem:[%s742 + $0xc] sm:$0xff]
        %v1479 = vstv %s1476
        %v1480 = vmul.f32 %v1479, %v1477
        %v1481 = vmul.f32 %v1479, %v1478
        %v1482 = vadd.f32 %v1418, %v1480
        %v1483 = vadd.f32 %v1419, %v1481
        %s1484 = sld [smem:[#allocation6 + $0x4e]]
        %v1485 = vld [vmem:[%s761 + $0x4] sm:$0xff]
        %v1486 = vld [vmem:[%s761 + $0xc] sm:$0xff]
        %v1487 = vstv %s1484
        %v1488 = vmul.f32 %v1487, %v1485
        %v1489 = vmul.f32 %v1487, %v1486
        %v1490 = vadd.f32 %v1482, %v1488
        %v1491 = vadd.f32 %v1483, %v1489
        %s1492 = sld [smem:[#allocation6 + $0x4f]]
        %v1493 = vld [vmem:[%s780 + $0x4] sm:$0xff]
        %v1494 = vld [vmem:[%s780 + $0xc] sm:$0xff]
        %v1495 = vstv %s1492
        %v1496 = vmul.f32 %v1495, %v1493
        %v1497 = vmul.f32 %v1495, %v1494
        %v1498 = vadd.f32 %v1490, %v1496
        %v1499 = vadd.f32 %v1491, %v1497
        %s1500 = sld [smem:[#allocation6 + $0x50]]
        %v1501 = vld [vmem:[%s799 + $0x4] sm:$0xff]
        %v1502 = vld [vmem:[%s799 + $0xc] sm:$0xff]
        %v1503 = vstv %s1500
        %v1504 = vmul.f32 %v1503, %v1501
        %v1505 = vmul.f32 %v1503, %v1502
        %v1506 = vadd.f32 %v1498, %v1504
        %v1507 = vadd.f32 %v1499, %v1505
        %s1508 = sld [smem:[#allocation6 + $0x51]]
        %v1509 = vld [vmem:[%s818 + $0x4] sm:$0xff]
        %v1510 = vld [vmem:[%s818 + $0xc] sm:$0xff]
        %v1511 = vstv %s1508
        %v1512 = vmul.f32 %v1511, %v1509
        %v1513 = vmul.f32 %v1511, %v1510
        %v1514 = vadd.f32 %v1506, %v1512
        %v1515 = vadd.f32 %v1507, %v1513
        %s1516 = sld [smem:[#allocation6 + $0x52]]
        %v1517 = vld [vmem:[%s837 + $0x4] sm:$0xff]
        %v1518 = vld [vmem:[%s837 + $0xc] sm:$0xff]
        %v1519 = vstv %s1516
        %v1520 = vmul.f32 %v1519, %v1517
        %v1521 = vmul.f32 %v1519, %v1518
        %v1522 = vadd.f32 %v1514, %v1520
        %v1523 = vadd.f32 %v1515, %v1521
        %s1524 = sld [smem:[#allocation6 + $0x53]]
        %v1525 = vld [vmem:[%s856 + $0x4] sm:$0xff]
        %v1526 = vld [vmem:[%s856 + $0xc] sm:$0xff]
        %v1527 = vstv %s1524
        %v1528 = vmul.f32 %v1527, %v1525
        %v1529 = vmul.f32 %v1527, %v1526
        %v1530 = vadd.f32 %v1522, %v1528
        %v1531 = vadd.f32 %v1523, %v1529
        %s1532 = sld [smem:[#allocation6 + $0x54]]
        %v1533 = vld [vmem:[%s742 + $0x5] sm:$0xff]
        %v1534 = vld [vmem:[%s742 + $0xd] sm:$0xff]
        %v1535 = vstv %s1532
        %v1536 = vmul.f32 %v1535, %v1533
        %v1537 = vmul.f32 %v1535, %v1534
        %v1538 = vadd.f32 %v1474, %v1536
        %v1539 = vadd.f32 %v1475, %v1537
        %s1540 = sld [smem:[#allocation6 + $0x55]]
        %v1541 = vld [vmem:[%s761 + $0x5] sm:$0xff]
        %v1542 = vld [vmem:[%s761 + $0xd] sm:$0xff]
        %v1543 = vstv %s1540
        %v1544 = vmul.f32 %v1543, %v1541
        %v1545 = vmul.f32 %v1543, %v1542
        %v1546 = vadd.f32 %v1538, %v1544
        %v1547 = vadd.f32 %v1539, %v1545
        %s1548 = sld [smem:[#allocation6 + $0x56]]
        %v1549 = vld [vmem:[%s780 + $0x5] sm:$0xff]
        %v1550 = vld [vmem:[%s780 + $0xd] sm:$0xff]
        %v1551 = vstv %s1548
        %v1552 = vmul.f32 %v1551, %v1549
        %v1553 = vmul.f32 %v1551, %v1550
        %v1554 = vadd.f32 %v1546, %v1552
        %v1555 = vadd.f32 %v1547, %v1553
        %s1556 = sld [smem:[#allocation6 + $0x57]]
        %v1557 = vld [vmem:[%s799 + $0x5] sm:$0xff]
        %v1558 = vld [vmem:[%s799 + $0xd] sm:$0xff]
        %v1559 = vstv %s1556
        %v1560 = vmul.f32 %v1559, %v1557
        %v1561 = vmul.f32 %v1559, %v1558
        %v1562 = vadd.f32 %v1554, %v1560
        %v1563 = vadd.f32 %v1555, %v1561
        %s1564 = sld [smem:[#allocation6 + $0x58]]
        %v1565 = vld [vmem:[%s818 + $0x5] sm:$0xff]
        %v1566 = vld [vmem:[%s818 + $0xd] sm:$0xff]
        %v1567 = vstv %s1564
        %v1568 = vmul.f32 %v1567, %v1565
        %v1569 = vmul.f32 %v1567, %v1566
        %v1570 = vadd.f32 %v1562, %v1568
        %v1571 = vadd.f32 %v1563, %v1569
        %s1572 = sld [smem:[#allocation6 + $0x59]]
        %v1573 = vld [vmem:[%s837 + $0x5] sm:$0xff]
        %v1574 = vld [vmem:[%s837 + $0xd] sm:$0xff]
        %v1575 = vstv %s1572
        %v1576 = vmul.f32 %v1575, %v1573
        %v1577 = vmul.f32 %v1575, %v1574
        %v1578 = vadd.f32 %v1570, %v1576
        %v1579 = vadd.f32 %v1571, %v1577
        %s1580 = sld [smem:[#allocation6 + $0x5a]]
        %v1581 = vld [vmem:[%s856 + $0x5] sm:$0xff]
        %v1582 = vld [vmem:[%s856 + $0xd] sm:$0xff]
        %v1583 = vstv %s1580
        %v1584 = vmul.f32 %v1583, %v1581
        %v1585 = vmul.f32 %v1583, %v1582
        %v1586 = vadd.f32 %v1578, %v1584
        %v1587 = vadd.f32 %v1579, %v1585
        %s1588 = sld [smem:[#allocation6 + $0x5b]]
        %v1589 = vld [vmem:[%s742 + $0x6] sm:$0xff]
        %v1590 = vld [vmem:[%s742 + $0xe] sm:$0xff]
        %v1591 = vstv %s1588
        %v1592 = vmul.f32 %v1591, %v1589
        %v1593 = vmul.f32 %v1591, %v1590
        %v1594 = vadd.f32 %v1530, %v1592
        %v1595 = vadd.f32 %v1531, %v1593
        %s1596 = sld [smem:[#allocation6 + $0x5c]]
        %v1597 = vld [vmem:[%s761 + $0x6] sm:$0xff]
        %v1598 = vld [vmem:[%s761 + $0xe] sm:$0xff]
        %v1599 = vstv %s1596
        %v1600 = vmul.f32 %v1599, %v1597
        %v1601 = vmul.f32 %v1599, %v1598
        %v1602 = vadd.f32 %v1594, %v1600
        %v1603 = vadd.f32 %v1595, %v1601
        %s1604 = sld [smem:[#allocation6 + $0x5d]]
        %v1605 = vld [vmem:[%s780 + $0x6] sm:$0xff]
        %v1606 = vld [vmem:[%s780 + $0xe] sm:$0xff]
        %v1607 = vstv %s1604
        %v1608 = vmul.f32 %v1607, %v1605
        %v1609 = vmul.f32 %v1607, %v1606
        %v1610 = vadd.f32 %v1602, %v1608
        %v1611 = vadd.f32 %v1603, %v1609
        %s1612 = sld [smem:[#allocation6 + $0x5e]]
        %v1613 = vld [vmem:[%s799 + $0x6] sm:$0xff]
        %v1614 = vld [vmem:[%s799 + $0xe] sm:$0xff]
        %v1615 = vstv %s1612
        %v1616 = vmul.f32 %v1615, %v1613
        %v1617 = vmul.f32 %v1615, %v1614
        %v1618 = vadd.f32 %v1610, %v1616
        %v1619 = vadd.f32 %v1611, %v1617
        %s1620 = sld [smem:[#allocation6 + $0x5f]]
        %v1621 = vld [vmem:[%s818 + $0x6] sm:$0xff]
        %v1622 = vld [vmem:[%s818 + $0xe] sm:$0xff]
        %v1623 = vstv %s1620
        %v1624 = vmul.f32 %v1623, %v1621
        %v1625 = vmul.f32 %v1623, %v1622
        %v1626 = vadd.f32 %v1618, %v1624
        %v1627 = vadd.f32 %v1619, %v1625
        %s1628 = sld [smem:[#allocation6 + $0x60]]
        %v1629 = vld [vmem:[%s837 + $0x6] sm:$0xff]
        %v1630 = vld [vmem:[%s837 + $0xe] sm:$0xff]
        %v1631 = vstv %s1628
        %v1632 = vmul.f32 %v1631, %v1629
        %v1633 = vmul.f32 %v1631, %v1630
        %v1634 = vadd.f32 %v1626, %v1632
        %v1635 = vadd.f32 %v1627, %v1633
        %s1636 = sld [smem:[#allocation6 + $0x61]]
        %v1637 = vld [vmem:[%s856 + $0x6] sm:$0xff]
        %v1638 = vld [vmem:[%s856 + $0xe] sm:$0xff]
        %v1639 = vstv %s1636
        %v1640 = vmul.f32 %v1639, %v1637
        %v1641 = vmul.f32 %v1639, %v1638
        %v1642 = vadd.f32 %v1634, %v1640
        %v1643 = vadd.f32 %v1635, %v1641
        %v1644 = vadd.f32 %v1250, %v1194
        %v1645 = vadd.f32 %v1251, %v1195
        %v1646 = vadd.f32 %v1642, %v1586
        %v1647 = vadd.f32 %v1643, %v1587
        %v1648 = vadd.f32 %v1644, %v1646
        %v1649 = vadd.f32 %v1645, %v1647
        %s1650 = sld [smem:[#allocation5]]
        %v1651 = vstv %s1650
        %v1652 = vadd.f32 %v1648, %v1651
        %v1653 = vadd.f32 %v1649, %v1651
        %v1654 = vxor.u32 %v1652, 2147483648
        %v1655 = vxor.u32 %v1653, 2147483648
        %v1656 = vmul.f32 %v1654, 1.442695
        %v1657 = vpow.pop %v1656
        %v1658 = vmul.f32 %v1655, 1.442695
        %v1659 = vpow.pop %v1658
        %v1660 = vadd.f32 %v1657, 1.0
        %v1661 = vadd.f32 %v1659, 1.0
        %v1662 = vrcp.pop %v1660
        %v1663 = vmul.f32 1.0, %v1662
        %v1664 = vrcp.pop %v1661
        %v1665 = vmul.f32 1.0, %v1664
        %vm1666 = vcmask 122880
        %1667 = vst.msk [vmem:[#allocation4 + $0x2] sm:$0x1] %vm1666, %v1663
        %v1669 = vrot.slane %v1663, 5
        %v1670 = vrot.slane %v1669, 4
        %1671 = vrot.lane.b32.xlu0 %v1670, 16
        %v1672 = vpop.permute.xlu0 %1671
        %vm1674 = vcmask 254080
        %1675 = vst.msk [vmem:[#allocation4 + $0x2] sm:$0x1] %vm1674, %v1672
        %v1676 = vrot.slane %v1663, 6
        %v1677 = vrot.slane %v1676, 4
        %1678 = vrot.lane.b32.xlu0 %v1677, 32
        %v1679 = vpop.permute.xlu0 %1678
        %vm1681 = vcmask 385280
        %1682 = vst.msk [vmem:[#allocation4 + $0x2] sm:$0x1] %vm1681, %v1679
        %v1683 = vrot.slane %v1663, 7
        %v1684 = vrot.slane %v1683, 4
        %1685 = vrot.lane.b32.xlu0 %v1684, 48
        %v1686 = vpop.permute.xlu0 %1685
        %vm1688 = vcmask 516480
        %1689 = vst.msk [vmem:[#allocation4 + $0x2] sm:$0x1] %vm1688, %v1686
        %v1690 = vcombine.high %v1663, %v1663
        %1691 = vrot.lane.b32.xlu0 %v1690, 64
        %v1692 = vpop.permute.xlu0 %1691
        %vm1694 = vcmask 647680
        %1695 = vst.msk [vmem:[#allocation4 + $0x2] sm:$0x1] %vm1694, %v1692
        %v1696 = vrot.slane %v1690, 5
        %v1697 = vrot.slane %v1696, 4
        %1698 = vrot.lane.b32.xlu0 %v1697, 80
        %v1699 = vpop.permute.xlu0 %1698
        %vm1701 = vcmask 778880
        %1702 = vst.msk [vmem:[#allocation4 + $0x2] sm:$0x1] %vm1701, %v1699
        %v1703 = vrot.slane %v1690, 6
        %v1704 = vrot.slane %v1703, 4
        %1705 = vrot.lane.b32.xlu0 %v1704, 96
        %v1706 = vpop.permute.xlu0 %1705
        %vm1708 = vcmask 910080
        %1709 = vst.msk [vmem:[#allocation4 + $0x2] sm:$0x1] %vm1708, %v1706
        %v1710 = vrot.slane %v1690, 7
        %v1711 = vrot.slane %v1710, 4
        %1712 = vrot.lane.b32.xlu0 %v1711, 112
        %v1713 = vpop.permute.xlu0 %1712
        %vm1715 = vcmask 1041280
        %1716 = vst.msk [vmem:[#allocation4 + $0x2] sm:$0x1] %vm1715, %v1713
        %1717 = vst.msk [vmem:[#allocation4 + $0x6] sm:$0x1] %vm1666, %v1665
        %v1719 = vrot.slane %v1665, 5
        %v1720 = vrot.slane %v1719, 4
        %1721 = vrot.lane.b32.xlu0 %v1720, 16
        %v1722 = vpop.permute.xlu0 %1721
        %1724 = vst.msk [vmem:[#allocation4 + $0x6] sm:$0x1] %vm1674, %v1722
        %v1725 = vrot.slane %v1665, 6
        %v1726 = vrot.slane %v1725, 4
        %1727 = vrot.lane.b32.xlu0 %v1726, 32
        %v1728 = vpop.permute.xlu0 %1727
        %1730 = vst.msk [vmem:[#allocation4 + $0x6] sm:$0x1] %vm1681, %v1728
        %v1731 = vrot.slane %v1665, 7
        %v1732 = vrot.slane %v1731, 4
        %1733 = vrot.lane.b32.xlu0 %v1732, 48
        %v1734 = vpop.permute.xlu0 %1733
        %1736 = vst.msk [vmem:[#allocation4 + $0x6] sm:$0x1] %vm1688, %v1734
        %v1737 = vcombine.high %v1665, %v1665
        %1738 = vrot.lane.b32.xlu0 %v1737, 64
        %v1739 = vpop.permute.xlu0 %1738
        %1741 = vst.msk [vmem:[#allocation4 + $0x6] sm:$0x1] %vm1694, %v1739
        %v1742 = vrot.slane %v1737, 5
        %v1743 = vrot.slane %v1742, 4
        %1744 = vrot.lane.b32.xlu0 %v1743, 80
        %v1745 = vpop.permute.xlu0 %1744
        %1747 = vst.msk [vmem:[#allocation4 + $0x6] sm:$0x1] %vm1701, %v1745
        %v1748 = vrot.slane %v1737, 6
        %v1749 = vrot.slane %v1748, 4
        %1750 = vrot.lane.b32.xlu0 %v1749, 96
        %v1751 = vpop.permute.xlu0 %1750
        %1753 = vst.msk [vmem:[#allocation4 + $0x6] sm:$0x1] %vm1708, %v1751
        %v1754 = vrot.slane %v1737, 7
        %v1755 = vrot.slane %v1754, 4
        %1756 = vrot.lane.b32.xlu0 %v1755, 112
        %v1757 = vpop.permute.xlu0 %1756
        %1759 = vst.msk [vmem:[#allocation4 + $0x6] sm:$0x1] %vm1715, %v1757
        %s1760 = scalar_lea.vmem [#allocation4], 2
        %v1761 = vld [vmem:[%s1760] ss:$4 sm:$0x3]
        %v1762 = vld [vmem:[%s178] sm:$0xff]
        %v1764 = vlaneseq
        %v1765 = vshrl.u32 %v1764, 7
        %v1766 = vsub.s32 0, %v1765
        %v1767 = vrot.slane %v1761, %v1766
        %v1768 = vlaneseq
        %v1769 = vshrl.u32 %v1768, 7
        %v1770 = vsub.s32 1, %v1769
        %v1771 = vrot.slane %v1761, %v1770
        %v1772 = vcombine.low %v1767, %v1771
        %v1774 = vmul.f32 %v1762, %v1772
        %1775 = vst [vmem:[%s201] sm:$0xff] %v1774
        %s1776 = sand.u32 %s98, 1
        %s1777 = scalar_lea.sflag [#allocation8], %s1776
        %s1778 = sand.u32 %s98, 1
        %s1779 = smul.addr %s1778, 8
        %s1780 = scalar_lea.vmem [#allocation11], %s1779
        // Predicated region
        $region41: #{tpu_custom_call.1} parent=31 // pred_check
          %p1781 = pneg %p108
        $region42: #{tpu_custom_call.1} parent=31 // pred_check_branch
          %1783 = sbr.rel (%p1781) target = $region44
        $region43: #{tpu_custom_call.1} parent=31 // pred_region
          %s1785 = ssub.s32 128, 128
          %1786 = vsyncadd %s1777, %s1785
          %s1787 = smul.addr %s22, 2
          %s1788 = smul.addr %s1787, 64
          %s1789 = scalar_lea.hbm %s3, %s1788
          %s1791 = sshll.u32 %s1780, 4
          %s1792 = int_to_ptr.vmem [resolvable:$true] %s1791
          %1794 = dma.vmem_to_hbm [thread:$0]  %s1792, 128, %s1789, %s1777
        $region44: #{tpu_custom_call.1} parent=31 // pred_fallthru
          _
      $region32: #{tpu_custom_call.1} parent=5 // pred_fallthru
        _
      %p1795 = scmp.le.s32.totalorder 2, %s17
      // Predicated region
      $region45: #{tpu_custom_call.1} parent=5 // pred_check
        %p1796 = pneg %p1795
      $region46: #{tpu_custom_call.1} parent=5 // pred_check_branch
        %1798 = sbr.rel (%p1796) target = $region48
      $region47: #{tpu_custom_call.1} parent=5 // pred_region
        %s1799 = ssub.s32 %s17, 2
        // Predicated region
        $region49: #{tpu_custom_call.1} parent=47 // pred_check
          %p1800 = pneg %p114
        $region50: #{tpu_custom_call.1} parent=47 // pred_check_branch
          %1802 = sbr.rel (%p1800) target = $region52
        $region51: #{tpu_custom_call.1} parent=47 // pred_region
          %s1803 = sand.u32 %s99, 1
          %s1804 = scalar_lea.sflag [#allocation8], %s1803
          %s1805 = sand.u32 %s99, 1
          %s1806 = smul.addr %s1805, 8
          %s1807 = scalar_lea.vmem [#allocation11], %s1806
          %1808 = dma.done %s1804, 128
        $region52: #{tpu_custom_call.1} parent=47 // pred_fallthru
          _
      $region48: #{tpu_custom_call.1} parent=5 // pred_fallthru
        _
    $region6: #{tpu_custom_call.1} parent=1 // loop_footer
      %s21 = sadd.s32 1, %s17
    $region7: #{tpu_custom_call.1} parent=1 // loop_footer_branch
      %16 = sbr.rel target = $region3
    $region8: #{tpu_custom_call.1} parent=1 // loop_exit
      _
    %1809 = vsyncpa [#allocation7], 1
    %s1810 = scalar_lea.sflag [#allocation7], 1
    %1811 = vsyncpa %s1810, 1
    %1812 = vsyncpa [#allocation8], 1
    %s1813 = scalar_lea.sflag [#allocation8], 1
    %1814 = vsyncpa %s1813, 1
    %1815 = vsyncpa [#allocation9], 1
    %s1816 = scalar_lea.sflag [#allocation9], 1
    %1817 = vsyncpa %s1816, 1

</llo_original>
